<compile_context>
chip_gen: v7x
topology: tpu7x:2x2x1
jax: 0.10.0
libtpu: 0.0.40
codegen_flags: <defaults>
</compile_context>

<pallas_src>
import functools

import jax
import jax.numpy as jnp
from jax.experimental import pallas as pl
from jax.experimental.pallas import tpu as pltpu

C_IN = 515
C_H1 = 512
C_H2 = 512
C_OUT = 3
C_OUT_PAD = 8  # sublane-aligned output rows; rows 3..7 are zero and sliced off


def _round_up(x, m):
    return ((x + m - 1) // m) * m


def _vmem_limit_bytes():
    # Generation-aware: v5e/v6e have 128 MiB physical VMEM, v7x only 64 MiB.
    try:
        cap = int(pltpu.get_tpu_info().vmem_capacity_bytes)
    except Exception:
        cap = 64 << 20  # most conservative (v7x per-core)
    # This kernel only needs ~8 MiB; stay well under physical, leave headroom.
    return max(16 << 20, min(cap * 3 // 4, 48 << 20))


def _fold2_kernel(x_ref, w1_ref, b1_ref, w2_ref, b2_ref, w3_ref, b3_ref, o_ref):
    # x_ref : (C_IN, tn)   float32   channel-major tile of tn points
    # w*    : (Cout, Cin)  bfloat16  PyTorch conv1d layout (k squeezed)
    # b*    : (Cout, 1)    float32
    # o_ref : (C_OUT_PAD, tn) float32
    x = x_ref[...].astype(jnp.bfloat16)  # VPU cast, hidden under MXU work

    h1 = jnp.dot(w1_ref[...], x, preferred_element_type=jnp.float32)   # (512, tn)
    h1 = jnp.maximum(h1 + b1_ref[...], 0.0).astype(jnp.bfloat16)       # bias+ReLU in f32

    h2 = jnp.dot(w2_ref[...], h1, preferred_element_type=jnp.float32)  # (512, tn)
    h2 = jnp.maximum(h2 + b2_ref[...], 0.0).astype(jnp.bfloat16)

    h3 = jnp.dot(w3_ref[...], h2, preferred_element_type=jnp.float32)  # (8, tn)
    o_ref[...] = (h3 + b3_ref[...]).astype(o_ref.dtype)


def _prepare_params(params):
    """PyTorch-layout f32 params -> kernel layout (bf16 weights, (C,1) f32 biases)."""
    w1, b1, w2, b2, w3, b3 = params
    w3p = jnp.zeros((C_OUT_PAD, C_H2), w3.dtype).at[:C_OUT].set(w3)
    b3p = jnp.zeros((C_OUT_PAD,), b3.dtype).at[:C_OUT].set(b3)
    return (w1.astype(jnp.bfloat16), b1.reshape(C_H1, 1),
            w2.astype(jnp.bfloat16), b2.reshape(C_H2, 1),
            w3p.astype(jnp.bfloat16), b3p.reshape(C_OUT_PAD, 1))


@functools.partial(jax.jit, static_argnames=("tn",))
def foldingnet_dec_fold2(x, params, *, tn=512):
    """x: (B, 515, N) float32  ->  (B, 3, N) float32 (NCW, matching PyTorch)."""
    B, C, N = x.shape
    assert C == C_IN

    # Point-tile size: multiple of 128 (lane axis); default 512 for MXU width.
    tn = max(128, min(_round_up(N, 128), (tn // 128) * 128))
    # Keep >= 2 grid steps when possible so both v7x TensorCores get work.
    while B * (_round_up(N, tn) // tn) < 2 and tn > 128:
        tn -= 128
    n_pad = _round_up(N, tn)

    xp = x if n_pad == N else jnp.pad(x, ((0, 0), (0, 0), (0, n_pad - N)))
    w1, b1, w2, b2, w3, b3 = _prepare_params(params)

    grid = (B, n_pad // tn)
    out = pl.pallas_call(
        _fold2_kernel,
        out_shape=jax.ShapeDtypeStruct((B, C_OUT_PAD, n_pad), jnp.float32),
        grid_spec=pltpu.PrefetchScalarGridSpec(
            num_scalar_prefetch=0,
            grid=grid,
            in_specs=[
                pl.BlockSpec((None, C_IN, tn), lambda b, i: (b, 0, i)),  # x tile
                pl.BlockSpec((C_H1, C_IN), lambda b, i: (0, 0)),         # w1
                pl.BlockSpec((C_H1, 1), lambda b, i: (0, 0)),            # b1
                pl.BlockSpec((C_H2, C_H1), lambda b, i: (0, 0)),         # w2
                pl.BlockSpec((C_H2, 1), lambda b, i: (0, 0)),            # b2
                pl.BlockSpec((C_OUT_PAD, C_H2), lambda b, i: (0, 0)),    # w3 (padded)
                pl.BlockSpec((C_OUT_PAD, 1), lambda b, i: (0, 0)),       # b3 (padded)
            ],
            out_specs=pl.BlockSpec((None, C_OUT_PAD, tn), lambda b, i: (b, 0, i)),
        ),
        compiler_params=pltpu.CompilerParams(
            dimension_semantics=("parallel", "parallel"),
            vmem_limit_bytes=_vmem_limit_bytes(),
        ),
    )(xp, w1, b1, w2, b2, w3, b3)

    return out[:, :C_OUT, :N]


def init_params(key):
    """Deterministic init mimicking PyTorch Conv1d default (uniform +/- 1/sqrt(fan_in)).

    Weights stored as (Cout, Cin) — PyTorch's layout with the k=1 axis squeezed.
    """
    def conv1d_params(k, cin, cout):
        kw, kb = jax.random.split(k)
        bound = 1.0 / jnp.sqrt(float(cin))
        w = jax.random.uniform(kw, (cout, cin), jnp.float32, -bound, bound)
        b = jax.random.uniform(kb, (cout,), jnp.float32, -bound, bound)
        return w, b

    k1, k2, k3 = jax.random.split(key, 3)
    w1, b1 = conv1d_params(k1, C_IN, C_H1)
    w2, b2 = conv1d_params(k2, C_H1, C_H2)
    w3, b3 = conv1d_params(k3, C_H2, C_OUT)
    return (w1, b1, w2, b2, w3, b3)


def reference(x, params):
    """Plain-JAX f32 reference for sanity checking (NCW in, NCW out)."""
    w1, b1, w2, b2, w3, b3 = params
    h = jax.nn.relu(jnp.einsum("oc,bcn->bon", w1, x) + b1[None, :, None])
    h = jax.nn.relu(jnp.einsum("oc,bcn->bon", w2, h) + b2[None, :, None])
    return jnp.einsum("oc,bcn->bon", w3, h) + b3[None, :, None]


if __name__ == "__main__":
    key = jax.random.PRNGKey(0)
    kp, kx = jax.random.split(key)

    params = init_params(kp)

    # Small shapes consistent with the module: batch=2, N=16 points,
    # channel dim fixed at 515 by conv1.
    B, N = 2, 16
    x = jax.random.normal(kx, (B, C_IN, N), dtype=jnp.float32)

    y = jax.block_until_ready(foldingnet_dec_fold2(x, params))
    assert y.shape == (B, C_OUT, N), y.shape

    y_ref = reference(x, params)
    err = float(jnp.max(jnp.abs(y - y_ref)))
    # bf16 operands with f32 accumulation across three chained matmuls.
    assert jnp.allclose(y, y_ref, atol=5e-2, rtol=5e-2), err

    print("KERNEL_OK")
</pallas_src>

<mosaic_0001>
module attributes {stable_mosaic.version = 11 : i64} {
  func.func @_fold2_kernel(%arg0: i32, %arg1: i32, %arg2: memref<1x515x128xf32, #tpu.memory_space<vmem>>, %arg3: memref<512x515xbf16, #tpu.memory_space<vmem>>, %arg4: memref<512x1xf32, #tpu.memory_space<vmem>>, %arg5: memref<512x512xbf16, #tpu.memory_space<vmem>>, %arg6: memref<512x1xf32, #tpu.memory_space<vmem>>, %arg7: memref<8x512xbf16, #tpu.memory_space<vmem>>, %arg8: memref<8x1xf32, #tpu.memory_space<vmem>>, %arg9: memref<1x8x128xf32, #tpu.memory_space<vmem>>) attributes {dimension_semantics = [#tpu.dimension_semantics<parallel>, #tpu.dimension_semantics<parallel>], iteration_bounds = array<i64: 2, 1>, scalar_prefetch = 0 : i64, scratch_operands = 0 : i64, tpu.core_type = #tpu.core_type<tc>, window_params = [{transform_indices = @transform_0, window_bounds = array<i64: 1, 515, 128>}, {pipeline_mode = #tpu.pipeline_mode<synchronous>, transform_indices = @transform_1, window_bounds = array<i64: 512, 515>}, {pipeline_mode = #tpu.pipeline_mode<synchronous>, transform_indices = @transform_2, window_bounds = array<i64: 512, 1>}, {pipeline_mode = #tpu.pipeline_mode<synchronous>, transform_indices = @transform_3, window_bounds = array<i64: 512, 512>}, {pipeline_mode = #tpu.pipeline_mode<synchronous>, transform_indices = @transform_4, window_bounds = array<i64: 512, 1>}, {pipeline_mode = #tpu.pipeline_mode<synchronous>, transform_indices = @transform_5, window_bounds = array<i64: 8, 512>}, {pipeline_mode = #tpu.pipeline_mode<synchronous>, transform_indices = @transform_6, window_bounds = array<i64: 8, 1>}, {transform_indices = @transform_7, window_bounds = array<i64: 1, 8, 128>}]} {
    %c0 = arith.constant 0 : index
    %c0_0 = arith.constant 0 : index
    %c0_1 = arith.constant 0 : index
    %0 = vector.load %arg2[%c0, %c0_0, %c0_1] : memref<1x515x128xf32, #tpu.memory_space<vmem>>, vector<1x515x128xf32>
    %1 = vector.shape_cast %0 : vector<1x515x128xf32> to vector<515x128xf32>
    %2 = arith.truncf %1 : vector<515x128xf32> to vector<515x128xbf16>
    %c0_2 = arith.constant 0 : index
    %c0_3 = arith.constant 0 : index
    %3 = vector.load %arg3[%c0_2, %c0_3] : memref<512x515xbf16, #tpu.memory_space<vmem>>, vector<512x515xbf16>
    %cst = arith.constant dense<0.000000e+00> : vector<512x128xf32>
    %4 = tpu.matmul %3, %2, %cst {dimension_numbers = #tpu.dot_dimension_numbers<[1], [0], [0], [1], [0, 0, 1, 1], [], []>} : vector<512x515xbf16>, vector<515x128xbf16>, vector<512x128xf32> -> vector<512x128xf32>
    %c0_4 = arith.constant 0 : index
    %c0_5 = arith.constant 0 : index
    %5 = vector.load %arg4[%c0_4, %c0_5] : memref<512x1xf32, #tpu.memory_space<vmem>>, vector<512x1xf32>
    %6 = vector.broadcast %5 : vector<512x1xf32> to vector<512x128xf32>
    %7 = arith.addf %4, %6 : vector<512x128xf32>
    %cst_6 = arith.constant 0.000000e+00 : f32
    %8 = vector.broadcast %cst_6 : f32 to vector<512x128xf32>
    %9 = arith.maximumf %7, %8 : vector<512x128xf32>
    %10 = arith.truncf %9 : vector<512x128xf32> to vector<512x128xbf16>
    %c0_7 = arith.constant 0 : index
    %c0_8 = arith.constant 0 : index
    %11 = vector.load %arg5[%c0_7, %c0_8] : memref<512x512xbf16, #tpu.memory_space<vmem>>, vector<512x512xbf16>
    %cst_9 = arith.constant dense<0.000000e+00> : vector<512x128xf32>
    %12 = tpu.matmul %11, %10, %cst_9 {dimension_numbers = #tpu.dot_dimension_numbers<[1], [0], [0], [1], [0, 0, 1, 1], [], []>} : vector<512x512xbf16>, vector<512x128xbf16>, vector<512x128xf32> -> vector<512x128xf32>
    %c0_10 = arith.constant 0 : index
    %c0_11 = arith.constant 0 : index
    %13 = vector.load %arg6[%c0_10, %c0_11] : memref<512x1xf32, #tpu.memory_space<vmem>>, vector<512x1xf32>
    %14 = vector.broadcast %13 : vector<512x1xf32> to vector<512x128xf32>
    %15 = arith.addf %12, %14 : vector<512x128xf32>
    %cst_12 = arith.constant 0.000000e+00 : f32
    %16 = vector.broadcast %cst_12 : f32 to vector<512x128xf32>
    %17 = arith.maximumf %15, %16 : vector<512x128xf32>
    %18 = arith.truncf %17 : vector<512x128xf32> to vector<512x128xbf16>
    %c0_13 = arith.constant 0 : index
    %c0_14 = arith.constant 0 : index
    %19 = vector.load %arg7[%c0_13, %c0_14] : memref<8x512xbf16, #tpu.memory_space<vmem>>, vector<8x512xbf16>
    %cst_15 = arith.constant dense<0.000000e+00> : vector<8x128xf32>
    %20 = tpu.matmul %19, %18, %cst_15 {dimension_numbers = #tpu.dot_dimension_numbers<[1], [0], [0], [1], [0, 0, 1, 1], [], []>} : vector<8x512xbf16>, vector<512x128xbf16>, vector<8x128xf32> -> vector<8x128xf32>
    %c0_16 = arith.constant 0 : index
    %c0_17 = arith.constant 0 : index
    %21 = vector.load %arg8[%c0_16, %c0_17] : memref<8x1xf32, #tpu.memory_space<vmem>>, vector<8x1xf32>
    %22 = vector.broadcast %21 : vector<8x1xf32> to vector<8x128xf32>
    %23 = arith.addf %20, %22 : vector<8x128xf32>
    %c0_18 = arith.constant 0 : index
    %c0_19 = arith.constant 0 : index
    %c0_20 = arith.constant 0 : index
    %24 = vector.load %arg9[%c0_18, %c0_19, %c0_20] : memref<1x8x128xf32, #tpu.memory_space<vmem>>, vector<1x8x128xf32>
    %25 = vector.shape_cast %24 : vector<1x8x128xf32> to vector<8x128xf32>
    %26 = vector.shape_cast %23 : vector<8x128xf32> to vector<1x8x128xf32>
    tpu.vector_store %arg9[%c0_18, %c0_19, %c0_20], %26 {strides = array<i32>} : memref<1x8x128xf32, #tpu.memory_space<vmem>>, vector<1x8x128xf32>,
    return
  }
  func.func @transform_0(%arg0: i32, %arg1: i32) -> (i32, i32, i32) {
    %c0_i32 = arith.constant 0 : i32
    %c0_i32_0 = arith.constant 0 : i32
    return %arg0, %c0_i32, %arg1 : i32, i32, i32
  }
  func.func @transform_1(%arg0: i32, %arg1: i32) -> (i32, i32) {
    %c0_i32 = arith.constant 0 : i32
    %c0_i32_0 = arith.constant 0 : i32
    %c0_i32_1 = arith.constant 0 : i32
    return %c0_i32, %c0_i32_0 : i32, i32
  }
  func.func @transform_2(%arg0: i32, %arg1: i32) -> (i32, i32) {
    %c0_i32 = arith.constant 0 : i32
    %c0_i32_0 = arith.constant 0 : i32
    %c0_i32_1 = arith.constant 0 : i32
    return %c0_i32, %c0_i32_0 : i32, i32
  }
  func.func @transform_3(%arg0: i32, %arg1: i32) -> (i32, i32) {
    %c0_i32 = arith.constant 0 : i32
    %c0_i32_0 = arith.constant 0 : i32
    %c0_i32_1 = arith.constant 0 : i32
    return %c0_i32, %c0_i32_0 : i32, i32
  }
  func.func @transform_4(%arg0: i32, %arg1: i32) -> (i32, i32) {
    %c0_i32 = arith.constant 0 : i32
    %c0_i32_0 = arith.constant 0 : i32
    %c0_i32_1 = arith.constant 0 : i32
    return %c0_i32, %c0_i32_0 : i32, i32
  }
  func.func @transform_5(%arg0: i32, %arg1: i32) -> (i32, i32) {
    %c0_i32 = arith.constant 0 : i32
    %c0_i32_0 = arith.constant 0 : i32
    %c0_i32_1 = arith.constant 0 : i32
    return %c0_i32, %c0_i32_0 : i32, i32
  }
  func.func @transform_6(%arg0: i32, %arg1: i32) -> (i32, i32) {
    %c0_i32 = arith.constant 0 : i32
    %c0_i32_0 = arith.constant 0 : i32
    %c0_i32_1 = arith.constant 0 : i32
    return %c0_i32, %c0_i32_0 : i32, i32
  }
  func.func @transform_7(%arg0: i32, %arg1: i32) -> (i32, i32, i32) {
    %c0_i32 = arith.constant 0 : i32
    %c0_i32_0 = arith.constant 0 : i32
    return %arg0, %c0_i32, %arg1 : i32, i32, i32
  }
}

</mosaic_0001>

<llo_original>
// kernel: foldingnet_dec_fold2.1
$region0: #{foldingnet_dec_fold2.1}
  #allocation0 [shape = 'u32[]', space=smem, size = 0x4, offset = 0x4, fixed_abs, tag = 'smem constant byte address 0x4 - core index']
  #allocation1 [shape = 'u32[144,128]{1,0:T(1,128)}', space=vmem, size = 0x12000, scoped, tag = 'internal scratch']
  %s0 = inlined_call_operand.vmem [shape: f32[2,515,128], index: 0, kind: input, shape index: {}]
  %s1 = inlined_call_operand.vmem [shape: bf16[512,515], index: 1, kind: input, shape index: {}]
  %s2 = inlined_call_operand.vmem [shape: f32[512,1], index: 2, kind: input, shape index: {}]
  %s3 = inlined_call_operand.vmem [shape: bf16[512,512], index: 3, kind: input, shape index: {}]
  %s4 = inlined_call_operand.vmem [shape: f32[512,1], index: 4, kind: input, shape index: {}]
  %s5 = inlined_call_operand.vmem [shape: bf16[8,512], index: 5, kind: input, shape index: {}]
  %s6 = inlined_call_operand.vmem [shape: f32[8,1], index: 6, kind: input, shape index: {}]
  %s7 = inlined_call_operand.vmem [shape: f32[2,8,128], index: 7, kind: output, shape index: {}]
  %s8 = sld [smem:[#allocation0]]
  $region61: #{foldingnet_dec_fold2.1} parent=0
    _
  %s10 = ssub.s32 1, %s8
  %s11 = scalar_select 0, %s10, %s8
  loop: start=0, step=1, limit=4
  $region2: #{foldingnet_dec_fold2.1} parent=0 // loop_pre_header
    _
  $region3: #{foldingnet_dec_fold2.1} parent=0 // loop_header
    %s13 = sphi 0, %s17
    %p14 = scmp.ge.s32.totalorder %s13, 4
    %s20 = sphi 0, %s32
    %s21 = sphi 0, %s28
    %s22 = sphi 0, %s20
    %s23 = sphi 0, %s21
    %s24 = sphi 0, %s22
    %s25 = sphi 0, %s23
    %s37 = sphi 0, %s39
    %s40 = sphi 0, %s37
    %s41 = sphi 0, %s40
    %s57 = sphi 0, %s41
    %s61 = sphi 0, %s61
    %s63 = sphi 0, %s61
    %s64 = sphi 0, %s63
    %s78 = sphi 0, %s64
    %s82 = sphi 0, %s82
    %s84 = sphi 0, %s82
    %s85 = sphi 0, %s84
    %s99 = sphi 0, %s85
    %s103 = sphi 0, %s103
    %s105 = sphi 0, %s103
    %s106 = sphi 0, %s105
    %s120 = sphi 0, %s106
    %s124 = sphi 0, %s124
    %s126 = sphi 0, %s124
    %s127 = sphi 0, %s126
    %s141 = sphi 0, %s127
    %s145 = sphi 0, %s145
    %s147 = sphi 0, %s145
    %s148 = sphi 0, %s147
    %s162 = sphi 0, %s148
    %s166 = sphi 0, %s166
    %s168 = sphi 0, %s166
    %s169 = sphi 0, %s168
    %s183 = sphi 0, %s169
    %s191 = sphi 0, %s193
    %s194 = sphi 0, %s191
    %s195 = sphi 0, %s194
    %s211 = sphi 0, %s195
  $region4: #{foldingnet_dec_fold2.1} parent=0 // loop_header_branch
    %16 = sbr.rel (%p14) target = $region8
  $region5: #{foldingnet_dec_fold2.1} parent=0 // loop_body
    %s18 = ssub.s32 %s13, 1
    %s19 = ssub.s32 %s13, 2
    %s26 = sadd.s32 1, %s21
    %p27 = scmp.ge.s32.totalorder %s26, 1
    %s28 = scalar_select %p27, 0, %s26
    %s29 = sadd.s32 1, %s20
    %s30 = scalar_select %p27, %s29, %s20
    %p31 = scmp.ge.s32.totalorder %s30, 2
    %s32 = scalar_select %p31, 0, %s30
    %s33 = ssub.s32 %s20, %s32
    %s34 = ssub.s32 %s21, %s28
    %s35 = sor.u32 %s33, %s34
    %p36 = scmp.eq.s32.totalorder %s35, 0
    %s38 = sadd.s32 %s37, 1
    %s39 = scalar_select %p36, %s37, %s38
    %p42 = pneg %p36
    %p43 = scmp.eq.s32.totalorder %s13, 1
    %p44 = por %p42, %p43
    %p45 = scmp.ne.s32.totalorder %s37, %s40
    %p46 = scmp.eq.s32.totalorder %s13, 0
    %p47 = por %p45, %p46
    %p48 = scmp.ne.s32.totalorder %s37, %s40
    %p49 = scmp.eq.s32.totalorder %s18, 1
    %p50 = por %p48, %p49
    %p51 = scmp.ne.s32.totalorder %s40, %s41
    %p52 = scmp.eq.s32.totalorder %s18, 0
    %p53 = por %p51, %p52
    %p54 = scmp.ne.s32.totalorder %s40, %s41
    %p55 = scmp.eq.s32.totalorder %s19, 1
    %p56 = por %p54, %p55
    %p58 = scmp.ne.s32.totalorder %s41, %s57
    %p59 = scmp.eq.s32.totalorder %s19, 0
    %p60 = por %p58, %p59
    %s62 = sadd.s32 %s61, 1
    %p65 = scmp.eq.s32.totalorder %s13, 1
    %p66 = scmp.ne.s32.totalorder %s61, %s63
    %p67 = scmp.eq.s32.totalorder %s13, 0
    %p68 = por %p66, %p67
    %p69 = scmp.ne.s32.totalorder %s61, %s63
    %p70 = scmp.eq.s32.totalorder %s18, 1
    %p71 = por %p69, %p70
    %p72 = scmp.ne.s32.totalorder %s63, %s64
    %p73 = scmp.eq.s32.totalorder %s18, 0
    %p74 = por %p72, %p73
    %p75 = scmp.ne.s32.totalorder %s63, %s64
    %p76 = scmp.eq.s32.totalorder %s19, 1
    %p77 = por %p75, %p76
    %p79 = scmp.ne.s32.totalorder %s64, %s78
    %p80 = scmp.eq.s32.totalorder %s19, 0
    %p81 = por %p79, %p80
    %s83 = sadd.s32 %s82, 1
    %p86 = scmp.eq.s32.totalorder %s13, 1
    %p87 = scmp.ne.s32.totalorder %s82, %s84
    %p88 = scmp.eq.s32.totalorder %s13, 0
    %p89 = por %p87, %p88
    %p90 = scmp.ne.s32.totalorder %s82, %s84
    %p91 = scmp.eq.s32.totalorder %s18, 1
    %p92 = por %p90, %p91
    %p93 = scmp.ne.s32.totalorder %s84, %s85
    %p94 = scmp.eq.s32.totalorder %s18, 0
    %p95 = por %p93, %p94
    %p96 = scmp.ne.s32.totalorder %s84, %s85
    %p97 = scmp.eq.s32.totalorder %s19, 1
    %p98 = por %p96, %p97
    %p100 = scmp.ne.s32.totalorder %s85, %s99
    %p101 = scmp.eq.s32.totalorder %s19, 0
    %p102 = por %p100, %p101
    %s104 = sadd.s32 %s103, 1
    %p107 = scmp.eq.s32.totalorder %s13, 1
    %p108 = scmp.ne.s32.totalorder %s103, %s105
    %p109 = scmp.eq.s32.totalorder %s13, 0
    %p110 = por %p108, %p109
    %p111 = scmp.ne.s32.totalorder %s103, %s105
    %p112 = scmp.eq.s32.totalorder %s18, 1
    %p113 = por %p111, %p112
    %p114 = scmp.ne.s32.totalorder %s105, %s106
    %p115 = scmp.eq.s32.totalorder %s18, 0
    %p116 = por %p114, %p115
    %p117 = scmp.ne.s32.totalorder %s105, %s106
    %p118 = scmp.eq.s32.totalorder %s19, 1
    %p119 = por %p117, %p118
    %p121 = scmp.ne.s32.totalorder %s106, %s120
    %p122 = scmp.eq.s32.totalorder %s19, 0
    %p123 = por %p121, %p122
    %s125 = sadd.s32 %s124, 1
    %p128 = scmp.eq.s32.totalorder %s13, 1
    %p129 = scmp.ne.s32.totalorder %s124, %s126
    %p130 = scmp.eq.s32.totalorder %s13, 0
    %p131 = por %p129, %p130
    %p132 = scmp.ne.s32.totalorder %s124, %s126
    %p133 = scmp.eq.s32.totalorder %s18, 1
    %p134 = por %p132, %p133
    %p135 = scmp.ne.s32.totalorder %s126, %s127
    %p136 = scmp.eq.s32.totalorder %s18, 0
    %p137 = por %p135, %p136
    %p138 = scmp.ne.s32.totalorder %s126, %s127
    %p139 = scmp.eq.s32.totalorder %s19, 1
    %p140 = por %p138, %p139
    %p142 = scmp.ne.s32.totalorder %s127, %s141
    %p143 = scmp.eq.s32.totalorder %s19, 0
    %p144 = por %p142, %p143
    %s146 = sadd.s32 %s145, 1
    %p149 = scmp.eq.s32.totalorder %s13, 1
    %p150 = scmp.ne.s32.totalorder %s145, %s147
    %p151 = scmp.eq.s32.totalorder %s13, 0
    %p152 = por %p150, %p151
    %p153 = scmp.ne.s32.totalorder %s145, %s147
    %p154 = scmp.eq.s32.totalorder %s18, 1
    %p155 = por %p153, %p154
    %p156 = scmp.ne.s32.totalorder %s147, %s148
    %p157 = scmp.eq.s32.totalorder %s18, 0
    %p158 = por %p156, %p157
    %p159 = scmp.ne.s32.totalorder %s147, %s148
    %p160 = scmp.eq.s32.totalorder %s19, 1
    %p161 = por %p159, %p160
    %p163 = scmp.ne.s32.totalorder %s148, %s162
    %p164 = scmp.eq.s32.totalorder %s19, 0
    %p165 = por %p163, %p164
    %s167 = sadd.s32 %s166, 1
    %p170 = scmp.eq.s32.totalorder %s13, 1
    %p171 = scmp.ne.s32.totalorder %s166, %s168
    %p172 = scmp.eq.s32.totalorder %s13, 0
    %p173 = por %p171, %p172
    %p174 = scmp.ne.s32.totalorder %s166, %s168
    %p175 = scmp.eq.s32.totalorder %s18, 1
    %p176 = por %p174, %p175
    %p177 = scmp.ne.s32.totalorder %s168, %s169
    %p178 = scmp.eq.s32.totalorder %s18, 0
    %p179 = por %p177, %p178
    %p180 = scmp.ne.s32.totalorder %s168, %s169
    %p181 = scmp.eq.s32.totalorder %s19, 1
    %p182 = por %p180, %p181
    %p184 = scmp.ne.s32.totalorder %s169, %s183
    %p185 = scmp.eq.s32.totalorder %s19, 0
    %p186 = por %p184, %p185
    %s187 = ssub.s32 %s20, %s32
    %s188 = ssub.s32 %s21, %s28
    %s189 = sor.u32 %s187, %s188
    %p190 = scmp.eq.s32.totalorder %s189, 0
    %s192 = sadd.s32 %s191, 1
    %s193 = scalar_select %p190, %s191, %s192
    %p196 = pneg %p190
    %p197 = scmp.eq.s32.totalorder %s13, 1
    %p198 = por %p196, %p197
    %p199 = scmp.ne.s32.totalorder %s191, %s194
    %p200 = scmp.eq.s32.totalorder %s13, 0
    %p201 = por %p199, %p200
    %p202 = scmp.ne.s32.totalorder %s191, %s194
    %p203 = scmp.eq.s32.totalorder %s18, 1
    %p204 = por %p202, %p203
    %p205 = scmp.ne.s32.totalorder %s194, %s195
    %p206 = scmp.eq.s32.totalorder %s18, 0
    %p207 = por %p205, %p206
    %p208 = scmp.ne.s32.totalorder %s194, %s195
    %p209 = scmp.eq.s32.totalorder %s19, 1
    %p210 = por %p208, %p209
    %p212 = scmp.ne.s32.totalorder %s195, %s211
    %p213 = scmp.eq.s32.totalorder %s19, 0
    %p214 = por %p212, %p213
    %p215 = scmp.le.s32.totalorder 1, %s13
    %p216 = scmp.lt.s32.totalorder %s13, 3
    %p217 = pnand %p215, %p216
    %p218 = pneg %p217
    // Predicated region
    $region9: #{foldingnet_dec_fold2.1} parent=5 // pred_check
      _
    $region10: #{foldingnet_dec_fold2.1} parent=5 // pred_check_branch
      %220 = sbr.rel (%p217) target = $region12
    $region11: #{foldingnet_dec_fold2.1} parent=5 // pred_region
      %s221 = ssub.s32 %s13, 1
      // Predicated region
      $region13: #{foldingnet_dec_fold2.1} parent=11 // pred_check
        %p222 = pneg %p74
      $region14: #{foldingnet_dec_fold2.1} parent=11 // pred_check_branch
        %224 = sbr.rel (%p222) target = $region16
      $region15: #{foldingnet_dec_fold2.1} parent=11 // pred_region
        _
      $region16: #{foldingnet_dec_fold2.1} parent=11 // pred_fallthru
        _
      // Predicated region
      $region17: #{foldingnet_dec_fold2.1} parent=11 // pred_check
        %p225 = pneg %p95
      $region18: #{foldingnet_dec_fold2.1} parent=11 // pred_check_branch
        %227 = sbr.rel (%p225) target = $region20
      $region19: #{foldingnet_dec_fold2.1} parent=11 // pred_region
        _
      $region20: #{foldingnet_dec_fold2.1} parent=11 // pred_fallthru
        _
      // Predicated region
      $region21: #{foldingnet_dec_fold2.1} parent=11 // pred_check
        %p228 = pneg %p116
      $region22: #{foldingnet_dec_fold2.1} parent=11 // pred_check_branch
        %230 = sbr.rel (%p228) target = $region24
      $region23: #{foldingnet_dec_fold2.1} parent=11 // pred_region
        _
      $region24: #{foldingnet_dec_fold2.1} parent=11 // pred_fallthru
        _
      // Predicated region
      $region25: #{foldingnet_dec_fold2.1} parent=11 // pred_check
        %p231 = pneg %p137
      $region26: #{foldingnet_dec_fold2.1} parent=11 // pred_check_branch
        %233 = sbr.rel (%p231) target = $region28
      $region27: #{foldingnet_dec_fold2.1} parent=11 // pred_region
        _
      $region28: #{foldingnet_dec_fold2.1} parent=11 // pred_fallthru
        _
      // Predicated region
      $region29: #{foldingnet_dec_fold2.1} parent=11 // pred_check
        %p234 = pneg %p158
      $region30: #{foldingnet_dec_fold2.1} parent=11 // pred_check_branch
        %236 = sbr.rel (%p234) target = $region32
      $region31: #{foldingnet_dec_fold2.1} parent=11 // pred_region
        _
      $region32: #{foldingnet_dec_fold2.1} parent=11 // pred_fallthru
        _
      // Predicated region
      $region33: #{foldingnet_dec_fold2.1} parent=11 // pred_check
        %p237 = pneg %p179
      $region34: #{foldingnet_dec_fold2.1} parent=11 // pred_check_branch
        %239 = sbr.rel (%p237) target = $region36
      $region35: #{foldingnet_dec_fold2.1} parent=11 // pred_region
        _
      $region36: #{foldingnet_dec_fold2.1} parent=11 // pred_fallthru
        _
    $region12: #{foldingnet_dec_fold2.1} parent=5 // pred_fallthru
      _
    %p240 = scmp.lt.s32.totalorder %s13, 2
    // Predicated region
    $region37: #{foldingnet_dec_fold2.1} parent=5 // pred_check
      %p241 = pneg %p240
    $region38: #{foldingnet_dec_fold2.1} parent=5 // pred_check_branch
      %243 = sbr.rel (%p241) target = $region40
    $region39: #{foldingnet_dec_fold2.1} parent=5 // pred_region
      // Predicated region
      $region41: #{foldingnet_dec_fold2.1} parent=39 // pred_check
        %p244 = pneg %p47
      $region42: #{foldingnet_dec_fold2.1} parent=39 // pred_check_branch
        %246 = sbr.rel (%p244) target = $region44
      $region43: #{foldingnet_dec_fold2.1} parent=39 // pred_region
        %p247 = scmp.lt.s32.totalorder %s20, 1
        %s248 = scalar_select %p247, %s20, 1
        %p249 = scmp.lt.s32.totalorder %s21, 0
        %s250 = scalar_select %p249, %s21, 0
        %s251 = smul.addr %s248, 65
        %s252 = sadd.s32 %s250, %s251
        %s253 = smul.addr %s252, 8
        %s254 = scalar_lea.vmem %s0, %s253
      $region44: #{foldingnet_dec_fold2.1} parent=39 // pred_fallthru
        _
    $region40: #{foldingnet_dec_fold2.1} parent=5 // pred_fallthru
      _
    %p255 = scmp.le.s32.totalorder 1, %s13
    %p256 = scmp.lt.s32.totalorder %s13, 3
    %p257 = pnand %p255, %p256
    %p258 = pneg %p257
    // Predicated region
    $region45: #{foldingnet_dec_fold2.1} parent=5 // pred_check
      _
    $region46: #{foldingnet_dec_fold2.1} parent=5 // pred_check_branch
      %260 = sbr.rel (%p257) target = $region48
    $region47: #{foldingnet_dec_fold2.1} parent=5 // pred_region
      %s261 = ssub.s32 %s13, 1
      %p262 = scmp.lt.s32.totalorder %s22, 1
      %s263 = scalar_select %p262, %s22, 1
      %p264 = scmp.lt.s32.totalorder %s23, 0
      %s265 = scalar_select %p264, %s23, 0
      %s266 = smul.addr %s263, 65
      %s267 = sadd.s32 %s265, %s266
      %s268 = smul.addr %s267, 8
      %s269 = scalar_lea.vmem %s0, %s268
      %p270 = pneg %p53
      %p271 = pneg %p50
      %p272 = pneg %p74
      %p273 = pneg %p71
      %p274 = pneg %p95
      %p275 = pneg %p92
      %p276 = pneg %p116
      %p277 = pneg %p113
      %p278 = pneg %p137
      %p279 = pneg %p134
      %p280 = pneg %p158
      %p281 = pneg %p155
      %p282 = pneg %p179
      %p283 = pneg %p176
      %p284 = pneg %p207
      %p285 = pneg %p204
      %p286 = scmp.lt.s32.totalorder %s22, 1
      %s287 = scalar_select %p286, %s22, 1
      %p288 = scmp.lt.s32.totalorder %s23, 0
      %s289 = scalar_select %p288, %s23, 0
      %s290 = sadd.s32 %s289, %s287
      %s291 = smul.addr %s290, 8
      %s292 = scalar_lea.vmem %s7, %s291
      %p293 = scmp.lt.s32.totalorder %s22, 1
      %s294 = scalar_select %p293, %s22, 1
      %p295 = scmp.lt.s32.totalorder %s23, 0
      %s296 = scalar_select %p295, %s23, 0
      %s297 = smul.addr %s294, 65
      %s298 = sadd.s32 %s296, %s297
      %s299 = smul.addr %s298, 8
      %s300 = scalar_lea.vmem %s0, %s299
      %p301 = scmp.lt.s32.totalorder %s22, 1
      %s302 = scalar_select %p301, %s22, 1
      %p303 = scmp.lt.s32.totalorder %s23, 0
      %s304 = scalar_select %p303, %s23, 0
      %s305 = sadd.s32 %s304, %s302
      %s306 = smul.addr %s305, 8
      %s307 = scalar_lea.vmem %s7, %s306
      %v309 = vld [vmem:[%s300] sm:$0xff]
      %v310 = vld [vmem:[%s300 + $0x8] sm:$0xff]
      %v311 = vld [vmem:[%s300 + $0x10] sm:$0xff]
      %v312 = vld [vmem:[%s300 + $0x18] sm:$0xff]
      %v313 = vld [vmem:[%s300 + $0x20] sm:$0xff]
      %v314 = vld [vmem:[%s300 + $0x28] sm:$0xff]
      %v315 = vld [vmem:[%s300 + $0x30] sm:$0xff]
      %v316 = vld [vmem:[%s300 + $0x38] sm:$0xff]
      %v317 = vld [vmem:[%s300 + $0x40] sm:$0xff]
      %v318 = vld [vmem:[%s300 + $0x48] sm:$0xff]
      %v319 = vld [vmem:[%s300 + $0x50] sm:$0xff]
      %v320 = vld [vmem:[%s300 + $0x58] sm:$0xff]
      %v321 = vld [vmem:[%s300 + $0x60] sm:$0xff]
      %v322 = vld [vmem:[%s300 + $0x68] sm:$0xff]
      %v323 = vld [vmem:[%s300 + $0x70] sm:$0xff]
      %v324 = vld [vmem:[%s300 + $0x78] sm:$0xff]
      %v325 = vld [vmem:[%s300 + $0x80] sm:$0xff]
      %v326 = vld [vmem:[%s300 + $0x88] sm:$0xff]
      %v327 = vld [vmem:[%s300 + $0x90] sm:$0xff]
      %v328 = vld [vmem:[%s300 + $0x98] sm:$0xff]
      %v329 = vld [vmem:[%s300 + $0xa0] sm:$0xff]
      %v330 = vld [vmem:[%s300 + $0xa8] sm:$0xff]
      %v331 = vld [vmem:[%s300 + $0xb0] sm:$0xff]
      %v332 = vld [vmem:[%s300 + $0xb8] sm:$0xff]
      %v333 = vld [vmem:[%s300 + $0xc0] sm:$0xff]
      %v334 = vld [vmem:[%s300 + $0xc8] sm:$0xff]
      %v335 = vld [vmem:[%s300 + $0xd0] sm:$0xff]
      %v336 = vld [vmem:[%s300 + $0xd8] sm:$0xff]
      %v337 = vld [vmem:[%s300 + $0xe0] sm:$0xff]
      %v338 = vld [vmem:[%s300 + $0xe8] sm:$0xff]
      %v339 = vld [vmem:[%s300 + $0xf0] sm:$0xff]
      %v340 = vld [vmem:[%s300 + $0xf8] sm:$0xff]
      %v341 = vld [vmem:[%s300 + $0x100] sm:$0xff]
      %v342 = vld [vmem:[%s300 + $0x108] sm:$0xff]
      %v343 = vld [vmem:[%s300 + $0x110] sm:$0xff]
      %v344 = vld [vmem:[%s300 + $0x118] sm:$0xff]
      %v345 = vld [vmem:[%s300 + $0x120] sm:$0xff]
      %v346 = vld [vmem:[%s300 + $0x128] sm:$0xff]
      %v347 = vld [vmem:[%s300 + $0x130] sm:$0xff]
      %v348 = vld [vmem:[%s300 + $0x138] sm:$0xff]
      %v349 = vld [vmem:[%s300 + $0x140] sm:$0xff]
      %v350 = vld [vmem:[%s300 + $0x148] sm:$0xff]
      %v351 = vld [vmem:[%s300 + $0x150] sm:$0xff]
      %v352 = vld [vmem:[%s300 + $0x158] sm:$0xff]
      %v353 = vld [vmem:[%s300 + $0x160] sm:$0xff]
      %v354 = vld [vmem:[%s300 + $0x168] sm:$0xff]
      %v355 = vld [vmem:[%s300 + $0x170] sm:$0xff]
      %v356 = vld [vmem:[%s300 + $0x178] sm:$0xff]
      %v357 = vld [vmem:[%s300 + $0x180] sm:$0xff]
      %v358 = vld [vmem:[%s300 + $0x188] sm:$0xff]
      %v359 = vld [vmem:[%s300 + $0x190] sm:$0xff]
      %v360 = vld [vmem:[%s300 + $0x198] sm:$0xff]
      %v361 = vld [vmem:[%s300 + $0x1a0] sm:$0xff]
      %v362 = vld [vmem:[%s300 + $0x1a8] sm:$0xff]
      %v363 = vld [vmem:[%s300 + $0x1b0] sm:$0xff]
      %v364 = vld [vmem:[%s300 + $0x1b8] sm:$0xff]
      %v365 = vld [vmem:[%s300 + $0x1c0] sm:$0xff]
      %v366 = vld [vmem:[%s300 + $0x1c8] sm:$0xff]
      %v367 = vld [vmem:[%s300 + $0x1d0] sm:$0xff]
      %v368 = vld [vmem:[%s300 + $0x1d8] sm:$0xff]
      %v369 = vld [vmem:[%s300 + $0x1e0] sm:$0xff]
      %v370 = vld [vmem:[%s300 + $0x1e8] sm:$0xff]
      %v371 = vld [vmem:[%s300 + $0x1f0] sm:$0xff]
      %v372 = vld [vmem:[%s300 + $0x1f8] sm:$0xff]
      %v373 = vld [vmem:[%s300 + $0x200] sm:$0x7]
      %v374 = vpack.c.bf16 %v310, %v309
      %v375 = vpack.c.bf16 %v312, %v311
      %v376 = vpack.c.bf16 %v314, %v313
      %v377 = vpack.c.bf16 %v316, %v315
      %v378 = vpack.c.bf16 %v318, %v317
      %v379 = vpack.c.bf16 %v320, %v319
      %v380 = vpack.c.bf16 %v322, %v321
      %v381 = vpack.c.bf16 %v324, %v323
      %v382 = vpack.c.bf16 %v326, %v325
      %v383 = vpack.c.bf16 %v328, %v327
      %v384 = vpack.c.bf16 %v330, %v329
      %v385 = vpack.c.bf16 %v332, %v331
      %v386 = vpack.c.bf16 %v334, %v333
      %v387 = vpack.c.bf16 %v336, %v335
      %v388 = vpack.c.bf16 %v338, %v337
      %v389 = vpack.c.bf16 %v340, %v339
      %v390 = vpack.c.bf16 %v342, %v341
      %v391 = vpack.c.bf16 %v344, %v343
      %v392 = vpack.c.bf16 %v346, %v345
      %v393 = vpack.c.bf16 %v348, %v347
      %v394 = vpack.c.bf16 %v350, %v349
      %v395 = vpack.c.bf16 %v352, %v351
      %v396 = vpack.c.bf16 %v354, %v353
      %v397 = vpack.c.bf16 %v356, %v355
      %v398 = vpack.c.bf16 %v358, %v357
      %v399 = vpack.c.bf16 %v360, %v359
      %v400 = vpack.c.bf16 %v362, %v361
      %v401 = vpack.c.bf16 %v364, %v363
      %v402 = vpack.c.bf16 %v366, %v365
      %v403 = vpack.c.bf16 %v368, %v367
      %v404 = vpack.c.bf16 %v370, %v369
      %v405 = vpack.c.bf16 %v372, %v371
      %v406 = vpack.c.bf16 %v373, %v373
      %v407 = vld [vmem:[%s1] sm:$0xff]
      %v408 = vld [vmem:[%s1 + $0x8] sm:$0xff]
      %v409 = vld [vmem:[%s1 + $0x10] sm:$0xf]
      %v410 = vld [vmem:[%s1 + $0x14] sm:$0xff]
      %v411 = vld [vmem:[%s1 + $0x1c] sm:$0xff]
      %v412 = vld [vmem:[%s1 + $0x24] sm:$0xf]
      %v413 = vld [vmem:[%s1 + $0x28] sm:$0xff]
      %v414 = vld [vmem:[%s1 + $0x30] sm:$0xff]
      %v415 = vld [vmem:[%s1 + $0x38] sm:$0xf]
      %v416 = vld [vmem:[%s1 + $0x3c] sm:$0xff]
      %v417 = vld [vmem:[%s1 + $0x44] sm:$0xff]
      %v418 = vld [vmem:[%s1 + $0x4c] sm:$0xf]
      %v419 = vld [vmem:[%s1 + $0x50] sm:$0xff]
      %v420 = vld [vmem:[%s1 + $0x58] sm:$0xff]
      %v421 = vld [vmem:[%s1 + $0x60] sm:$0xf]
      %v422 = vld [vmem:[%s1 + $0x64] sm:$0xff]
      %v423 = vld [vmem:[%s1 + $0x6c] sm:$0xff]
      %v424 = vld [vmem:[%s1 + $0x74] sm:$0xf]
      %v425 = vld [vmem:[%s1 + $0x78] sm:$0xff]
      %v426 = vld [vmem:[%s1 + $0x80] sm:$0xff]
      %v427 = vld [vmem:[%s1 + $0x88] sm:$0xf]
      %v428 = vld [vmem:[%s1 + $0x8c] sm:$0xff]
      %v429 = vld [vmem:[%s1 + $0x94] sm:$0xff]
      %v430 = vld [vmem:[%s1 + $0x9c] sm:$0xf]
      %v431 = vld [vmem:[%s1 + $0xa0] sm:$0xff]
      %v432 = vld [vmem:[%s1 + $0xa8] sm:$0xff]
      %v433 = vld [vmem:[%s1 + $0xb0] sm:$0xf]
      %v434 = vld [vmem:[%s1 + $0xb4] sm:$0xff]
      %v435 = vld [vmem:[%s1 + $0xbc] sm:$0xff]
      %v436 = vld [vmem:[%s1 + $0xc4] sm:$0xf]
      %v437 = vld [vmem:[%s1 + $0xc8] sm:$0xff]
      %v438 = vld [vmem:[%s1 + $0xd0] sm:$0xff]
      %v439 = vld [vmem:[%s1 + $0xd8] sm:$0xf]
      %v440 = vld [vmem:[%s1 + $0xdc] sm:$0xff]
      %v441 = vld [vmem:[%s1 + $0xe4] sm:$0xff]
      %v442 = vld [vmem:[%s1 + $0xec] sm:$0xf]
      %v443 = vld [vmem:[%s1 + $0xf0] sm:$0xff]
      %v444 = vld [vmem:[%s1 + $0xf8] sm:$0xff]
      %v445 = vld [vmem:[%s1 + $0x100] sm:$0xf]
      %v446 = vld [vmem:[%s1 + $0x104] sm:$0xff]
      %v447 = vld [vmem:[%s1 + $0x10c] sm:$0xff]
      %v448 = vld [vmem:[%s1 + $0x114] sm:$0xf]
      %v449 = vld [vmem:[%s1 + $0x118] sm:$0xff]
      %v450 = vld [vmem:[%s1 + $0x120] sm:$0xff]
      %v451 = vld [vmem:[%s1 + $0x128] sm:$0xf]
      %v452 = vld [vmem:[%s1 + $0x12c] sm:$0xff]
      %v453 = vld [vmem:[%s1 + $0x134] sm:$0xff]
      %v454 = vld [vmem:[%s1 + $0x13c] sm:$0xf]
      %v455 = vld [vmem:[%s1 + $0x140] sm:$0xff]
      %v456 = vld [vmem:[%s1 + $0x148] sm:$0xff]
      %v457 = vld [vmem:[%s1 + $0x150] sm:$0xf]
      %v458 = vld [vmem:[%s1 + $0x154] sm:$0xff]
      %v459 = vld [vmem:[%s1 + $0x15c] sm:$0xff]
      %v460 = vld [vmem:[%s1 + $0x164] sm:$0xf]
      %v461 = vld [vmem:[%s1 + $0x168] sm:$0xff]
      %v462 = vld [vmem:[%s1 + $0x170] sm:$0xff]
      %v463 = vld [vmem:[%s1 + $0x178] sm:$0xf]
      %v464 = vld [vmem:[%s1 + $0x17c] sm:$0xff]
      %v465 = vld [vmem:[%s1 + $0x184] sm:$0xff]
      %v466 = vld [vmem:[%s1 + $0x18c] sm:$0xf]
      %v467 = vld [vmem:[%s1 + $0x190] sm:$0xff]
      %v468 = vld [vmem:[%s1 + $0x198] sm:$0xff]
      %v469 = vld [vmem:[%s1 + $0x1a0] sm:$0xf]
      %v470 = vld [vmem:[%s1 + $0x1a4] sm:$0xff]
      %v471 = vld [vmem:[%s1 + $0x1ac] sm:$0xff]
      %v472 = vld [vmem:[%s1 + $0x1b4] sm:$0xf]
      %v473 = vld [vmem:[%s1 + $0x1b8] sm:$0xff]
      %v474 = vld [vmem:[%s1 + $0x1c0] sm:$0xff]
      %v475 = vld [vmem:[%s1 + $0x1c8] sm:$0xf]
      %v476 = vld [vmem:[%s1 + $0x1cc] sm:$0xff]
      %v477 = vld [vmem:[%s1 + $0x1d4] sm:$0xff]
      %v478 = vld [vmem:[%s1 + $0x1dc] sm:$0xf]
      %v479 = vld [vmem:[%s1 + $0x1e0] sm:$0xff]
      %v480 = vld [vmem:[%s1 + $0x1e8] sm:$0xff]
      %v481 = vld [vmem:[%s1 + $0x1f0] sm:$0xf]
      %v482 = vld [vmem:[%s1 + $0x1f4] sm:$0xff]
      %v483 = vld [vmem:[%s1 + $0x1fc] sm:$0xff]
      %v484 = vld [vmem:[%s1 + $0x204] sm:$0xf]
      %v485 = vld [vmem:[%s1 + $0x208] sm:$0xff]
      %v486 = vld [vmem:[%s1 + $0x210] sm:$0xff]
      %v487 = vld [vmem:[%s1 + $0x218] sm:$0xf]
      %v488 = vld [vmem:[%s1 + $0x21c] sm:$0xff]
      %v489 = vld [vmem:[%s1 + $0x224] sm:$0xff]
      %v490 = vld [vmem:[%s1 + $0x22c] sm:$0xf]
      %v491 = vld [vmem:[%s1 + $0x230] sm:$0xff]
      %v492 = vld [vmem:[%s1 + $0x238] sm:$0xff]
      %v493 = vld [vmem:[%s1 + $0x240] sm:$0xf]
      %v494 = vld [vmem:[%s1 + $0x244] sm:$0xff]
      %v495 = vld [vmem:[%s1 + $0x24c] sm:$0xff]
      %v496 = vld [vmem:[%s1 + $0x254] sm:$0xf]
      %v497 = vld [vmem:[%s1 + $0x258] sm:$0xff]
      %v498 = vld [vmem:[%s1 + $0x260] sm:$0xff]
      %v499 = vld [vmem:[%s1 + $0x268] sm:$0xf]
      %v500 = vld [vmem:[%s1 + $0x26c] sm:$0xff]
      %v501 = vld [vmem:[%s1 + $0x274] sm:$0xff]
      %v502 = vld [vmem:[%s1 + $0x27c] sm:$0xf]
      %v503 = vld [vmem:[%s1 + $0x280] sm:$0xff]
      %v504 = vld [vmem:[%s1 + $0x288] sm:$0xff]
      %v505 = vld [vmem:[%s1 + $0x290] sm:$0xf]
      %v506 = vld [vmem:[%s1 + $0x294] sm:$0xff]
      %v507 = vld [vmem:[%s1 + $0x29c] sm:$0xff]
      %v508 = vld [vmem:[%s1 + $0x2a4] sm:$0xf]
      %v509 = vld [vmem:[%s1 + $0x2a8] sm:$0xff]
      %v510 = vld [vmem:[%s1 + $0x2b0] sm:$0xff]
      %v511 = vld [vmem:[%s1 + $0x2b8] sm:$0xf]
      %v512 = vld [vmem:[%s1 + $0x2bc] sm:$0xff]
      %v513 = vld [vmem:[%s1 + $0x2c4] sm:$0xff]
      %v514 = vld [vmem:[%s1 + $0x2cc] sm:$0xf]
      %v515 = vld [vmem:[%s1 + $0x2d0] sm:$0xff]
      %v516 = vld [vmem:[%s1 + $0x2d8] sm:$0xff]
      %v517 = vld [vmem:[%s1 + $0x2e0] sm:$0xf]
      %v518 = vld [vmem:[%s1 + $0x2e4] sm:$0xff]
      %v519 = vld [vmem:[%s1 + $0x2ec] sm:$0xff]
      %v520 = vld [vmem:[%s1 + $0x2f4] sm:$0xf]
      %v521 = vld [vmem:[%s1 + $0x2f8] sm:$0xff]
      %v522 = vld [vmem:[%s1 + $0x300] sm:$0xff]
      %v523 = vld [vmem:[%s1 + $0x308] sm:$0xf]
      %v524 = vld [vmem:[%s1 + $0x30c] sm:$0xff]
      %v525 = vld [vmem:[%s1 + $0x314] sm:$0xff]
      %v526 = vld [vmem:[%s1 + $0x31c] sm:$0xf]
      %v527 = vld [vmem:[%s1 + $0x320] sm:$0xff]
      %v528 = vld [vmem:[%s1 + $0x328] sm:$0xff]
      %v529 = vld [vmem:[%s1 + $0x330] sm:$0xf]
      %v530 = vld [vmem:[%s1 + $0x334] sm:$0xff]
      %v531 = vld [vmem:[%s1 + $0x33c] sm:$0xff]
      %v532 = vld [vmem:[%s1 + $0x344] sm:$0xf]
      %v533 = vld [vmem:[%s1 + $0x348] sm:$0xff]
      %v534 = vld [vmem:[%s1 + $0x350] sm:$0xff]
      %v535 = vld [vmem:[%s1 + $0x358] sm:$0xf]
      %v536 = vld [vmem:[%s1 + $0x35c] sm:$0xff]
      %v537 = vld [vmem:[%s1 + $0x364] sm:$0xff]
      %v538 = vld [vmem:[%s1 + $0x36c] sm:$0xf]
      %v539 = vld [vmem:[%s1 + $0x370] sm:$0xff]
      %v540 = vld [vmem:[%s1 + $0x378] sm:$0xff]
      %v541 = vld [vmem:[%s1 + $0x380] sm:$0xf]
      %v542 = vld [vmem:[%s1 + $0x384] sm:$0xff]
      %v543 = vld [vmem:[%s1 + $0x38c] sm:$0xff]
      %v544 = vld [vmem:[%s1 + $0x394] sm:$0xf]
      %v545 = vld [vmem:[%s1 + $0x398] sm:$0xff]
      %v546 = vld [vmem:[%s1 + $0x3a0] sm:$0xff]
      %v547 = vld [vmem:[%s1 + $0x3a8] sm:$0xf]
      %v548 = vld [vmem:[%s1 + $0x3ac] sm:$0xff]
      %v549 = vld [vmem:[%s1 + $0x3b4] sm:$0xff]
      %v550 = vld [vmem:[%s1 + $0x3bc] sm:$0xf]
      %v551 = vld [vmem:[%s1 + $0x3c0] sm:$0xff]
      %v552 = vld [vmem:[%s1 + $0x3c8] sm:$0xff]
      %v553 = vld [vmem:[%s1 + $0x3d0] sm:$0xf]
      %v554 = vld [vmem:[%s1 + $0x3d4] sm:$0xff]
      %v555 = vld [vmem:[%s1 + $0x3dc] sm:$0xff]
      %v556 = vld [vmem:[%s1 + $0x3e4] sm:$0xf]
      %v557 = vld [vmem:[%s1 + $0x3e8] sm:$0xff]
      %v558 = vld [vmem:[%s1 + $0x3f0] sm:$0xff]
      %v559 = vld [vmem:[%s1 + $0x3f8] sm:$0xf]
      %v560 = vld [vmem:[%s1 + $0x3fc] sm:$0xff]
      %v561 = vld [vmem:[%s1 + $0x404] sm:$0xff]
      %v562 = vld [vmem:[%s1 + $0x40c] sm:$0xf]
      %v563 = vld [vmem:[%s1 + $0x410] sm:$0xff]
      %v564 = vld [vmem:[%s1 + $0x418] sm:$0xff]
      %v565 = vld [vmem:[%s1 + $0x420] sm:$0xf]
      %v566 = vld [vmem:[%s1 + $0x424] sm:$0xff]
      %v567 = vld [vmem:[%s1 + $0x42c] sm:$0xff]
      %v568 = vld [vmem:[%s1 + $0x434] sm:$0xf]
      %v569 = vld [vmem:[%s1 + $0x438] sm:$0xff]
      %v570 = vld [vmem:[%s1 + $0x440] sm:$0xff]
      %v571 = vld [vmem:[%s1 + $0x448] sm:$0xf]
      %v572 = vld [vmem:[%s1 + $0x44c] sm:$0xff]
      %v573 = vld [vmem:[%s1 + $0x454] sm:$0xff]
      %v574 = vld [vmem:[%s1 + $0x45c] sm:$0xf]
      %v575 = vld [vmem:[%s1 + $0x460] sm:$0xff]
      %v576 = vld [vmem:[%s1 + $0x468] sm:$0xff]
      %v577 = vld [vmem:[%s1 + $0x470] sm:$0xf]
      %v578 = vld [vmem:[%s1 + $0x474] sm:$0xff]
      %v579 = vld [vmem:[%s1 + $0x47c] sm:$0xff]
      %v580 = vld [vmem:[%s1 + $0x484] sm:$0xf]
      %v581 = vld [vmem:[%s1 + $0x488] sm:$0xff]
      %v582 = vld [vmem:[%s1 + $0x490] sm:$0xff]
      %v583 = vld [vmem:[%s1 + $0x498] sm:$0xf]
      %v584 = vld [vmem:[%s1 + $0x49c] sm:$0xff]
      %v585 = vld [vmem:[%s1 + $0x4a4] sm:$0xff]
      %v586 = vld [vmem:[%s1 + $0x4ac] sm:$0xf]
      %v587 = vld [vmem:[%s1 + $0x4b0] sm:$0xff]
      %v588 = vld [vmem:[%s1 + $0x4b8] sm:$0xff]
      %v589 = vld [vmem:[%s1 + $0x4c0] sm:$0xf]
      %v590 = vld [vmem:[%s1 + $0x4c4] sm:$0xff]
      %v591 = vld [vmem:[%s1 + $0x4cc] sm:$0xff]
      %v592 = vld [vmem:[%s1 + $0x4d4] sm:$0xf]
      %v593 = vld [vmem:[%s1 + $0x4d8] sm:$0xff]
      %v594 = vld [vmem:[%s1 + $0x4e0] sm:$0xff]
      %v595 = vld [vmem:[%s1 + $0x4e8] sm:$0xf]
      %v596 = vld [vmem:[%s1 + $0x4ec] sm:$0xff]
      %v597 = vld [vmem:[%s1 + $0x4f4] sm:$0xff]
      %v598 = vld [vmem:[%s1 + $0x4fc] sm:$0xf]
      %v599 = vld [vmem:[%s2] sm:$0xff]
      %v600 = vld [vmem:[%s2 + $0x8] sm:$0xff]
      %v601 = vld [vmem:[%s2 + $0x10] sm:$0xff]
      %v602 = vld [vmem:[%s2 + $0x18] sm:$0xff]
      %v603 = vld [vmem:[%s2 + $0x20] sm:$0xff]
      %v604 = vld [vmem:[%s2 + $0x28] sm:$0xff]
      %v605 = vld [vmem:[%s2 + $0x30] sm:$0xff]
      %v606 = vld [vmem:[%s2 + $0x38] sm:$0xff]
      %v607 = vld [vmem:[%s2 + $0x40] sm:$0xff]
      %v608 = vld [vmem:[%s2 + $0x48] sm:$0xff]
      %v609 = vld [vmem:[%s2 + $0x50] sm:$0xff]
      %v610 = vld [vmem:[%s2 + $0x58] sm:$0xff]
      %v611 = vld [vmem:[%s2 + $0x60] sm:$0xff]
      %v612 = vld [vmem:[%s2 + $0x68] sm:$0xff]
      %v613 = vld [vmem:[%s2 + $0x70] sm:$0xff]
      %v614 = vld [vmem:[%s2 + $0x78] sm:$0xff]
      %v615 = vld [vmem:[%s2 + $0x80] sm:$0xff]
      %v616 = vld [vmem:[%s2 + $0x88] sm:$0xff]
      %v617 = vld [vmem:[%s2 + $0x90] sm:$0xff]
      %v618 = vld [vmem:[%s2 + $0x98] sm:$0xff]
      %v619 = vld [vmem:[%s2 + $0xa0] sm:$0xff]
      %v620 = vld [vmem:[%s2 + $0xa8] sm:$0xff]
      %v621 = vld [vmem:[%s2 + $0xb0] sm:$0xff]
      %v622 = vld [vmem:[%s2 + $0xb8] sm:$0xff]
      %v623 = vld [vmem:[%s2 + $0xc0] sm:$0xff]
      %v624 = vld [vmem:[%s2 + $0xc8] sm:$0xff]
      %v625 = vld [vmem:[%s2 + $0xd0] sm:$0xff]
      %v626 = vld [vmem:[%s2 + $0xd8] sm:$0xff]
      %v627 = vld [vmem:[%s2 + $0xe0] sm:$0xff]
      %v628 = vld [vmem:[%s2 + $0xe8] sm:$0xff]
      %v629 = vld [vmem:[%s2 + $0xf0] sm:$0xff]
      %v630 = vld [vmem:[%s2 + $0xf8] sm:$0xff]
      %v631 = vld [vmem:[%s2 + $0x100] sm:$0xff]
      %v632 = vld [vmem:[%s2 + $0x108] sm:$0xff]
      %v633 = vld [vmem:[%s2 + $0x110] sm:$0xff]
      %v634 = vld [vmem:[%s2 + $0x118] sm:$0xff]
      %v635 = vld [vmem:[%s2 + $0x120] sm:$0xff]
      %v636 = vld [vmem:[%s2 + $0x128] sm:$0xff]
      %v637 = vld [vmem:[%s2 + $0x130] sm:$0xff]
      %v638 = vld [vmem:[%s2 + $0x138] sm:$0xff]
      %v639 = vld [vmem:[%s2 + $0x140] sm:$0xff]
      %v640 = vld [vmem:[%s2 + $0x148] sm:$0xff]
      %v641 = vld [vmem:[%s2 + $0x150] sm:$0xff]
      %v642 = vld [vmem:[%s2 + $0x158] sm:$0xff]
      %v643 = vld [vmem:[%s2 + $0x160] sm:$0xff]
      %v644 = vld [vmem:[%s2 + $0x168] sm:$0xff]
      %v645 = vld [vmem:[%s2 + $0x170] sm:$0xff]
      %v646 = vld [vmem:[%s2 + $0x178] sm:$0xff]
      %v647 = vld [vmem:[%s2 + $0x180] sm:$0xff]
      %v648 = vld [vmem:[%s2 + $0x188] sm:$0xff]
      %v649 = vld [vmem:[%s2 + $0x190] sm:$0xff]
      %v650 = vld [vmem:[%s2 + $0x198] sm:$0xff]
      %v651 = vld [vmem:[%s2 + $0x1a0] sm:$0xff]
      %v652 = vld [vmem:[%s2 + $0x1a8] sm:$0xff]
      %v653 = vld [vmem:[%s2 + $0x1b0] sm:$0xff]
      %v654 = vld [vmem:[%s2 + $0x1b8] sm:$0xff]
      %v655 = vld [vmem:[%s2 + $0x1c0] sm:$0xff]
      %v656 = vld [vmem:[%s2 + $0x1c8] sm:$0xff]
      %v657 = vld [vmem:[%s2 + $0x1d0] sm:$0xff]
      %v658 = vld [vmem:[%s2 + $0x1d8] sm:$0xff]
      %v659 = vld [vmem:[%s2 + $0x1e0] sm:$0xff]
      %v660 = vld [vmem:[%s2 + $0x1e8] sm:$0xff]
      %v661 = vld [vmem:[%s2 + $0x1f0] sm:$0xff]
      %v662 = vld [vmem:[%s2 + $0x1f8] sm:$0xff]
      %664 = vset.pattern.permute.xlu0 0
      %665 = vperm.xlu0 %664, %v599
      %v666 = vpop.permute.xlu0 %665
      %669 = vset.pattern.permute.xlu0 0
      %670 = vperm.xlu0 %669, %v600
      %v671 = vpop.permute.xlu0 %670
      %674 = vset.pattern.permute.xlu0 0
      %675 = vperm.xlu0 %674, %v601
      %v676 = vpop.permute.xlu0 %675
      %679 = vset.pattern.permute.xlu0 0
      %680 = vperm.xlu0 %679, %v602
      %v681 = vpop.permute.xlu0 %680
      %684 = vset.pattern.permute.xlu0 0
      %685 = vperm.xlu0 %684, %v603
      %v686 = vpop.permute.xlu0 %685
      %689 = vset.pattern.permute.xlu0 0
      %690 = vperm.xlu0 %689, %v604
      %v691 = vpop.permute.xlu0 %690
      %694 = vset.pattern.permute.xlu0 0
      %695 = vperm.xlu0 %694, %v605
      %v696 = vpop.permute.xlu0 %695
      %699 = vset.pattern.permute.xlu0 0
      %700 = vperm.xlu0 %699, %v606
      %v701 = vpop.permute.xlu0 %700
      %704 = vset.pattern.permute.xlu0 0
      %705 = vperm.xlu0 %704, %v607
      %v706 = vpop.permute.xlu0 %705
      %709 = vset.pattern.permute.xlu0 0
      %710 = vperm.xlu0 %709, %v608
      %v711 = vpop.permute.xlu0 %710
      %714 = vset.pattern.permute.xlu0 0
      %715 = vperm.xlu0 %714, %v609
      %v716 = vpop.permute.xlu0 %715
      %719 = vset.pattern.permute.xlu0 0
      %720 = vperm.xlu0 %719, %v610
      %v721 = vpop.permute.xlu0 %720
      %724 = vset.pattern.permute.xlu0 0
      %725 = vperm.xlu0 %724, %v611
      %v726 = vpop.permute.xlu0 %725
      %729 = vset.pattern.permute.xlu0 0
      %730 = vperm.xlu0 %729, %v612
      %v731 = vpop.permute.xlu0 %730
      %734 = vset.pattern.permute.xlu0 0
      %735 = vperm.xlu0 %734, %v613
      %v736 = vpop.permute.xlu0 %735
      %739 = vset.pattern.permute.xlu0 0
      %740 = vperm.xlu0 %739, %v614
      %v741 = vpop.permute.xlu0 %740
      %744 = vset.pattern.permute.xlu0 0
      %745 = vperm.xlu0 %744, %v615
      %v746 = vpop.permute.xlu0 %745
      %749 = vset.pattern.permute.xlu0 0
      %750 = vperm.xlu0 %749, %v616
      %v751 = vpop.permute.xlu0 %750
      %754 = vset.pattern.permute.xlu0 0
      %755 = vperm.xlu0 %754, %v617
      %v756 = vpop.permute.xlu0 %755
      %759 = vset.pattern.permute.xlu0 0
      %760 = vperm.xlu0 %759, %v618
      %v761 = vpop.permute.xlu0 %760
      %764 = vset.pattern.permute.xlu0 0
      %765 = vperm.xlu0 %764, %v619
      %v766 = vpop.permute.xlu0 %765
      %769 = vset.pattern.permute.xlu0 0
      %770 = vperm.xlu0 %769, %v620
      %v771 = vpop.permute.xlu0 %770
      %774 = vset.pattern.permute.xlu0 0
      %775 = vperm.xlu0 %774, %v621
      %v776 = vpop.permute.xlu0 %775
      %779 = vset.pattern.permute.xlu0 0
      %780 = vperm.xlu0 %779, %v622
      %v781 = vpop.permute.xlu0 %780
      %784 = vset.pattern.permute.xlu0 0
      %785 = vperm.xlu0 %784, %v623
      %v786 = vpop.permute.xlu0 %785
      %789 = vset.pattern.permute.xlu0 0
      %790 = vperm.xlu0 %789, %v624
      %v791 = vpop.permute.xlu0 %790
      %794 = vset.pattern.permute.xlu0 0
      %795 = vperm.xlu0 %794, %v625
      %v796 = vpop.permute.xlu0 %795
      %799 = vset.pattern.permute.xlu0 0
      %800 = vperm.xlu0 %799, %v626
      %v801 = vpop.permute.xlu0 %800
      %804 = vset.pattern.permute.xlu0 0
      %805 = vperm.xlu0 %804, %v627
      %v806 = vpop.permute.xlu0 %805
      %809 = vset.pattern.permute.xlu0 0
      %810 = vperm.xlu0 %809, %v628
      %v811 = vpop.permute.xlu0 %810
      %814 = vset.pattern.permute.xlu0 0
      %815 = vperm.xlu0 %814, %v629
      %v816 = vpop.permute.xlu0 %815
      %819 = vset.pattern.permute.xlu0 0
      %820 = vperm.xlu0 %819, %v630
      %v821 = vpop.permute.xlu0 %820
      %824 = vset.pattern.permute.xlu0 0
      %825 = vperm.xlu0 %824, %v631
      %v826 = vpop.permute.xlu0 %825
      %829 = vset.pattern.permute.xlu0 0
      %830 = vperm.xlu0 %829, %v632
      %v831 = vpop.permute.xlu0 %830
      %834 = vset.pattern.permute.xlu0 0
      %835 = vperm.xlu0 %834, %v633
      %v836 = vpop.permute.xlu0 %835
      %839 = vset.pattern.permute.xlu0 0
      %840 = vperm.xlu0 %839, %v634
      %v841 = vpop.permute.xlu0 %840
      %844 = vset.pattern.permute.xlu0 0
      %845 = vperm.xlu0 %844, %v635
      %v846 = vpop.permute.xlu0 %845
      %849 = vset.pattern.permute.xlu0 0
      %850 = vperm.xlu0 %849, %v636
      %v851 = vpop.permute.xlu0 %850
      %854 = vset.pattern.permute.xlu0 0
      %855 = vperm.xlu0 %854, %v637
      %v856 = vpop.permute.xlu0 %855
      %859 = vset.pattern.permute.xlu0 0
      %860 = vperm.xlu0 %859, %v638
      %v861 = vpop.permute.xlu0 %860
      %864 = vset.pattern.permute.xlu0 0
      %865 = vperm.xlu0 %864, %v639
      %v866 = vpop.permute.xlu0 %865
      %869 = vset.pattern.permute.xlu0 0
      %870 = vperm.xlu0 %869, %v640
      %v871 = vpop.permute.xlu0 %870
      %874 = vset.pattern.permute.xlu0 0
      %875 = vperm.xlu0 %874, %v641
      %v876 = vpop.permute.xlu0 %875
      %879 = vset.pattern.permute.xlu0 0
      %880 = vperm.xlu0 %879, %v642
      %v881 = vpop.permute.xlu0 %880
      %884 = vset.pattern.permute.xlu0 0
      %885 = vperm.xlu0 %884, %v643
      %v886 = vpop.permute.xlu0 %885
      %889 = vset.pattern.permute.xlu0 0
      %890 = vperm.xlu0 %889, %v644
      %v891 = vpop.permute.xlu0 %890
      %894 = vset.pattern.permute.xlu0 0
      %895 = vperm.xlu0 %894, %v645
      %v896 = vpop.permute.xlu0 %895
      %899 = vset.pattern.permute.xlu0 0
      %900 = vperm.xlu0 %899, %v646
      %v901 = vpop.permute.xlu0 %900
      %904 = vset.pattern.permute.xlu0 0
      %905 = vperm.xlu0 %904, %v647
      %v906 = vpop.permute.xlu0 %905
      %909 = vset.pattern.permute.xlu0 0
      %910 = vperm.xlu0 %909, %v648
      %v911 = vpop.permute.xlu0 %910
      %914 = vset.pattern.permute.xlu0 0
      %915 = vperm.xlu0 %914, %v649
      %v916 = vpop.permute.xlu0 %915
      %919 = vset.pattern.permute.xlu0 0
      %920 = vperm.xlu0 %919, %v650
      %v921 = vpop.permute.xlu0 %920
      %924 = vset.pattern.permute.xlu0 0
      %925 = vperm.xlu0 %924, %v651
      %v926 = vpop.permute.xlu0 %925
      %929 = vset.pattern.permute.xlu0 0
      %930 = vperm.xlu0 %929, %v652
      %v931 = vpop.permute.xlu0 %930
      %934 = vset.pattern.permute.xlu0 0
      %935 = vperm.xlu0 %934, %v653
      %v936 = vpop.permute.xlu0 %935
      %939 = vset.pattern.permute.xlu0 0
      %940 = vperm.xlu0 %939, %v654
      %v941 = vpop.permute.xlu0 %940
      %944 = vset.pattern.permute.xlu0 0
      %945 = vperm.xlu0 %944, %v655
      %v946 = vpop.permute.xlu0 %945
      %949 = vset.pattern.permute.xlu0 0
      %950 = vperm.xlu0 %949, %v656
      %v951 = vpop.permute.xlu0 %950
      %954 = vset.pattern.permute.xlu0 0
      %955 = vperm.xlu0 %954, %v657
      %v956 = vpop.permute.xlu0 %955
      %959 = vset.pattern.permute.xlu0 0
      %960 = vperm.xlu0 %959, %v658
      %v961 = vpop.permute.xlu0 %960
      %964 = vset.pattern.permute.xlu0 0
      %965 = vperm.xlu0 %964, %v659
      %v966 = vpop.permute.xlu0 %965
      %969 = vset.pattern.permute.xlu0 0
      %970 = vperm.xlu0 %969, %v660
      %v971 = vpop.permute.xlu0 %970
      %974 = vset.pattern.permute.xlu0 0
      %975 = vperm.xlu0 %974, %v661
      %v976 = vpop.permute.xlu0 %975
      %979 = vset.pattern.permute.xlu0 0
      %980 = vperm.xlu0 %979, %v662
      %v981 = vpop.permute.xlu0 %980
      %v1175 = vunpack.c.l.b16 %v407
      %v1176 = vunpack.c.h.b16 %v407
      %v1177 = vunpack.c.l.b16 %v408
      %v1178 = vunpack.c.h.b16 %v408
      %v1179 = vunpack.c.l.b16 %v409
      %v1180 = vunpack.c.l.b16 %v410
      %v1181 = vunpack.c.h.b16 %v410
      %v1182 = vunpack.c.l.b16 %v411
      %v1183 = vunpack.c.h.b16 %v411
      %v1184 = vunpack.c.l.b16 %v412
      %v1185 = vunpack.c.l.b16 %v413
      %v1186 = vunpack.c.h.b16 %v413
      %v1187 = vunpack.c.l.b16 %v414
      %v1188 = vunpack.c.h.b16 %v414
      %v1189 = vunpack.c.l.b16 %v415
      %v1190 = vunpack.c.l.b16 %v416
      %v1191 = vunpack.c.h.b16 %v416
      %v1192 = vunpack.c.l.b16 %v417
      %v1193 = vunpack.c.h.b16 %v417
      %v1194 = vunpack.c.l.b16 %v418
      %v1195 = vunpack.c.l.b16 %v419
      %v1196 = vunpack.c.h.b16 %v419
      %v1197 = vunpack.c.l.b16 %v420
      %v1198 = vunpack.c.h.b16 %v420
      %v1199 = vunpack.c.l.b16 %v421
      %v1200 = vunpack.c.l.b16 %v422
      %v1201 = vunpack.c.h.b16 %v422
      %v1202 = vunpack.c.l.b16 %v423
      %v1203 = vunpack.c.h.b16 %v423
      %v1204 = vunpack.c.l.b16 %v424
      %v1205 = vunpack.c.l.b16 %v425
      %v1206 = vunpack.c.h.b16 %v425
      %v1207 = vunpack.c.l.b16 %v426
      %v1208 = vunpack.c.h.b16 %v426
      %v1209 = vunpack.c.l.b16 %v427
      %v1210 = vunpack.c.l.b16 %v428
      %v1211 = vunpack.c.h.b16 %v428
      %v1212 = vunpack.c.l.b16 %v429
      %v1213 = vunpack.c.h.b16 %v429
      %v1214 = vunpack.c.l.b16 %v430
      %v1215 = vunpack.c.l.b16 %v431
      %v1216 = vunpack.c.h.b16 %v431
      %v1217 = vunpack.c.l.b16 %v432
      %v1218 = vunpack.c.h.b16 %v432
      %v1219 = vunpack.c.l.b16 %v433
      %v1220 = vunpack.c.l.b16 %v434
      %v1221 = vunpack.c.h.b16 %v434
      %v1222 = vunpack.c.l.b16 %v435
      %v1223 = vunpack.c.h.b16 %v435
      %v1224 = vunpack.c.l.b16 %v436
      %v1225 = vunpack.c.l.b16 %v437
      %v1226 = vunpack.c.h.b16 %v437
      %v1227 = vunpack.c.l.b16 %v438
      %v1228 = vunpack.c.h.b16 %v438
      %v1229 = vunpack.c.l.b16 %v439
      %v1230 = vunpack.c.l.b16 %v440
      %v1231 = vunpack.c.h.b16 %v440
      %v1232 = vunpack.c.l.b16 %v441
      %v1233 = vunpack.c.h.b16 %v441
      %v1234 = vunpack.c.l.b16 %v442
      %v1235 = vunpack.c.l.b16 %v443
      %v1236 = vunpack.c.h.b16 %v443
      %v1237 = vunpack.c.l.b16 %v444
      %v1238 = vunpack.c.h.b16 %v444
      %v1239 = vunpack.c.l.b16 %v445
      %v1240 = vunpack.c.l.b16 %v446
      %v1241 = vunpack.c.h.b16 %v446
      %v1242 = vunpack.c.l.b16 %v447
      %v1243 = vunpack.c.h.b16 %v447
      %v1244 = vunpack.c.l.b16 %v448
      %v1245 = vunpack.c.l.b16 %v449
      %v1246 = vunpack.c.h.b16 %v449
      %v1247 = vunpack.c.l.b16 %v450
      %v1248 = vunpack.c.h.b16 %v450
      %v1249 = vunpack.c.l.b16 %v451
      %v1250 = vunpack.c.l.b16 %v452
      %v1251 = vunpack.c.h.b16 %v452
      %v1252 = vunpack.c.l.b16 %v453
      %v1253 = vunpack.c.h.b16 %v453
      %v1254 = vunpack.c.l.b16 %v454
      %v1255 = vunpack.c.l.b16 %v455
      %v1256 = vunpack.c.h.b16 %v455
      %v1257 = vunpack.c.l.b16 %v456
      %v1258 = vunpack.c.h.b16 %v456
      %v1259 = vunpack.c.l.b16 %v457
      %v1260 = vunpack.c.l.b16 %v458
      %v1261 = vunpack.c.h.b16 %v458
      %v1262 = vunpack.c.l.b16 %v459
      %v1263 = vunpack.c.h.b16 %v459
      %v1264 = vunpack.c.l.b16 %v460
      %v1265 = vunpack.c.l.b16 %v461
      %v1266 = vunpack.c.h.b16 %v461
      %v1267 = vunpack.c.l.b16 %v462
      %v1268 = vunpack.c.h.b16 %v462
      %v1269 = vunpack.c.l.b16 %v463
      %v1270 = vunpack.c.l.b16 %v464
      %v1271 = vunpack.c.h.b16 %v464
      %v1272 = vunpack.c.l.b16 %v465
      %v1273 = vunpack.c.h.b16 %v465
      %v1274 = vunpack.c.l.b16 %v466
      %v1275 = vunpack.c.l.b16 %v467
      %v1276 = vunpack.c.h.b16 %v467
      %v1277 = vunpack.c.l.b16 %v468
      %v1278 = vunpack.c.h.b16 %v468
      %v1279 = vunpack.c.l.b16 %v469
      %v1280 = vunpack.c.l.b16 %v470
      %v1281 = vunpack.c.h.b16 %v470
      %v1282 = vunpack.c.l.b16 %v471
      %v1283 = vunpack.c.h.b16 %v471
      %v1284 = vunpack.c.l.b16 %v472
      %v1285 = vunpack.c.l.b16 %v473
      %v1286 = vunpack.c.h.b16 %v473
      %v1287 = vunpack.c.l.b16 %v474
      %v1288 = vunpack.c.h.b16 %v474
      %v1289 = vunpack.c.l.b16 %v475
      %v1290 = vunpack.c.l.b16 %v476
      %v1291 = vunpack.c.h.b16 %v476
      %v1292 = vunpack.c.l.b16 %v477
      %v1293 = vunpack.c.h.b16 %v477
      %v1294 = vunpack.c.l.b16 %v478
      %v1295 = vunpack.c.l.b16 %v479
      %v1296 = vunpack.c.h.b16 %v479
      %v1297 = vunpack.c.l.b16 %v480
      %v1298 = vunpack.c.h.b16 %v480
      %v1299 = vunpack.c.l.b16 %v481
      %v1300 = vunpack.c.l.b16 %v482
      %v1301 = vunpack.c.h.b16 %v482
      %v1302 = vunpack.c.l.b16 %v483
      %v1303 = vunpack.c.h.b16 %v483
      %v1304 = vunpack.c.l.b16 %v484
      %v1305 = vunpack.c.l.b16 %v485
      %v1306 = vunpack.c.h.b16 %v485
      %v1307 = vunpack.c.l.b16 %v486
      %v1308 = vunpack.c.h.b16 %v486
      %v1309 = vunpack.c.l.b16 %v487
      %v1310 = vunpack.c.l.b16 %v488
      %v1311 = vunpack.c.h.b16 %v488
      %v1312 = vunpack.c.l.b16 %v489
      %v1313 = vunpack.c.h.b16 %v489
      %v1314 = vunpack.c.l.b16 %v490
      %v1315 = vunpack.c.l.b16 %v491
      %v1316 = vunpack.c.h.b16 %v491
      %v1317 = vunpack.c.l.b16 %v492
      %v1318 = vunpack.c.h.b16 %v492
      %v1319 = vunpack.c.l.b16 %v493
      %v1320 = vunpack.c.l.b16 %v494
      %v1321 = vunpack.c.h.b16 %v494
      %v1322 = vunpack.c.l.b16 %v495
      %v1323 = vunpack.c.h.b16 %v495
      %v1324 = vunpack.c.l.b16 %v496
      %v1325 = vunpack.c.l.b16 %v497
      %v1326 = vunpack.c.h.b16 %v497
      %v1327 = vunpack.c.l.b16 %v498
      %v1328 = vunpack.c.h.b16 %v498
      %v1329 = vunpack.c.l.b16 %v499
      %v1330 = vunpack.c.l.b16 %v500
      %v1331 = vunpack.c.h.b16 %v500
      %v1332 = vunpack.c.l.b16 %v501
      %v1333 = vunpack.c.h.b16 %v501
      %v1334 = vunpack.c.l.b16 %v502
      %v1335 = vunpack.c.l.b16 %v503
      %v1336 = vunpack.c.h.b16 %v503
      %v1337 = vunpack.c.l.b16 %v504
      %v1338 = vunpack.c.h.b16 %v504
      %v1339 = vunpack.c.l.b16 %v505
      %v1340 = vunpack.c.l.b16 %v506
      %v1341 = vunpack.c.h.b16 %v506
      %v1342 = vunpack.c.l.b16 %v507
      %v1343 = vunpack.c.h.b16 %v507
      %v1344 = vunpack.c.l.b16 %v508
      %v1345 = vunpack.c.l.b16 %v509
      %v1346 = vunpack.c.h.b16 %v509
      %v1347 = vunpack.c.l.b16 %v510
      %v1348 = vunpack.c.h.b16 %v510
      %v1349 = vunpack.c.l.b16 %v511
      %v1350 = vunpack.c.l.b16 %v512
      %v1351 = vunpack.c.h.b16 %v512
      %v1352 = vunpack.c.l.b16 %v513
      %v1353 = vunpack.c.h.b16 %v513
      %v1354 = vunpack.c.l.b16 %v514
      %v1355 = vunpack.c.l.b16 %v515
      %v1356 = vunpack.c.h.b16 %v515
      %v1357 = vunpack.c.l.b16 %v516
      %v1358 = vunpack.c.h.b16 %v516
      %v1359 = vunpack.c.l.b16 %v517
      %v1360 = vunpack.c.l.b16 %v518
      %v1361 = vunpack.c.h.b16 %v518
      %v1362 = vunpack.c.l.b16 %v519
      %v1363 = vunpack.c.h.b16 %v519
      %v1364 = vunpack.c.l.b16 %v520
      %v1365 = vunpack.c.l.b16 %v521
      %v1366 = vunpack.c.h.b16 %v521
      %v1367 = vunpack.c.l.b16 %v522
      %v1368 = vunpack.c.h.b16 %v522
      %v1369 = vunpack.c.l.b16 %v523
      %v1370 = vunpack.c.l.b16 %v524
      %v1371 = vunpack.c.h.b16 %v524
      %v1372 = vunpack.c.l.b16 %v525
      %v1373 = vunpack.c.h.b16 %v525
      %v1374 = vunpack.c.l.b16 %v526
      %v1375 = vunpack.c.l.b16 %v527
      %v1376 = vunpack.c.h.b16 %v527
      %v1377 = vunpack.c.l.b16 %v528
      %v1378 = vunpack.c.h.b16 %v528
      %v1379 = vunpack.c.l.b16 %v529
      %v1380 = vunpack.c.l.b16 %v530
      %v1381 = vunpack.c.h.b16 %v530
      %v1382 = vunpack.c.l.b16 %v531
      %v1383 = vunpack.c.h.b16 %v531
      %v1384 = vunpack.c.l.b16 %v532
      %v1385 = vunpack.c.l.b16 %v533
      %v1386 = vunpack.c.h.b16 %v533
      %v1387 = vunpack.c.l.b16 %v534
      %v1388 = vunpack.c.h.b16 %v534
      %v1389 = vunpack.c.l.b16 %v535
      %v1390 = vunpack.c.l.b16 %v536
      %v1391 = vunpack.c.h.b16 %v536
      %v1392 = vunpack.c.l.b16 %v537
      %v1393 = vunpack.c.h.b16 %v537
      %v1394 = vunpack.c.l.b16 %v538
      %v1395 = vunpack.c.l.b16 %v539
      %v1396 = vunpack.c.h.b16 %v539
      %v1397 = vunpack.c.l.b16 %v540
      %v1398 = vunpack.c.h.b16 %v540
      %v1399 = vunpack.c.l.b16 %v541
      %v1400 = vunpack.c.l.b16 %v542
      %v1401 = vunpack.c.h.b16 %v542
      %v1402 = vunpack.c.l.b16 %v543
      %v1403 = vunpack.c.h.b16 %v543
      %v1404 = vunpack.c.l.b16 %v544
      %v1405 = vunpack.c.l.b16 %v545
      %v1406 = vunpack.c.h.b16 %v545
      %v1407 = vunpack.c.l.b16 %v546
      %v1408 = vunpack.c.h.b16 %v546
      %v1409 = vunpack.c.l.b16 %v547
      %v1410 = vunpack.c.l.b16 %v548
      %v1411 = vunpack.c.h.b16 %v548
      %v1412 = vunpack.c.l.b16 %v549
      %v1413 = vunpack.c.h.b16 %v549
      %v1414 = vunpack.c.l.b16 %v550
      %v1415 = vunpack.c.l.b16 %v551
      %v1416 = vunpack.c.h.b16 %v551
      %v1417 = vunpack.c.l.b16 %v552
      %v1418 = vunpack.c.h.b16 %v552
      %v1419 = vunpack.c.l.b16 %v553
      %v1420 = vunpack.c.l.b16 %v554
      %v1421 = vunpack.c.h.b16 %v554
      %v1422 = vunpack.c.l.b16 %v555
      %v1423 = vunpack.c.h.b16 %v555
      %v1424 = vunpack.c.l.b16 %v556
      %v1425 = vunpack.c.l.b16 %v557
      %v1426 = vunpack.c.h.b16 %v557
      %v1427 = vunpack.c.l.b16 %v558
      %v1428 = vunpack.c.h.b16 %v558
      %v1429 = vunpack.c.l.b16 %v559
      %v1430 = vunpack.c.l.b16 %v560
      %v1431 = vunpack.c.h.b16 %v560
      %v1432 = vunpack.c.l.b16 %v561
      %v1433 = vunpack.c.h.b16 %v561
      %v1434 = vunpack.c.l.b16 %v562
      %v1435 = vunpack.c.l.b16 %v563
      %v1436 = vunpack.c.h.b16 %v563
      %v1437 = vunpack.c.l.b16 %v564
      %v1438 = vunpack.c.h.b16 %v564
      %v1439 = vunpack.c.l.b16 %v565
      %v1440 = vunpack.c.l.b16 %v566
      %v1441 = vunpack.c.h.b16 %v566
      %v1442 = vunpack.c.l.b16 %v567
      %v1443 = vunpack.c.h.b16 %v567
      %v1444 = vunpack.c.l.b16 %v568
      %v1445 = vunpack.c.l.b16 %v569
      %v1446 = vunpack.c.h.b16 %v569
      %v1447 = vunpack.c.l.b16 %v570
      %v1448 = vunpack.c.h.b16 %v570
      %v1449 = vunpack.c.l.b16 %v571
      %v1450 = vunpack.c.l.b16 %v572
      %v1451 = vunpack.c.h.b16 %v572
      %v1452 = vunpack.c.l.b16 %v573
      %v1453 = vunpack.c.h.b16 %v573
      %v1454 = vunpack.c.l.b16 %v574
      %v1455 = vunpack.c.l.b16 %v575
      %v1456 = vunpack.c.h.b16 %v575
      %v1457 = vunpack.c.l.b16 %v576
      %v1458 = vunpack.c.h.b16 %v576
      %v1459 = vunpack.c.l.b16 %v577
      %v1460 = vunpack.c.l.b16 %v578
      %v1461 = vunpack.c.h.b16 %v578
      %v1462 = vunpack.c.l.b16 %v579
      %v1463 = vunpack.c.h.b16 %v579
      %v1464 = vunpack.c.l.b16 %v580
      %v1465 = vunpack.c.l.b16 %v581
      %v1466 = vunpack.c.h.b16 %v581
      %v1467 = vunpack.c.l.b16 %v582
      %v1468 = vunpack.c.h.b16 %v582
      %v1469 = vunpack.c.l.b16 %v583
      %v1470 = vunpack.c.l.b16 %v584
      %v1471 = vunpack.c.h.b16 %v584
      %v1472 = vunpack.c.l.b16 %v585
      %v1473 = vunpack.c.h.b16 %v585
      %v1474 = vunpack.c.l.b16 %v586
      %v1475 = vunpack.c.l.b16 %v587
      %v1476 = vunpack.c.h.b16 %v587
      %v1477 = vunpack.c.l.b16 %v588
      %v1478 = vunpack.c.h.b16 %v588
      %v1479 = vunpack.c.l.b16 %v589
      %v1480 = vunpack.c.l.b16 %v590
      %v1481 = vunpack.c.h.b16 %v590
      %v1482 = vunpack.c.l.b16 %v591
      %v1483 = vunpack.c.h.b16 %v591
      %v1484 = vunpack.c.l.b16 %v592
      %v1485 = vunpack.c.l.b16 %v593
      %v1486 = vunpack.c.h.b16 %v593
      %v1487 = vunpack.c.l.b16 %v594
      %v1488 = vunpack.c.h.b16 %v594
      %v1489 = vunpack.c.l.b16 %v595
      %v1490 = vunpack.c.l.b16 %v596
      %v1491 = vunpack.c.h.b16 %v596
      %v1492 = vunpack.c.l.b16 %v597
      %v1493 = vunpack.c.h.b16 %v597
      %v1494 = vunpack.c.l.b16 %v598
      %v1495 = vpack.c.b16 %v1180, %v1175
      %v1496 = vpack.c.b16 %v1181, %v1176
      %v1497 = vpack.c.b16 %v1182, %v1177
      %v1498 = vpack.c.b16 %v1183, %v1178
      %v1499 = vpack.c.b16 %v1184, %v1179
      %v1500 = vpack.c.b16 %v1190, %v1185
      %v1501 = vpack.c.b16 %v1191, %v1186
      %v1502 = vpack.c.b16 %v1192, %v1187
      %v1503 = vpack.c.b16 %v1193, %v1188
      %v1504 = vpack.c.b16 %v1194, %v1189
      %v1505 = vpack.c.b16 %v1200, %v1195
      %v1506 = vpack.c.b16 %v1201, %v1196
      %v1507 = vpack.c.b16 %v1202, %v1197
      %v1508 = vpack.c.b16 %v1203, %v1198
      %v1509 = vpack.c.b16 %v1204, %v1199
      %v1510 = vpack.c.b16 %v1210, %v1205
      %v1511 = vpack.c.b16 %v1211, %v1206
      %v1512 = vpack.c.b16 %v1212, %v1207
      %v1513 = vpack.c.b16 %v1213, %v1208
      %v1514 = vpack.c.b16 %v1214, %v1209
      %v1515 = vpack.c.b16 %v1220, %v1215
      %v1516 = vpack.c.b16 %v1221, %v1216
      %v1517 = vpack.c.b16 %v1222, %v1217
      %v1518 = vpack.c.b16 %v1223, %v1218
      %v1519 = vpack.c.b16 %v1224, %v1219
      %v1520 = vpack.c.b16 %v1230, %v1225
      %v1521 = vpack.c.b16 %v1231, %v1226
      %v1522 = vpack.c.b16 %v1232, %v1227
      %v1523 = vpack.c.b16 %v1233, %v1228
      %v1524 = vpack.c.b16 %v1234, %v1229
      %v1525 = vpack.c.b16 %v1240, %v1235
      %v1526 = vpack.c.b16 %v1241, %v1236
      %v1527 = vpack.c.b16 %v1242, %v1237
      %v1528 = vpack.c.b16 %v1243, %v1238
      %v1529 = vpack.c.b16 %v1244, %v1239
      %v1530 = vpack.c.b16 %v1250, %v1245
      %v1531 = vpack.c.b16 %v1251, %v1246
      %v1532 = vpack.c.b16 %v1252, %v1247
      %v1533 = vpack.c.b16 %v1253, %v1248
      %v1534 = vpack.c.b16 %v1254, %v1249
      %v1535 = vpack.c.b16 %v1260, %v1255
      %v1536 = vpack.c.b16 %v1261, %v1256
      %v1537 = vpack.c.b16 %v1262, %v1257
      %v1538 = vpack.c.b16 %v1263, %v1258
      %v1539 = vpack.c.b16 %v1264, %v1259
      %v1540 = vpack.c.b16 %v1270, %v1265
      %v1541 = vpack.c.b16 %v1271, %v1266
      %v1542 = vpack.c.b16 %v1272, %v1267
      %v1543 = vpack.c.b16 %v1273, %v1268
      %v1544 = vpack.c.b16 %v1274, %v1269
      %v1545 = vpack.c.b16 %v1280, %v1275
      %v1546 = vpack.c.b16 %v1281, %v1276
      %v1547 = vpack.c.b16 %v1282, %v1277
      %v1548 = vpack.c.b16 %v1283, %v1278
      %v1549 = vpack.c.b16 %v1284, %v1279
      %v1550 = vpack.c.b16 %v1290, %v1285
      %v1551 = vpack.c.b16 %v1291, %v1286
      %v1552 = vpack.c.b16 %v1292, %v1287
      %v1553 = vpack.c.b16 %v1293, %v1288
      %v1554 = vpack.c.b16 %v1294, %v1289
      %v1555 = vpack.c.b16 %v1300, %v1295
      %v1556 = vpack.c.b16 %v1301, %v1296
      %v1557 = vpack.c.b16 %v1302, %v1297
      %v1558 = vpack.c.b16 %v1303, %v1298
      %v1559 = vpack.c.b16 %v1304, %v1299
      %v1560 = vpack.c.b16 %v1310, %v1305
      %v1561 = vpack.c.b16 %v1311, %v1306
      %v1562 = vpack.c.b16 %v1312, %v1307
      %v1563 = vpack.c.b16 %v1313, %v1308
      %v1564 = vpack.c.b16 %v1314, %v1309
      %v1565 = vpack.c.b16 %v1320, %v1315
      %v1566 = vpack.c.b16 %v1321, %v1316
      %v1567 = vpack.c.b16 %v1322, %v1317
      %v1568 = vpack.c.b16 %v1323, %v1318
      %v1569 = vpack.c.b16 %v1324, %v1319
      %v1570 = vpack.c.b16 %v1330, %v1325
      %v1571 = vpack.c.b16 %v1331, %v1326
      %v1572 = vpack.c.b16 %v1332, %v1327
      %v1573 = vpack.c.b16 %v1333, %v1328
      %v1574 = vpack.c.b16 %v1334, %v1329
      %v1575 = vpack.c.b16 %v1340, %v1335
      %v1576 = vpack.c.b16 %v1341, %v1336
      %v1577 = vpack.c.b16 %v1342, %v1337
      %v1578 = vpack.c.b16 %v1343, %v1338
      %v1579 = vpack.c.b16 %v1344, %v1339
      %v1580 = vpack.c.b16 %v1350, %v1345
      %v1581 = vpack.c.b16 %v1351, %v1346
      %v1582 = vpack.c.b16 %v1352, %v1347
      %v1583 = vpack.c.b16 %v1353, %v1348
      %v1584 = vpack.c.b16 %v1354, %v1349
      %v1585 = vpack.c.b16 %v1360, %v1355
      %v1586 = vpack.c.b16 %v1361, %v1356
      %v1587 = vpack.c.b16 %v1362, %v1357
      %v1588 = vpack.c.b16 %v1363, %v1358
      %v1589 = vpack.c.b16 %v1364, %v1359
      %v1590 = vpack.c.b16 %v1370, %v1365
      %v1591 = vpack.c.b16 %v1371, %v1366
      %v1592 = vpack.c.b16 %v1372, %v1367
      %v1593 = vpack.c.b16 %v1373, %v1368
      %v1594 = vpack.c.b16 %v1374, %v1369
      %v1595 = vpack.c.b16 %v1380, %v1375
      %v1596 = vpack.c.b16 %v1381, %v1376
      %v1597 = vpack.c.b16 %v1382, %v1377
      %v1598 = vpack.c.b16 %v1383, %v1378
      %v1599 = vpack.c.b16 %v1384, %v1379
      %v1600 = vpack.c.b16 %v1390, %v1385
      %v1601 = vpack.c.b16 %v1391, %v1386
      %v1602 = vpack.c.b16 %v1392, %v1387
      %v1603 = vpack.c.b16 %v1393, %v1388
      %v1604 = vpack.c.b16 %v1394, %v1389
      %v1605 = vpack.c.b16 %v1400, %v1395
      %v1606 = vpack.c.b16 %v1401, %v1396
      %v1607 = vpack.c.b16 %v1402, %v1397
      %v1608 = vpack.c.b16 %v1403, %v1398
      %v1609 = vpack.c.b16 %v1404, %v1399
      %v1610 = vpack.c.b16 %v1410, %v1405
      %v1611 = vpack.c.b16 %v1411, %v1406
      %v1612 = vpack.c.b16 %v1412, %v1407
      %v1613 = vpack.c.b16 %v1413, %v1408
      %v1614 = vpack.c.b16 %v1414, %v1409
      %v1615 = vpack.c.b16 %v1420, %v1415
      %v1616 = vpack.c.b16 %v1421, %v1416
      %v1617 = vpack.c.b16 %v1422, %v1417
      %v1618 = vpack.c.b16 %v1423, %v1418
      %v1619 = vpack.c.b16 %v1424, %v1419
      %v1620 = vpack.c.b16 %v1430, %v1425
      %v1621 = vpack.c.b16 %v1431, %v1426
      %v1622 = vpack.c.b16 %v1432, %v1427
      %v1623 = vpack.c.b16 %v1433, %v1428
      %v1624 = vpack.c.b16 %v1434, %v1429
      %v1625 = vpack.c.b16 %v1440, %v1435
      %v1626 = vpack.c.b16 %v1441, %v1436
      %v1627 = vpack.c.b16 %v1442, %v1437
      %v1628 = vpack.c.b16 %v1443, %v1438
      %v1629 = vpack.c.b16 %v1444, %v1439
      %v1630 = vpack.c.b16 %v1450, %v1445
      %v1631 = vpack.c.b16 %v1451, %v1446
      %v1632 = vpack.c.b16 %v1452, %v1447
      %v1633 = vpack.c.b16 %v1453, %v1448
      %v1634 = vpack.c.b16 %v1454, %v1449
      %v1635 = vpack.c.b16 %v1460, %v1455
      %v1636 = vpack.c.b16 %v1461, %v1456
      %v1637 = vpack.c.b16 %v1462, %v1457
      %v1638 = vpack.c.b16 %v1463, %v1458
      %v1639 = vpack.c.b16 %v1464, %v1459
      %v1640 = vpack.c.b16 %v1470, %v1465
      %v1641 = vpack.c.b16 %v1471, %v1466
      %v1642 = vpack.c.b16 %v1472, %v1467
      %v1643 = vpack.c.b16 %v1473, %v1468
      %v1644 = vpack.c.b16 %v1474, %v1469
      %v1645 = vpack.c.b16 %v1480, %v1475
      %v1646 = vpack.c.b16 %v1481, %v1476
      %v1647 = vpack.c.b16 %v1482, %v1477
      %v1648 = vpack.c.b16 %v1483, %v1478
      %v1649 = vpack.c.b16 %v1484, %v1479
      %v1650 = vpack.c.b16 %v1490, %v1485
      %v1651 = vpack.c.b16 %v1491, %v1486
      %v1652 = vpack.c.b16 %v1492, %v1487
      %v1653 = vpack.c.b16 %v1493, %v1488
      %v1654 = vpack.c.b16 %v1494, %v1489
      %vm1783 = vcmask 23552
      %v1785 = vsel %vm1783, %v1499, 0
      %v1788 = vsel %vm1783, %v1504, 0
      %v1791 = vsel %vm1783, %v1509, 0
      %v1794 = vsel %vm1783, %v1514, 0
      %v1797 = vsel %vm1783, %v1519, 0
      %v1800 = vsel %vm1783, %v1524, 0
      %v1803 = vsel %vm1783, %v1529, 0
      %v1806 = vsel %vm1783, %v1534, 0
      %v1809 = vsel %vm1783, %v1539, 0
      %v1812 = vsel %vm1783, %v1544, 0
      %v1815 = vsel %vm1783, %v1549, 0
      %v1818 = vsel %vm1783, %v1554, 0
      %v1821 = vsel %vm1783, %v1559, 0
      %v1824 = vsel %vm1783, %v1564, 0
      %v1827 = vsel %vm1783, %v1569, 0
      %v1830 = vsel %vm1783, %v1574, 0
      %v1833 = vsel %vm1783, %v1579, 0
      %v1836 = vsel %vm1783, %v1584, 0
      %v1839 = vsel %vm1783, %v1589, 0
      %v1842 = vsel %vm1783, %v1594, 0
      %v1845 = vsel %vm1783, %v1599, 0
      %v1848 = vsel %vm1783, %v1604, 0
      %v1851 = vsel %vm1783, %v1609, 0
      %v1854 = vsel %vm1783, %v1614, 0
      %v1857 = vsel %vm1783, %v1619, 0
      %v1860 = vsel %vm1783, %v1624, 0
      %v1863 = vsel %vm1783, %v1629, 0
      %v1866 = vsel %vm1783, %v1634, 0
      %v1869 = vsel %vm1783, %v1639, 0
      %v1872 = vsel %vm1783, %v1644, 0
      %v1875 = vsel %vm1783, %v1649, 0
      %v1878 = vsel %vm1783, %v1654, 0
      %vm1880 = vcmask 1040384
      %vm1881 = vcmask 1041408
      %v1882 = vsel %vm1880, 4294967295, 65535
      %v1883 = vsel %vm1881, %v1882, 0
      %v1885 = vand.u32 %v406, %v1883
      %1887 = vmatprep.subr.bf16.mxu0 0
      %1888 = vmatpush1.bf16.msra.mxu0 %v374
      %1889 = vmatprep.subr.bf16.mxu0 0
      %1890 = vmatpush1.bf16.msra.mxu0 %v375
      %1891 = vmatprep.subr.bf16.mxu0 0
      %1892 = vmatpush1.bf16.msra.mxu0 %v376
      %1893 = vmatprep.subr.bf16.mxu0 0
      %1894 = vmatpush1.bf16.msra.mxu0 %v377
      %1895 = vmatprep.subr.bf16.mxu0 0
      %1896 = vmatpush1.bf16.msra.mxu0 %v378
      %1897 = vmatprep.subr.bf16.mxu0 0
      %1898 = vmatpush1.bf16.msra.mxu0 %v379
      %1899 = vmatprep.subr.bf16.mxu0 0
      %1900 = vmatpush1.bf16.msra.mxu0 %v380
      %1901 = vmatprep.subr.bf16.mxu0 0
      %1902 = vmatpush1.bf16.msra.mxu0 %v381
      %1903 = vmatprep.subr.bf16.mxu0 0
      %1904 = vmatpush1.bf16.msra.mxu0 %v382
      %1905 = vmatprep.subr.bf16.mxu0 0
      %1906 = vmatpush1.bf16.msra.mxu0 %v383
      %1907 = vmatprep.subr.bf16.mxu0 0
      %1908 = vmatpush1.bf16.msra.mxu0 %v384
      %1909 = vmatprep.subr.bf16.mxu0 0
      %1910 = vmatpush1.bf16.msra.mxu0 %v385
      %1911 = vmatprep.subr.bf16.mxu0 0
      %1912 = vmatpush1.bf16.msra.mxu0 %v386
      %1913 = vmatprep.subr.bf16.mxu0 0
      %1914 = vmatpush1.bf16.msra.mxu0 %v387
      %1915 = vmatprep.subr.bf16.mxu0 0
      %1916 = vmatpush1.bf16.msra.mxu0 %v388
      %1917 = vmatprep.subr.bf16.mxu0 0
      %1918 = vmatpush1.bf16.msra.mxu0 %v389
      %1919 = vmatprep.mubr.bf16.mxu0 %v1496
      %1920 = vmatmul.mubr.bf16.gmra.mrb[0].mxu0 %v1495
      %v1921 = vpop.f32.mrb[0].mxu0
      %v1922 = vadd.f32 %v666, %v1921
      %v1923 = vpop.f32.mrb[0].mxu0
      %v1924 = vpop.f32.mrb[0].mxu0
      %v1925 = vadd.f32 %v671, %v1924
      %v1926 = vpop.f32.mrb[0].mxu0
      %1927 = vmatprep.mubr.bf16.mxu0 %v1501
      %1928 = vmatmul.mubr.bf16.gmra.mrb[0].mxu0 %v1500
      %v1929 = vpop.f32.mrb[0].mxu0
      %v1930 = vadd.f32 %v676, %v1929
      %v1931 = vpop.f32.mrb[0].mxu0
      %v1932 = vpop.f32.mrb[0].mxu0
      %v1933 = vadd.f32 %v681, %v1932
      %v1934 = vpop.f32.mrb[0].mxu0
      %1935 = vmatprep.mubr.bf16.mxu0 %v1506
      %1936 = vmatmul.mubr.bf16.gmra.mrb[0].mxu0 %v1505
      %v1937 = vpop.f32.mrb[0].mxu0
      %v1938 = vadd.f32 %v686, %v1937
      %v1939 = vpop.f32.mrb[0].mxu0
      %v1940 = vpop.f32.mrb[0].mxu0
      %v1941 = vadd.f32 %v691, %v1940
      %v1942 = vpop.f32.mrb[0].mxu0
      %1943 = vmatprep.mubr.bf16.mxu0 %v1511
      %1944 = vmatmul.mubr.bf16.gmra.mrb[0].mxu0 %v1510
      %v1945 = vpop.f32.mrb[0].mxu0
      %v1946 = vadd.f32 %v696, %v1945
      %v1947 = vpop.f32.mrb[0].mxu0
      %v1948 = vpop.f32.mrb[0].mxu0
      %v1949 = vadd.f32 %v701, %v1948
      %v1950 = vpop.f32.mrb[0].mxu0
      %1951 = vmatprep.mubr.bf16.mxu0 %v1516
      %1952 = vmatmul.mubr.bf16.gmra.mrb[0].mxu0 %v1515
      %v1953 = vpop.f32.mrb[0].mxu0
      %v1954 = vadd.f32 %v706, %v1953
      %v1955 = vpop.f32.mrb[0].mxu0
      %v1956 = vpop.f32.mrb[0].mxu0
      %v1957 = vadd.f32 %v711, %v1956
      %v1958 = vpop.f32.mrb[0].mxu0
      %1959 = vmatprep.mubr.bf16.mxu0 %v1521
      %1960 = vmatmul.mubr.bf16.gmra.mrb[0].mxu0 %v1520
      %v1961 = vpop.f32.mrb[0].mxu0
      %v1962 = vadd.f32 %v716, %v1961
      %v1963 = vpop.f32.mrb[0].mxu0
      %v1964 = vpop.f32.mrb[0].mxu0
      %v1965 = vadd.f32 %v721, %v1964
      %v1966 = vpop.f32.mrb[0].mxu0
      %1967 = vmatprep.mubr.bf16.mxu0 %v1526
      %1968 = vmatmul.mubr.bf16.gmra.mrb[0].mxu0 %v1525
      %v1969 = vpop.f32.mrb[0].mxu0
      %v1970 = vadd.f32 %v726, %v1969
      %v1971 = vpop.f32.mrb[0].mxu0
      %v1972 = vpop.f32.mrb[0].mxu0
      %v1973 = vadd.f32 %v731, %v1972
      %v1974 = vpop.f32.mrb[0].mxu0
      %1975 = vmatprep.mubr.bf16.mxu0 %v1531
      %1976 = vmatmul.mubr.bf16.gmra.mrb[0].mxu0 %v1530
      %v1977 = vpop.f32.mrb[0].mxu0
      %v1978 = vadd.f32 %v736, %v1977
      %v1979 = vpop.f32.mrb[0].mxu0
      %v1980 = vpop.f32.mrb[0].mxu0
      %v1981 = vadd.f32 %v741, %v1980
      %v1982 = vpop.f32.mrb[0].mxu0
      %1983 = vmatprep.mubr.bf16.mxu0 %v1536
      %1984 = vmatmul.mubr.bf16.gmra.mrb[0].mxu0 %v1535
      %v1985 = vpop.f32.mrb[0].mxu0
      %v1986 = vadd.f32 %v746, %v1985
      %v1987 = vpop.f32.mrb[0].mxu0
      %v1988 = vpop.f32.mrb[0].mxu0
      %v1989 = vadd.f32 %v751, %v1988
      %v1990 = vpop.f32.mrb[0].mxu0
      %1991 = vmatprep.mubr.bf16.mxu0 %v1541
      %1992 = vmatmul.mubr.bf16.gmra.mrb[0].mxu0 %v1540
      %v1993 = vpop.f32.mrb[0].mxu0
      %v1994 = vadd.f32 %v756, %v1993
      %v1995 = vpop.f32.mrb[0].mxu0
      %v1996 = vpop.f32.mrb[0].mxu0
      %v1997 = vadd.f32 %v761, %v1996
      %v1998 = vpop.f32.mrb[0].mxu0
      %1999 = vmatprep.mubr.bf16.mxu0 %v1546
      %2000 = vmatmul.mubr.bf16.gmra.mrb[0].mxu0 %v1545
      %v2001 = vpop.f32.mrb[0].mxu0
      %v2002 = vadd.f32 %v766, %v2001
      %v2003 = vpop.f32.mrb[0].mxu0
      %v2004 = vpop.f32.mrb[0].mxu0
      %v2005 = vadd.f32 %v771, %v2004
      %v2006 = vpop.f32.mrb[0].mxu0
      %2007 = vmatprep.mubr.bf16.mxu0 %v1551
      %2008 = vmatmul.mubr.bf16.gmra.mrb[0].mxu0 %v1550
      %v2009 = vpop.f32.mrb[0].mxu0
      %v2010 = vadd.f32 %v776, %v2009
      %v2011 = vpop.f32.mrb[0].mxu0
      %v2012 = vpop.f32.mrb[0].mxu0
      %v2013 = vadd.f32 %v781, %v2012
      %v2014 = vpop.f32.mrb[0].mxu0
      %2015 = vmatprep.mubr.bf16.mxu0 %v1556
      %2016 = vmatmul.mubr.bf16.gmra.mrb[0].mxu0 %v1555
      %v2017 = vpop.f32.mrb[0].mxu0
      %v2018 = vadd.f32 %v786, %v2017
      %v2019 = vpop.f32.mrb[0].mxu0
      %v2020 = vpop.f32.mrb[0].mxu0
      %v2021 = vadd.f32 %v791, %v2020
      %v2022 = vpop.f32.mrb[0].mxu0
      %2023 = vmatprep.mubr.bf16.mxu0 %v1561
      %2024 = vmatmul.mubr.bf16.gmra.mrb[0].mxu0 %v1560
      %v2025 = vpop.f32.mrb[0].mxu0
      %v2026 = vadd.f32 %v796, %v2025
      %v2027 = vpop.f32.mrb[0].mxu0
      %v2028 = vpop.f32.mrb[0].mxu0
      %v2029 = vadd.f32 %v801, %v2028
      %v2030 = vpop.f32.mrb[0].mxu0
      %2031 = vmatprep.mubr.bf16.mxu0 %v1566
      %2032 = vmatmul.mubr.bf16.gmra.mrb[0].mxu0 %v1565
      %v2033 = vpop.f32.mrb[0].mxu0
      %v2034 = vadd.f32 %v806, %v2033
      %v2035 = vpop.f32.mrb[0].mxu0
      %v2036 = vpop.f32.mrb[0].mxu0
      %v2037 = vadd.f32 %v811, %v2036
      %v2038 = vpop.f32.mrb[0].mxu0
      %2039 = vmatprep.mubr.bf16.mxu0 %v1571
      %2040 = vmatmul.mubr.bf16.gmra.mrb[0].mxu0 %v1570
      %v2041 = vpop.f32.mrb[0].mxu0
      %v2042 = vadd.f32 %v816, %v2041
      %v2043 = vpop.f32.mrb[0].mxu0
      %v2044 = vpop.f32.mrb[0].mxu0
      %v2045 = vadd.f32 %v821, %v2044
      %v2046 = vpop.f32.mrb[0].mxu0
      %2047 = vmatprep.mubr.bf16.mxu0 %v1576
      %2048 = vmatmul.mubr.bf16.gmra.mrb[0].mxu0 %v1575
      %v2049 = vpop.f32.mrb[0].mxu0
      %v2050 = vadd.f32 %v826, %v2049
      %v2051 = vpop.f32.mrb[0].mxu0
      %v2052 = vpop.f32.mrb[0].mxu0
      %v2053 = vadd.f32 %v831, %v2052
      %v2054 = vpop.f32.mrb[0].mxu0
      %2055 = vmatprep.mubr.bf16.mxu0 %v1581
      %2056 = vmatmul.mubr.bf16.gmra.mrb[0].mxu0 %v1580
      %v2057 = vpop.f32.mrb[0].mxu0
      %v2058 = vadd.f32 %v836, %v2057
      %v2059 = vpop.f32.mrb[0].mxu0
      %v2060 = vpop.f32.mrb[0].mxu0
      %v2061 = vadd.f32 %v841, %v2060
      %v2062 = vpop.f32.mrb[0].mxu0
      %2063 = vmatprep.mubr.bf16.mxu0 %v1586
      %2064 = vmatmul.mubr.bf16.gmra.mrb[0].mxu0 %v1585
      %v2065 = vpop.f32.mrb[0].mxu0
      %v2066 = vadd.f32 %v846, %v2065
      %v2067 = vpop.f32.mrb[0].mxu0
      %v2068 = vpop.f32.mrb[0].mxu0
      %v2069 = vadd.f32 %v851, %v2068
      %v2070 = vpop.f32.mrb[0].mxu0
      %2071 = vmatprep.mubr.bf16.mxu0 %v1591
      %2072 = vmatmul.mubr.bf16.gmra.mrb[0].mxu0 %v1590
      %v2073 = vpop.f32.mrb[0].mxu0
      %v2074 = vadd.f32 %v856, %v2073
      %v2075 = vpop.f32.mrb[0].mxu0
      %v2076 = vpop.f32.mrb[0].mxu0
      %v2077 = vadd.f32 %v861, %v2076
      %v2078 = vpop.f32.mrb[0].mxu0
      %2079 = vmatprep.mubr.bf16.mxu0 %v1596
      %2080 = vmatmul.mubr.bf16.gmra.mrb[0].mxu0 %v1595
      %v2081 = vpop.f32.mrb[0].mxu0
      %v2082 = vadd.f32 %v866, %v2081
      %v2083 = vpop.f32.mrb[0].mxu0
      %v2084 = vpop.f32.mrb[0].mxu0
      %v2085 = vadd.f32 %v871, %v2084
      %v2086 = vpop.f32.mrb[0].mxu0
      %2087 = vmatprep.mubr.bf16.mxu0 %v1601
      %2088 = vmatmul.mubr.bf16.gmra.mrb[0].mxu0 %v1600
      %v2089 = vpop.f32.mrb[0].mxu0
      %v2090 = vadd.f32 %v876, %v2089
      %v2091 = vpop.f32.mrb[0].mxu0
      %v2092 = vpop.f32.mrb[0].mxu0
      %v2093 = vadd.f32 %v881, %v2092
      %v2094 = vpop.f32.mrb[0].mxu0
      %2095 = vmatprep.mubr.bf16.mxu0 %v1606
      %2096 = vmatmul.mubr.bf16.gmra.mrb[0].mxu0 %v1605
      %v2097 = vpop.f32.mrb[0].mxu0
      %v2098 = vadd.f32 %v886, %v2097
      %v2099 = vpop.f32.mrb[0].mxu0
      %v2100 = vpop.f32.mrb[0].mxu0
      %v2101 = vadd.f32 %v891, %v2100
      %v2102 = vpop.f32.mrb[0].mxu0
      %2103 = vmatprep.mubr.bf16.mxu0 %v1611
      %2104 = vmatmul.mubr.bf16.gmra.mrb[0].mxu0 %v1610
      %v2105 = vpop.f32.mrb[0].mxu0
      %v2106 = vadd.f32 %v896, %v2105
      %v2107 = vpop.f32.mrb[0].mxu0
      %v2108 = vpop.f32.mrb[0].mxu0
      %v2109 = vadd.f32 %v901, %v2108
      %v2110 = vpop.f32.mrb[0].mxu0
      %2111 = vmatprep.mubr.bf16.mxu0 %v1616
      %2112 = vmatmul.mubr.bf16.gmra.mrb[0].mxu0 %v1615
      %v2113 = vpop.f32.mrb[0].mxu0
      %v2114 = vadd.f32 %v906, %v2113
      %v2115 = vpop.f32.mrb[0].mxu0
      %v2116 = vpop.f32.mrb[0].mxu0
      %v2117 = vadd.f32 %v911, %v2116
      %v2118 = vpop.f32.mrb[0].mxu0
      %2119 = vmatprep.mubr.bf16.mxu0 %v1621
      %2120 = vmatmul.mubr.bf16.gmra.mrb[0].mxu0 %v1620
      %v2121 = vpop.f32.mrb[0].mxu0
      %v2122 = vadd.f32 %v916, %v2121
      %v2123 = vpop.f32.mrb[0].mxu0
      %v2124 = vpop.f32.mrb[0].mxu0
      %v2125 = vadd.f32 %v921, %v2124
      %v2126 = vpop.f32.mrb[0].mxu0
      %2127 = vmatprep.mubr.bf16.mxu0 %v1626
      %2128 = vmatmul.mubr.bf16.gmra.mrb[0].mxu0 %v1625
      %v2129 = vpop.f32.mrb[0].mxu0
      %v2130 = vadd.f32 %v926, %v2129
      %v2131 = vpop.f32.mrb[0].mxu0
      %v2132 = vpop.f32.mrb[0].mxu0
      %v2133 = vadd.f32 %v931, %v2132
      %v2134 = vpop.f32.mrb[0].mxu0
      %2135 = vmatprep.mubr.bf16.mxu0 %v1631
      %2136 = vmatmul.mubr.bf16.gmra.mrb[0].mxu0 %v1630
      %v2137 = vpop.f32.mrb[0].mxu0
      %v2138 = vadd.f32 %v936, %v2137
      %v2139 = vpop.f32.mrb[0].mxu0
      %v2140 = vpop.f32.mrb[0].mxu0
      %v2141 = vadd.f32 %v941, %v2140
      %v2142 = vpop.f32.mrb[0].mxu0
      %2143 = vmatprep.mubr.bf16.mxu0 %v1636
      %2144 = vmatmul.mubr.bf16.gmra.mrb[0].mxu0 %v1635
      %v2145 = vpop.f32.mrb[0].mxu0
      %v2146 = vadd.f32 %v946, %v2145
      %v2147 = vpop.f32.mrb[0].mxu0
      %v2148 = vpop.f32.mrb[0].mxu0
      %v2149 = vadd.f32 %v951, %v2148
      %v2150 = vpop.f32.mrb[0].mxu0
      %2151 = vmatprep.mubr.bf16.mxu0 %v1641
      %2152 = vmatmul.mubr.bf16.gmra.mrb[0].mxu0 %v1640
      %v2153 = vpop.f32.mrb[0].mxu0
      %v2154 = vadd.f32 %v956, %v2153
      %v2155 = vpop.f32.mrb[0].mxu0
      %v2156 = vpop.f32.mrb[0].mxu0
      %v2157 = vadd.f32 %v961, %v2156
      %v2158 = vpop.f32.mrb[0].mxu0
      %2159 = vmatprep.mubr.bf16.mxu0 %v1646
      %2160 = vmatmul.mubr.bf16.gmra.mrb[0].mxu0 %v1645
      %v2161 = vpop.f32.mrb[0].mxu0
      %v2162 = vadd.f32 %v966, %v2161
      %v2163 = vpop.f32.mrb[0].mxu0
      %v2164 = vpop.f32.mrb[0].mxu0
      %v2165 = vadd.f32 %v971, %v2164
      %v2166 = vpop.f32.mrb[0].mxu0
      %2167 = vmatprep.mubr.bf16.mxu0 %v1651
      %2168 = vmatmul.mubr.bf16.gmra.mrb[0].mxu0 %v1650
      %v2169 = vpop.f32.mrb[0].mxu0
      %v2170 = vadd.f32 %v976, %v2169
      %v2171 = vpop.f32.mrb[0].mxu0
      %v2172 = vpop.f32.mrb[0].mxu0
      %v2173 = vadd.f32 %v981, %v2172
      %v2174 = vpop.f32.mrb[0].mxu0
      %2175 = vdwg.mxu0
      %2176 = vmatprep.subr.bf16.mxu0 0
      %2177 = vmatpush1.bf16.msra.mxu0 %v390
      %2178 = vmatprep.subr.bf16.mxu0 0
      %2179 = vmatpush1.bf16.msra.mxu0 %v391
      %2180 = vmatprep.subr.bf16.mxu0 0
      %2181 = vmatpush1.bf16.msra.mxu0 %v392
      %2182 = vmatprep.subr.bf16.mxu0 0
      %2183 = vmatpush1.bf16.msra.mxu0 %v393
      %2184 = vmatprep.subr.bf16.mxu0 0
      %2185 = vmatpush1.bf16.msra.mxu0 %v394
      %2186 = vmatprep.subr.bf16.mxu0 0
      %2187 = vmatpush1.bf16.msra.mxu0 %v395
      %2188 = vmatprep.subr.bf16.mxu0 0
      %2189 = vmatpush1.bf16.msra.mxu0 %v396
      %2190 = vmatprep.subr.bf16.mxu0 0
      %2191 = vmatpush1.bf16.msra.mxu0 %v397
      %2192 = vmatprep.subr.bf16.mxu0 0
      %2193 = vmatpush1.bf16.msra.mxu0 %v398
      %2194 = vmatprep.subr.bf16.mxu0 0
      %2195 = vmatpush1.bf16.msra.mxu0 %v399
      %2196 = vmatprep.subr.bf16.mxu0 0
      %2197 = vmatpush1.bf16.msra.mxu0 %v400
      %2198 = vmatprep.subr.bf16.mxu0 0
      %2199 = vmatpush1.bf16.msra.mxu0 %v401
      %2200 = vmatprep.subr.bf16.mxu0 0
      %2201 = vmatpush1.bf16.msra.mxu0 %v402
      %2202 = vmatprep.subr.bf16.mxu0 0
      %2203 = vmatpush1.bf16.msra.mxu0 %v403
      %2204 = vmatprep.subr.bf16.mxu0 0
      %2205 = vmatpush1.bf16.msra.mxu0 %v404
      %2206 = vmatprep.subr.bf16.mxu0 0
      %2207 = vmatpush1.bf16.msra.mxu0 %v405
      %2208 = vmatprep.mubr.bf16.mxu0 %v1498
      %2209 = vmatmul.mubr.bf16.gmra.mrb[0].mxu0 %v1497
      %v2210 = vpop.f32.mrb[0].mxu0
      %v2211 = vadd.f32 %v1922, %v2210
      %v2212 = vpop.f32.mrb[0].mxu0
      %v2213 = vpop.f32.mrb[0].mxu0
      %v2214 = vadd.f32 %v1925, %v2213
      %v2215 = vpop.f32.mrb[0].mxu0
      %2216 = vmatprep.mubr.bf16.mxu0 %v1503
      %2217 = vmatmul.mubr.bf16.gmra.mrb[0].mxu0 %v1502
      %v2218 = vpop.f32.mrb[0].mxu0
      %v2219 = vadd.f32 %v1930, %v2218
      %v2220 = vpop.f32.mrb[0].mxu0
      %v2221 = vpop.f32.mrb[0].mxu0
      %v2222 = vadd.f32 %v1933, %v2221
      %v2223 = vpop.f32.mrb[0].mxu0
      %2224 = vmatprep.mubr.bf16.mxu0 %v1508
      %2225 = vmatmul.mubr.bf16.gmra.mrb[0].mxu0 %v1507
      %v2226 = vpop.f32.mrb[0].mxu0
      %v2227 = vadd.f32 %v1938, %v2226
      %v2228 = vpop.f32.mrb[0].mxu0
      %v2229 = vpop.f32.mrb[0].mxu0
      %v2230 = vadd.f32 %v1941, %v2229
      %v2231 = vpop.f32.mrb[0].mxu0
      %2232 = vmatprep.mubr.bf16.mxu0 %v1513
      %2233 = vmatmul.mubr.bf16.gmra.mrb[0].mxu0 %v1512
      %v2234 = vpop.f32.mrb[0].mxu0
      %v2235 = vadd.f32 %v1946, %v2234
      %v2236 = vpop.f32.mrb[0].mxu0
      %v2237 = vpop.f32.mrb[0].mxu0
      %v2238 = vadd.f32 %v1949, %v2237
      %v2239 = vpop.f32.mrb[0].mxu0
      %2240 = vmatprep.mubr.bf16.mxu0 %v1518
      %2241 = vmatmul.mubr.bf16.gmra.mrb[0].mxu0 %v1517
      %v2242 = vpop.f32.mrb[0].mxu0
      %v2243 = vadd.f32 %v1954, %v2242
      %v2244 = vpop.f32.mrb[0].mxu0
      %v2245 = vpop.f32.mrb[0].mxu0
      %v2246 = vadd.f32 %v1957, %v2245
      %v2247 = vpop.f32.mrb[0].mxu0
      %2248 = vmatprep.mubr.bf16.mxu0 %v1523
      %2249 = vmatmul.mubr.bf16.gmra.mrb[0].mxu0 %v1522
      %v2250 = vpop.f32.mrb[0].mxu0
      %v2251 = vadd.f32 %v1962, %v2250
      %v2252 = vpop.f32.mrb[0].mxu0
      %v2253 = vpop.f32.mrb[0].mxu0
      %v2254 = vadd.f32 %v1965, %v2253
      %v2255 = vpop.f32.mrb[0].mxu0
      %2256 = vmatprep.mubr.bf16.mxu0 %v1528
      %2257 = vmatmul.mubr.bf16.gmra.mrb[0].mxu0 %v1527
      %v2258 = vpop.f32.mrb[0].mxu0
      %v2259 = vadd.f32 %v1970, %v2258
      %v2260 = vpop.f32.mrb[0].mxu0
      %v2261 = vpop.f32.mrb[0].mxu0
      %v2262 = vadd.f32 %v1973, %v2261
      %v2263 = vpop.f32.mrb[0].mxu0
      %2264 = vmatprep.mubr.bf16.mxu0 %v1533
      %2265 = vmatmul.mubr.bf16.gmra.mrb[0].mxu0 %v1532
      %v2266 = vpop.f32.mrb[0].mxu0
      %v2267 = vadd.f32 %v1978, %v2266
      %v2268 = vpop.f32.mrb[0].mxu0
      %v2269 = vpop.f32.mrb[0].mxu0
      %v2270 = vadd.f32 %v1981, %v2269
      %v2271 = vpop.f32.mrb[0].mxu0
      %2272 = vmatprep.mubr.bf16.mxu0 %v1538
      %2273 = vmatmul.mubr.bf16.gmra.mrb[0].mxu0 %v1537
      %v2274 = vpop.f32.mrb[0].mxu0
      %v2275 = vadd.f32 %v1986, %v2274
      %v2276 = vpop.f32.mrb[0].mxu0
      %v2277 = vpop.f32.mrb[0].mxu0
      %v2278 = vadd.f32 %v1989, %v2277
      %v2279 = vpop.f32.mrb[0].mxu0
      %2280 = vmatprep.mubr.bf16.mxu0 %v1543
      %2281 = vmatmul.mubr.bf16.gmra.mrb[0].mxu0 %v1542
      %v2282 = vpop.f32.mrb[0].mxu0
      %v2283 = vadd.f32 %v1994, %v2282
      %v2284 = vpop.f32.mrb[0].mxu0
      %v2285 = vpop.f32.mrb[0].mxu0
      %v2286 = vadd.f32 %v1997, %v2285
      %v2287 = vpop.f32.mrb[0].mxu0
      %2288 = vmatprep.mubr.bf16.mxu0 %v1548
      %2289 = vmatmul.mubr.bf16.gmra.mrb[0].mxu0 %v1547
      %v2290 = vpop.f32.mrb[0].mxu0
      %v2291 = vadd.f32 %v2002, %v2290
      %v2292 = vpop.f32.mrb[0].mxu0
      %v2293 = vpop.f32.mrb[0].mxu0
      %v2294 = vadd.f32 %v2005, %v2293
      %v2295 = vpop.f32.mrb[0].mxu0
      %2296 = vmatprep.mubr.bf16.mxu0 %v1553
      %2297 = vmatmul.mubr.bf16.gmra.mrb[0].mxu0 %v1552
      %v2298 = vpop.f32.mrb[0].mxu0
      %v2299 = vadd.f32 %v2010, %v2298
      %v2300 = vpop.f32.mrb[0].mxu0
      %v2301 = vpop.f32.mrb[0].mxu0
      %v2302 = vadd.f32 %v2013, %v2301
      %v2303 = vpop.f32.mrb[0].mxu0
      %2304 = vmatprep.mubr.bf16.mxu0 %v1558
      %2305 = vmatmul.mubr.bf16.gmra.mrb[0].mxu0 %v1557
      %v2306 = vpop.f32.mrb[0].mxu0
      %v2307 = vadd.f32 %v2018, %v2306
      %v2308 = vpop.f32.mrb[0].mxu0
      %v2309 = vpop.f32.mrb[0].mxu0
      %v2310 = vadd.f32 %v2021, %v2309
      %v2311 = vpop.f32.mrb[0].mxu0
      %2312 = vmatprep.mubr.bf16.mxu0 %v1563
      %2313 = vmatmul.mubr.bf16.gmra.mrb[0].mxu0 %v1562
      %v2314 = vpop.f32.mrb[0].mxu0
      %v2315 = vadd.f32 %v2026, %v2314
      %v2316 = vpop.f32.mrb[0].mxu0
      %v2317 = vpop.f32.mrb[0].mxu0
      %v2318 = vadd.f32 %v2029, %v2317
      %v2319 = vpop.f32.mrb[0].mxu0
      %2320 = vmatprep.mubr.bf16.mxu0 %v1568
      %2321 = vmatmul.mubr.bf16.gmra.mrb[0].mxu0 %v1567
      %v2322 = vpop.f32.mrb[0].mxu0
      %v2323 = vadd.f32 %v2034, %v2322
      %v2324 = vpop.f32.mrb[0].mxu0
      %v2325 = vpop.f32.mrb[0].mxu0
      %v2326 = vadd.f32 %v2037, %v2325
      %v2327 = vpop.f32.mrb[0].mxu0
      %2328 = vmatprep.mubr.bf16.mxu0 %v1573
      %2329 = vmatmul.mubr.bf16.gmra.mrb[0].mxu0 %v1572
      %v2330 = vpop.f32.mrb[0].mxu0
      %v2331 = vadd.f32 %v2042, %v2330
      %v2332 = vpop.f32.mrb[0].mxu0
      %v2333 = vpop.f32.mrb[0].mxu0
      %v2334 = vadd.f32 %v2045, %v2333
      %v2335 = vpop.f32.mrb[0].mxu0
      %2336 = vmatprep.mubr.bf16.mxu0 %v1578
      %2337 = vmatmul.mubr.bf16.gmra.mrb[0].mxu0 %v1577
      %v2338 = vpop.f32.mrb[0].mxu0
      %v2339 = vadd.f32 %v2050, %v2338
      %v2340 = vpop.f32.mrb[0].mxu0
      %v2341 = vpop.f32.mrb[0].mxu0
      %v2342 = vadd.f32 %v2053, %v2341
      %v2343 = vpop.f32.mrb[0].mxu0
      %2344 = vmatprep.mubr.bf16.mxu0 %v1583
      %2345 = vmatmul.mubr.bf16.gmra.mrb[0].mxu0 %v1582
      %v2346 = vpop.f32.mrb[0].mxu0
      %v2347 = vadd.f32 %v2058, %v2346
      %v2348 = vpop.f32.mrb[0].mxu0
      %v2349 = vpop.f32.mrb[0].mxu0
      %v2350 = vadd.f32 %v2061, %v2349
      %v2351 = vpop.f32.mrb[0].mxu0
      %2352 = vmatprep.mubr.bf16.mxu0 %v1588
      %2353 = vmatmul.mubr.bf16.gmra.mrb[0].mxu0 %v1587
      %v2354 = vpop.f32.mrb[0].mxu0
      %v2355 = vadd.f32 %v2066, %v2354
      %v2356 = vpop.f32.mrb[0].mxu0
      %v2357 = vpop.f32.mrb[0].mxu0
      %v2358 = vadd.f32 %v2069, %v2357
      %v2359 = vpop.f32.mrb[0].mxu0
      %2360 = vmatprep.mubr.bf16.mxu0 %v1593
      %2361 = vmatmul.mubr.bf16.gmra.mrb[0].mxu0 %v1592
      %v2362 = vpop.f32.mrb[0].mxu0
      %v2363 = vadd.f32 %v2074, %v2362
      %v2364 = vpop.f32.mrb[0].mxu0
      %v2365 = vpop.f32.mrb[0].mxu0
      %v2366 = vadd.f32 %v2077, %v2365
      %v2367 = vpop.f32.mrb[0].mxu0
      %2368 = vmatprep.mubr.bf16.mxu0 %v1598
      %2369 = vmatmul.mubr.bf16.gmra.mrb[0].mxu0 %v1597
      %v2370 = vpop.f32.mrb[0].mxu0
      %v2371 = vadd.f32 %v2082, %v2370
      %v2372 = vpop.f32.mrb[0].mxu0
      %v2373 = vpop.f32.mrb[0].mxu0
      %v2374 = vadd.f32 %v2085, %v2373
      %v2375 = vpop.f32.mrb[0].mxu0
      %2376 = vmatprep.mubr.bf16.mxu0 %v1603
      %2377 = vmatmul.mubr.bf16.gmra.mrb[0].mxu0 %v1602
      %v2378 = vpop.f32.mrb[0].mxu0
      %v2379 = vadd.f32 %v2090, %v2378
      %v2380 = vpop.f32.mrb[0].mxu0
      %v2381 = vpop.f32.mrb[0].mxu0
      %v2382 = vadd.f32 %v2093, %v2381
      %v2383 = vpop.f32.mrb[0].mxu0
      %2384 = vmatprep.mubr.bf16.mxu0 %v1608
      %2385 = vmatmul.mubr.bf16.gmra.mrb[0].mxu0 %v1607
      %v2386 = vpop.f32.mrb[0].mxu0
      %v2387 = vadd.f32 %v2098, %v2386
      %v2388 = vpop.f32.mrb[0].mxu0
      %v2389 = vpop.f32.mrb[0].mxu0
      %v2390 = vadd.f32 %v2101, %v2389
      %v2391 = vpop.f32.mrb[0].mxu0
      %2392 = vmatprep.mubr.bf16.mxu0 %v1613
      %2393 = vmatmul.mubr.bf16.gmra.mrb[0].mxu0 %v1612
      %v2394 = vpop.f32.mrb[0].mxu0
      %v2395 = vadd.f32 %v2106, %v2394
      %v2396 = vpop.f32.mrb[0].mxu0
      %v2397 = vpop.f32.mrb[0].mxu0
      %v2398 = vadd.f32 %v2109, %v2397
      %v2399 = vpop.f32.mrb[0].mxu0
      %2400 = vmatprep.mubr.bf16.mxu0 %v1618
      %2401 = vmatmul.mubr.bf16.gmra.mrb[0].mxu0 %v1617
      %v2402 = vpop.f32.mrb[0].mxu0
      %v2403 = vadd.f32 %v2114, %v2402
      %v2404 = vpop.f32.mrb[0].mxu0
      %v2405 = vpop.f32.mrb[0].mxu0
      %v2406 = vadd.f32 %v2117, %v2405
      %v2407 = vpop.f32.mrb[0].mxu0
      %2408 = vmatprep.mubr.bf16.mxu0 %v1623
      %2409 = vmatmul.mubr.bf16.gmra.mrb[0].mxu0 %v1622
      %v2410 = vpop.f32.mrb[0].mxu0
      %v2411 = vadd.f32 %v2122, %v2410
      %v2412 = vpop.f32.mrb[0].mxu0
      %v2413 = vpop.f32.mrb[0].mxu0
      %v2414 = vadd.f32 %v2125, %v2413
      %v2415 = vpop.f32.mrb[0].mxu0
      %2416 = vmatprep.mubr.bf16.mxu0 %v1628
      %2417 = vmatmul.mubr.bf16.gmra.mrb[0].mxu0 %v1627
      %v2418 = vpop.f32.mrb[0].mxu0
      %v2419 = vadd.f32 %v2130, %v2418
      %v2420 = vpop.f32.mrb[0].mxu0
      %v2421 = vpop.f32.mrb[0].mxu0
      %v2422 = vadd.f32 %v2133, %v2421
      %v2423 = vpop.f32.mrb[0].mxu0
      %2424 = vmatprep.mubr.bf16.mxu0 %v1633
      %2425 = vmatmul.mubr.bf16.gmra.mrb[0].mxu0 %v1632
      %v2426 = vpop.f32.mrb[0].mxu0
      %v2427 = vadd.f32 %v2138, %v2426
      %v2428 = vpop.f32.mrb[0].mxu0
      %v2429 = vpop.f32.mrb[0].mxu0
      %v2430 = vadd.f32 %v2141, %v2429
      %v2431 = vpop.f32.mrb[0].mxu0
      %2432 = vmatprep.mubr.bf16.mxu0 %v1638
      %2433 = vmatmul.mubr.bf16.gmra.mrb[0].mxu0 %v1637
      %v2434 = vpop.f32.mrb[0].mxu0
      %v2435 = vadd.f32 %v2146, %v2434
      %v2436 = vpop.f32.mrb[0].mxu0
      %v2437 = vpop.f32.mrb[0].mxu0
      %v2438 = vadd.f32 %v2149, %v2437
      %v2439 = vpop.f32.mrb[0].mxu0
      %2440 = vmatprep.mubr.bf16.mxu0 %v1643
      %2441 = vmatmul.mubr.bf16.gmra.mrb[0].mxu0 %v1642
      %v2442 = vpop.f32.mrb[0].mxu0
      %v2443 = vadd.f32 %v2154, %v2442
      %v2444 = vpop.f32.mrb[0].mxu0
      %v2445 = vpop.f32.mrb[0].mxu0
      %v2446 = vadd.f32 %v2157, %v2445
      %v2447 = vpop.f32.mrb[0].mxu0
      %2448 = vmatprep.mubr.bf16.mxu0 %v1648
      %2449 = vmatmul.mubr.bf16.gmra.mrb[0].mxu0 %v1647
      %v2450 = vpop.f32.mrb[0].mxu0
      %v2451 = vadd.f32 %v2162, %v2450
      %v2452 = vpop.f32.mrb[0].mxu0
      %v2453 = vpop.f32.mrb[0].mxu0
      %v2454 = vadd.f32 %v2165, %v2453
      %v2455 = vpop.f32.mrb[0].mxu0
      %2456 = vmatprep.mubr.bf16.mxu0 %v1653
      %2457 = vmatmul.mubr.bf16.gmra.mrb[0].mxu0 %v1652
      %v2458 = vpop.f32.mrb[0].mxu0
      %v2459 = vadd.f32 %v2170, %v2458
      %v2460 = vpop.f32.mrb[0].mxu0
      %v2461 = vpop.f32.mrb[0].mxu0
      %v2462 = vadd.f32 %v2173, %v2461
      %v2463 = vpop.f32.mrb[0].mxu0
      %2464 = vdwg.mxu0
      %2465 = vmatprep.subr.bf16.mxu0 0
      %2466 = vmatpush1.bf16.msra.mxu0 %v1885
      %2467 = vmatprep.subr.bf16.mxu0 0
      %2468 = vmatpush1.bf16.msra.mxu0 0
      %2469 = vmatprep.subr.bf16.mxu0 0
      %2470 = vmatpush1.bf16.msra.mxu0 0
      %2471 = vmatprep.subr.bf16.mxu0 0
      %2472 = vmatpush1.bf16.msra.mxu0 0
      %2473 = vmatprep.subr.bf16.mxu0 0
      %2474 = vmatpush1.bf16.msra.mxu0 0
      %2475 = vmatprep.subr.bf16.mxu0 0
      %2476 = vmatpush1.bf16.msra.mxu0 0
      %2477 = vmatprep.subr.bf16.mxu0 0
      %2478 = vmatpush1.bf16.msra.mxu0 0
      %2479 = vmatprep.subr.bf16.mxu0 0
      %2480 = vmatpush1.bf16.msra.mxu0 0
      %2481 = vmatprep.subr.bf16.mxu0 0
      %2482 = vmatpush1.bf16.msra.mxu0 0
      %2483 = vmatprep.subr.bf16.mxu0 0
      %2484 = vmatpush1.bf16.msra.mxu0 0
      %2485 = vmatprep.subr.bf16.mxu0 0
      %2486 = vmatpush1.bf16.msra.mxu0 0
      %2487 = vmatprep.subr.bf16.mxu0 0
      %2488 = vmatpush1.bf16.msra.mxu0 0
      %2489 = vmatprep.subr.bf16.mxu0 0
      %2490 = vmatpush1.bf16.msra.mxu0 0
      %2491 = vmatprep.subr.bf16.mxu0 0
      %2492 = vmatpush1.bf16.msra.mxu0 0
      %2493 = vmatprep.subr.bf16.mxu0 0
      %2494 = vmatpush1.bf16.msra.mxu0 0
      %2495 = vmatprep.subr.bf16.mxu0 0
      %2496 = vmatpush1.bf16.msra.mxu0 0
      %2497 = vmatprep.mubr.bf16.mxu0 0
      %2498 = vmatmul.mubr.bf16.gmra.mrb[0].mxu0 %v1785
      %v2499 = vpop.f32.mrb[0].mxu0
      %v2500 = vadd.f32 %v2211, %v2499
      %v2501 = vpop.f32.mrb[0].mxu0
      %v2502 = vpop.f32.mrb[0].mxu0
      %v2503 = vadd.f32 %v2214, %v2502
      %v2504 = vpop.f32.mrb[0].mxu0
      %2505 = vmatprep.mubr.bf16.mxu0 0
      %2506 = vmatmul.mubr.bf16.gmra.mrb[0].mxu0 %v1788
      %v2507 = vpop.f32.mrb[0].mxu0
      %v2508 = vadd.f32 %v2219, %v2507
      %v2509 = vpop.f32.mrb[0].mxu0
      %v2510 = vpop.f32.mrb[0].mxu0
      %v2511 = vadd.f32 %v2222, %v2510
      %v2512 = vpop.f32.mrb[0].mxu0
      %2513 = vmatprep.mubr.bf16.mxu0 0
      %2514 = vmatmul.mubr.bf16.gmra.mrb[0].mxu0 %v1791
      %v2515 = vpop.f32.mrb[0].mxu0
      %v2516 = vadd.f32 %v2227, %v2515
      %v2517 = vpop.f32.mrb[0].mxu0
      %v2518 = vpop.f32.mrb[0].mxu0
      %v2519 = vadd.f32 %v2230, %v2518
      %v2520 = vpop.f32.mrb[0].mxu0
      %2521 = vmatprep.mubr.bf16.mxu0 0
      %2522 = vmatmul.mubr.bf16.gmra.mrb[0].mxu0 %v1794
      %v2523 = vpop.f32.mrb[0].mxu0
      %v2524 = vadd.f32 %v2235, %v2523
      %v2525 = vpop.f32.mrb[0].mxu0
      %v2526 = vpop.f32.mrb[0].mxu0
      %v2527 = vadd.f32 %v2238, %v2526
      %v2528 = vpop.f32.mrb[0].mxu0
      %2529 = vmatprep.mubr.bf16.mxu0 0
      %2530 = vmatmul.mubr.bf16.gmra.mrb[0].mxu0 %v1797
      %v2531 = vpop.f32.mrb[0].mxu0
      %v2532 = vadd.f32 %v2243, %v2531
      %v2533 = vpop.f32.mrb[0].mxu0
      %v2534 = vpop.f32.mrb[0].mxu0
      %v2535 = vadd.f32 %v2246, %v2534
      %v2536 = vpop.f32.mrb[0].mxu0
      %2537 = vmatprep.mubr.bf16.mxu0 0
      %2538 = vmatmul.mubr.bf16.gmra.mrb[0].mxu0 %v1800
      %v2539 = vpop.f32.mrb[0].mxu0
      %v2540 = vadd.f32 %v2251, %v2539
      %v2541 = vpop.f32.mrb[0].mxu0
      %v2542 = vpop.f32.mrb[0].mxu0
      %v2543 = vadd.f32 %v2254, %v2542
      %v2544 = vpop.f32.mrb[0].mxu0
      %2545 = vmatprep.mubr.bf16.mxu0 0
      %2546 = vmatmul.mubr.bf16.gmra.mrb[0].mxu0 %v1803
      %v2547 = vpop.f32.mrb[0].mxu0
      %v2548 = vadd.f32 %v2259, %v2547
      %v2549 = vpop.f32.mrb[0].mxu0
      %v2550 = vpop.f32.mrb[0].mxu0
      %v2551 = vadd.f32 %v2262, %v2550
      %v2552 = vpop.f32.mrb[0].mxu0
      %2553 = vmatprep.mubr.bf16.mxu0 0
      %2554 = vmatmul.mubr.bf16.gmra.mrb[0].mxu0 %v1806
      %v2555 = vpop.f32.mrb[0].mxu0
      %v2556 = vadd.f32 %v2267, %v2555
      %v2557 = vpop.f32.mrb[0].mxu0
      %v2558 = vpop.f32.mrb[0].mxu0
      %v2559 = vadd.f32 %v2270, %v2558
      %v2560 = vpop.f32.mrb[0].mxu0
      %2561 = vmatprep.mubr.bf16.mxu0 0
      %2562 = vmatmul.mubr.bf16.gmra.mrb[0].mxu0 %v1809
      %v2563 = vpop.f32.mrb[0].mxu0
      %v2564 = vadd.f32 %v2275, %v2563
      %v2565 = vpop.f32.mrb[0].mxu0
      %v2566 = vpop.f32.mrb[0].mxu0
      %v2567 = vadd.f32 %v2278, %v2566
      %v2568 = vpop.f32.mrb[0].mxu0
      %2569 = vmatprep.mubr.bf16.mxu0 0
      %2570 = vmatmul.mubr.bf16.gmra.mrb[0].mxu0 %v1812
      %v2571 = vpop.f32.mrb[0].mxu0
      %v2572 = vadd.f32 %v2283, %v2571
      %v2573 = vpop.f32.mrb[0].mxu0
      %v2574 = vpop.f32.mrb[0].mxu0
      %v2575 = vadd.f32 %v2286, %v2574
      %v2576 = vpop.f32.mrb[0].mxu0
      %2577 = vmatprep.mubr.bf16.mxu0 0
      %2578 = vmatmul.mubr.bf16.gmra.mrb[0].mxu0 %v1815
      %v2579 = vpop.f32.mrb[0].mxu0
      %v2580 = vadd.f32 %v2291, %v2579
      %v2581 = vpop.f32.mrb[0].mxu0
      %v2582 = vpop.f32.mrb[0].mxu0
      %v2583 = vadd.f32 %v2294, %v2582
      %v2584 = vpop.f32.mrb[0].mxu0
      %2585 = vmatprep.mubr.bf16.mxu0 0
      %2586 = vmatmul.mubr.bf16.gmra.mrb[0].mxu0 %v1818
      %v2587 = vpop.f32.mrb[0].mxu0
      %v2588 = vadd.f32 %v2299, %v2587
      %v2589 = vpop.f32.mrb[0].mxu0
      %v2590 = vpop.f32.mrb[0].mxu0
      %v2591 = vadd.f32 %v2302, %v2590
      %v2592 = vpop.f32.mrb[0].mxu0
      %2593 = vmatprep.mubr.bf16.mxu0 0
      %2594 = vmatmul.mubr.bf16.gmra.mrb[0].mxu0 %v1821
      %v2595 = vpop.f32.mrb[0].mxu0
      %v2596 = vadd.f32 %v2307, %v2595
      %v2597 = vpop.f32.mrb[0].mxu0
      %v2598 = vpop.f32.mrb[0].mxu0
      %v2599 = vadd.f32 %v2310, %v2598
      %v2600 = vpop.f32.mrb[0].mxu0
      %2601 = vmatprep.mubr.bf16.mxu0 0
      %2602 = vmatmul.mubr.bf16.gmra.mrb[0].mxu0 %v1824
      %v2603 = vpop.f32.mrb[0].mxu0
      %v2604 = vadd.f32 %v2315, %v2603
      %v2605 = vpop.f32.mrb[0].mxu0
      %v2606 = vpop.f32.mrb[0].mxu0
      %v2607 = vadd.f32 %v2318, %v2606
      %v2608 = vpop.f32.mrb[0].mxu0
      %2609 = vmatprep.mubr.bf16.mxu0 0
      %2610 = vmatmul.mubr.bf16.gmra.mrb[0].mxu0 %v1827
      %v2611 = vpop.f32.mrb[0].mxu0
      %v2612 = vadd.f32 %v2323, %v2611
      %v2613 = vpop.f32.mrb[0].mxu0
      %v2614 = vpop.f32.mrb[0].mxu0
      %v2615 = vadd.f32 %v2326, %v2614
      %v2616 = vpop.f32.mrb[0].mxu0
      %2617 = vmatprep.mubr.bf16.mxu0 0
      %2618 = vmatmul.mubr.bf16.gmra.mrb[0].mxu0 %v1830
      %v2619 = vpop.f32.mrb[0].mxu0
      %v2620 = vadd.f32 %v2331, %v2619
      %v2621 = vpop.f32.mrb[0].mxu0
      %v2622 = vpop.f32.mrb[0].mxu0
      %v2623 = vadd.f32 %v2334, %v2622
      %v2624 = vpop.f32.mrb[0].mxu0
      %2625 = vmatprep.mubr.bf16.mxu0 0
      %2626 = vmatmul.mubr.bf16.gmra.mrb[0].mxu0 %v1833
      %v2627 = vpop.f32.mrb[0].mxu0
      %v2628 = vadd.f32 %v2339, %v2627
      %v2629 = vpop.f32.mrb[0].mxu0
      %v2630 = vpop.f32.mrb[0].mxu0
      %v2631 = vadd.f32 %v2342, %v2630
      %v2632 = vpop.f32.mrb[0].mxu0
      %2633 = vmatprep.mubr.bf16.mxu0 0
      %2634 = vmatmul.mubr.bf16.gmra.mrb[0].mxu0 %v1836
      %v2635 = vpop.f32.mrb[0].mxu0
      %v2636 = vadd.f32 %v2347, %v2635
      %v2637 = vpop.f32.mrb[0].mxu0
      %v2638 = vpop.f32.mrb[0].mxu0
      %v2639 = vadd.f32 %v2350, %v2638
      %v2640 = vpop.f32.mrb[0].mxu0
      %2641 = vmatprep.mubr.bf16.mxu0 0
      %2642 = vmatmul.mubr.bf16.gmra.mrb[0].mxu0 %v1839
      %v2643 = vpop.f32.mrb[0].mxu0
      %v2644 = vadd.f32 %v2355, %v2643
      %v2645 = vpop.f32.mrb[0].mxu0
      %v2646 = vpop.f32.mrb[0].mxu0
      %v2647 = vadd.f32 %v2358, %v2646
      %v2648 = vpop.f32.mrb[0].mxu0
      %2649 = vmatprep.mubr.bf16.mxu0 0
      %2650 = vmatmul.mubr.bf16.gmra.mrb[0].mxu0 %v1842
      %v2651 = vpop.f32.mrb[0].mxu0
      %v2652 = vadd.f32 %v2363, %v2651
      %v2653 = vpop.f32.mrb[0].mxu0
      %v2654 = vpop.f32.mrb[0].mxu0
      %v2655 = vadd.f32 %v2366, %v2654
      %v2656 = vpop.f32.mrb[0].mxu0
      %2657 = vmatprep.mubr.bf16.mxu0 0
      %2658 = vmatmul.mubr.bf16.gmra.mrb[0].mxu0 %v1845
      %v2659 = vpop.f32.mrb[0].mxu0
      %v2660 = vadd.f32 %v2371, %v2659
      %v2661 = vpop.f32.mrb[0].mxu0
      %v2662 = vpop.f32.mrb[0].mxu0
      %v2663 = vadd.f32 %v2374, %v2662
      %v2664 = vpop.f32.mrb[0].mxu0
      %2665 = vmatprep.mubr.bf16.mxu0 0
      %2666 = vmatmul.mubr.bf16.gmra.mrb[0].mxu0 %v1848
      %v2667 = vpop.f32.mrb[0].mxu0
      %v2668 = vadd.f32 %v2379, %v2667
      %v2669 = vpop.f32.mrb[0].mxu0
      %v2670 = vpop.f32.mrb[0].mxu0
      %v2671 = vadd.f32 %v2382, %v2670
      %v2672 = vpop.f32.mrb[0].mxu0
      %2673 = vmatprep.mubr.bf16.mxu0 0
      %2674 = vmatmul.mubr.bf16.gmra.mrb[0].mxu0 %v1851
      %v2675 = vpop.f32.mrb[0].mxu0
      %v2676 = vadd.f32 %v2387, %v2675
      %v2677 = vpop.f32.mrb[0].mxu0
      %v2678 = vpop.f32.mrb[0].mxu0
      %v2679 = vadd.f32 %v2390, %v2678
      %v2680 = vpop.f32.mrb[0].mxu0
      %2681 = vmatprep.mubr.bf16.mxu0 0
      %2682 = vmatmul.mubr.bf16.gmra.mrb[0].mxu0 %v1854
      %v2683 = vpop.f32.mrb[0].mxu0
      %v2684 = vadd.f32 %v2395, %v2683
      %v2685 = vpop.f32.mrb[0].mxu0
      %v2686 = vpop.f32.mrb[0].mxu0
      %v2687 = vadd.f32 %v2398, %v2686
      %v2688 = vpop.f32.mrb[0].mxu0
      %2689 = vmatprep.mubr.bf16.mxu0 0
      %2690 = vmatmul.mubr.bf16.gmra.mrb[0].mxu0 %v1857
      %v2691 = vpop.f32.mrb[0].mxu0
      %v2692 = vadd.f32 %v2403, %v2691
      %v2693 = vpop.f32.mrb[0].mxu0
      %v2694 = vpop.f32.mrb[0].mxu0
      %v2695 = vadd.f32 %v2406, %v2694
      %v2696 = vpop.f32.mrb[0].mxu0
      %2697 = vmatprep.mubr.bf16.mxu0 0
      %2698 = vmatmul.mubr.bf16.gmra.mrb[0].mxu0 %v1860
      %v2699 = vpop.f32.mrb[0].mxu0
      %v2700 = vadd.f32 %v2411, %v2699
      %v2701 = vpop.f32.mrb[0].mxu0
      %v2702 = vpop.f32.mrb[0].mxu0
      %v2703 = vadd.f32 %v2414, %v2702
      %v2704 = vpop.f32.mrb[0].mxu0
      %2705 = vmatprep.mubr.bf16.mxu0 0
      %2706 = vmatmul.mubr.bf16.gmra.mrb[0].mxu0 %v1863
      %v2707 = vpop.f32.mrb[0].mxu0
      %v2708 = vadd.f32 %v2419, %v2707
      %v2709 = vpop.f32.mrb[0].mxu0
      %v2710 = vpop.f32.mrb[0].mxu0
      %v2711 = vadd.f32 %v2422, %v2710
      %v2712 = vpop.f32.mrb[0].mxu0
      %2713 = vmatprep.mubr.bf16.mxu0 0
      %2714 = vmatmul.mubr.bf16.gmra.mrb[0].mxu0 %v1866
      %v2715 = vpop.f32.mrb[0].mxu0
      %v2716 = vadd.f32 %v2427, %v2715
      %v2717 = vpop.f32.mrb[0].mxu0
      %v2718 = vpop.f32.mrb[0].mxu0
      %v2719 = vadd.f32 %v2430, %v2718
      %v2720 = vpop.f32.mrb[0].mxu0
      %2721 = vmatprep.mubr.bf16.mxu0 0
      %2722 = vmatmul.mubr.bf16.gmra.mrb[0].mxu0 %v1869
      %v2723 = vpop.f32.mrb[0].mxu0
      %v2724 = vadd.f32 %v2435, %v2723
      %v2725 = vpop.f32.mrb[0].mxu0
      %v2726 = vpop.f32.mrb[0].mxu0
      %v2727 = vadd.f32 %v2438, %v2726
      %v2728 = vpop.f32.mrb[0].mxu0
      %2729 = vmatprep.mubr.bf16.mxu0 0
      %2730 = vmatmul.mubr.bf16.gmra.mrb[0].mxu0 %v1872
      %v2731 = vpop.f32.mrb[0].mxu0
      %v2732 = vadd.f32 %v2443, %v2731
      %v2733 = vpop.f32.mrb[0].mxu0
      %v2734 = vpop.f32.mrb[0].mxu0
      %v2735 = vadd.f32 %v2446, %v2734
      %v2736 = vpop.f32.mrb[0].mxu0
      %2737 = vmatprep.mubr.bf16.mxu0 0
      %2738 = vmatmul.mubr.bf16.gmra.mrb[0].mxu0 %v1875
      %v2739 = vpop.f32.mrb[0].mxu0
      %v2740 = vadd.f32 %v2451, %v2739
      %v2741 = vpop.f32.mrb[0].mxu0
      %v2742 = vpop.f32.mrb[0].mxu0
      %v2743 = vadd.f32 %v2454, %v2742
      %v2744 = vpop.f32.mrb[0].mxu0
      %2745 = vmatprep.mubr.bf16.mxu0 0
      %2746 = vmatmul.mubr.bf16.gmra.mrb[0].mxu0 %v1878
      %v2747 = vpop.f32.mrb[0].mxu0
      %v2748 = vadd.f32 %v2459, %v2747
      %v2749 = vpop.f32.mrb[0].mxu0
      %v2750 = vpop.f32.mrb[0].mxu0
      %v2751 = vadd.f32 %v2462, %v2750
      %v2752 = vpop.f32.mrb[0].mxu0
      %2753 = vdwg.mxu0
      %v2754 = vmax.f32 %v2500, 0.0
      %v2755 = vmax.f32 %v2503, 0.0
      %v2756 = vmax.f32 %v2508, 0.0
      %v2757 = vmax.f32 %v2511, 0.0
      %v2758 = vmax.f32 %v2516, 0.0
      %v2759 = vmax.f32 %v2519, 0.0
      %v2760 = vmax.f32 %v2524, 0.0
      %v2761 = vmax.f32 %v2527, 0.0
      %v2762 = vmax.f32 %v2532, 0.0
      %v2763 = vmax.f32 %v2535, 0.0
      %v2764 = vmax.f32 %v2540, 0.0
      %v2765 = vmax.f32 %v2543, 0.0
      %v2766 = vmax.f32 %v2548, 0.0
      %v2767 = vmax.f32 %v2551, 0.0
      %v2768 = vmax.f32 %v2556, 0.0
      %v2769 = vmax.f32 %v2559, 0.0
      %v2770 = vmax.f32 %v2564, 0.0
      %v2771 = vmax.f32 %v2567, 0.0
      %v2772 = vmax.f32 %v2572, 0.0
      %v2773 = vmax.f32 %v2575, 0.0
      %v2774 = vmax.f32 %v2580, 0.0
      %v2775 = vmax.f32 %v2583, 0.0
      %v2776 = vmax.f32 %v2588, 0.0
      %v2777 = vmax.f32 %v2591, 0.0
      %v2778 = vmax.f32 %v2596, 0.0
      %v2779 = vmax.f32 %v2599, 0.0
      %v2780 = vmax.f32 %v2604, 0.0
      %v2781 = vmax.f32 %v2607, 0.0
      %v2782 = vmax.f32 %v2612, 0.0
      %v2783 = vmax.f32 %v2615, 0.0
      %v2784 = vmax.f32 %v2620, 0.0
      %v2785 = vmax.f32 %v2623, 0.0
      %v2786 = vmax.f32 %v2628, 0.0
      %v2787 = vmax.f32 %v2631, 0.0
      %v2788 = vmax.f32 %v2636, 0.0
      %v2789 = vmax.f32 %v2639, 0.0
      %v2790 = vmax.f32 %v2644, 0.0
      %v2791 = vmax.f32 %v2647, 0.0
      %v2792 = vmax.f32 %v2652, 0.0
      %v2793 = vmax.f32 %v2655, 0.0
      %v2794 = vmax.f32 %v2660, 0.0
      %v2795 = vmax.f32 %v2663, 0.0
      %v2796 = vmax.f32 %v2668, 0.0
      %v2797 = vmax.f32 %v2671, 0.0
      %v2798 = vmax.f32 %v2676, 0.0
      %v2799 = vmax.f32 %v2679, 0.0
      %v2800 = vmax.f32 %v2684, 0.0
      %v2801 = vmax.f32 %v2687, 0.0
      %v2802 = vmax.f32 %v2692, 0.0
      %v2803 = vmax.f32 %v2695, 0.0
      %v2804 = vmax.f32 %v2700, 0.0
      %v2805 = vmax.f32 %v2703, 0.0
      %v2806 = vmax.f32 %v2708, 0.0
      %v2807 = vmax.f32 %v2711, 0.0
      %v2808 = vmax.f32 %v2716, 0.0
      %v2809 = vmax.f32 %v2719, 0.0
      %v2810 = vmax.f32 %v2724, 0.0
      %v2811 = vmax.f32 %v2727, 0.0
      %v2812 = vmax.f32 %v2732, 0.0
      %v2813 = vmax.f32 %v2735, 0.0
      %v2814 = vmax.f32 %v2740, 0.0
      %v2815 = vmax.f32 %v2743, 0.0
      %v2816 = vmax.f32 %v2748, 0.0
      %v2817 = vmax.f32 %v2751, 0.0
      %v2818 = vpack.c.bf16 %v2755, %v2754
      %v2819 = vpack.c.bf16 %v2757, %v2756
      %v2820 = vpack.c.bf16 %v2759, %v2758
      %v2821 = vpack.c.bf16 %v2761, %v2760
      %v2822 = vpack.c.bf16 %v2763, %v2762
      %v2823 = vpack.c.bf16 %v2765, %v2764
      %v2824 = vpack.c.bf16 %v2767, %v2766
      %v2825 = vpack.c.bf16 %v2769, %v2768
      %v2826 = vpack.c.bf16 %v2771, %v2770
      %v2827 = vpack.c.bf16 %v2773, %v2772
      %v2828 = vpack.c.bf16 %v2775, %v2774
      %v2829 = vpack.c.bf16 %v2777, %v2776
      %v2830 = vpack.c.bf16 %v2779, %v2778
      %v2831 = vpack.c.bf16 %v2781, %v2780
      %v2832 = vpack.c.bf16 %v2783, %v2782
      %v2833 = vpack.c.bf16 %v2785, %v2784
      %v2834 = vpack.c.bf16 %v2787, %v2786
      %v2835 = vpack.c.bf16 %v2789, %v2788
      %v2836 = vpack.c.bf16 %v2791, %v2790
      %v2837 = vpack.c.bf16 %v2793, %v2792
      %v2838 = vpack.c.bf16 %v2795, %v2794
      %v2839 = vpack.c.bf16 %v2797, %v2796
      %v2840 = vpack.c.bf16 %v2799, %v2798
      %v2841 = vpack.c.bf16 %v2801, %v2800
      %v2842 = vpack.c.bf16 %v2803, %v2802
      %v2843 = vpack.c.bf16 %v2805, %v2804
      %v2844 = vpack.c.bf16 %v2807, %v2806
      %v2845 = vpack.c.bf16 %v2809, %v2808
      %v2846 = vpack.c.bf16 %v2811, %v2810
      %v2847 = vpack.c.bf16 %v2813, %v2812
      %v2848 = vpack.c.bf16 %v2815, %v2814
      %v2849 = vpack.c.bf16 %v2817, %v2816
      %v2850 = vld [vmem:[%s3] sm:$0xff]
      %v2851 = vld [vmem:[%s3 + $0x8] sm:$0xff]
      %v2852 = vld [vmem:[%s3 + $0x10] sm:$0xff]
      %v2853 = vld [vmem:[%s3 + $0x18] sm:$0xff]
      %v2854 = vld [vmem:[%s3 + $0x20] sm:$0xff]
      %v2855 = vld [vmem:[%s3 + $0x28] sm:$0xff]
      %v2856 = vld [vmem:[%s3 + $0x30] sm:$0xff]
      %v2857 = vld [vmem:[%s3 + $0x38] sm:$0xff]
      %v2858 = vld [vmem:[%s3 + $0x40] sm:$0xff]
      %v2859 = vld [vmem:[%s3 + $0x48] sm:$0xff]
      %v2860 = vld [vmem:[%s3 + $0x50] sm:$0xff]
      %v2861 = vld [vmem:[%s3 + $0x58] sm:$0xff]
      %v2862 = vld [vmem:[%s3 + $0x60] sm:$0xff]
      %v2863 = vld [vmem:[%s3 + $0x68] sm:$0xff]
      %v2864 = vld [vmem:[%s3 + $0x70] sm:$0xff]
      %v2865 = vld [vmem:[%s3 + $0x78] sm:$0xff]
      %v2866 = vld [vmem:[%s3 + $0x80] sm:$0xff]
      %v2867 = vld [vmem:[%s3 + $0x88] sm:$0xff]
      %v2868 = vld [vmem:[%s3 + $0x90] sm:$0xff]
      %v2869 = vld [vmem:[%s3 + $0x98] sm:$0xff]
      %v2870 = vld [vmem:[%s3 + $0xa0] sm:$0xff]
      %v2871 = vld [vmem:[%s3 + $0xa8] sm:$0xff]
      %v2872 = vld [vmem:[%s3 + $0xb0] sm:$0xff]
      %v2873 = vld [vmem:[%s3 + $0xb8] sm:$0xff]
      %v2874 = vld [vmem:[%s3 + $0xc0] sm:$0xff]
      %v2875 = vld [vmem:[%s3 + $0xc8] sm:$0xff]
      %v2876 = vld [vmem:[%s3 + $0xd0] sm:$0xff]
      %v2877 = vld [vmem:[%s3 + $0xd8] sm:$0xff]
      %v2878 = vld [vmem:[%s3 + $0xe0] sm:$0xff]
      %v2879 = vld [vmem:[%s3 + $0xe8] sm:$0xff]
      %v2880 = vld [vmem:[%s3 + $0xf0] sm:$0xff]
      %v2881 = vld [vmem:[%s3 + $0xf8] sm:$0xff]
      %v2882 = vld [vmem:[%s3 + $0x100] sm:$0xff]
      %v2883 = vld [vmem:[%s3 + $0x108] sm:$0xff]
      %v2884 = vld [vmem:[%s3 + $0x110] sm:$0xff]
      %v2885 = vld [vmem:[%s3 + $0x118] sm:$0xff]
      %v2886 = vld [vmem:[%s3 + $0x120] sm:$0xff]
      %v2887 = vld [vmem:[%s3 + $0x128] sm:$0xff]
      %v2888 = vld [vmem:[%s3 + $0x130] sm:$0xff]
      %v2889 = vld [vmem:[%s3 + $0x138] sm:$0xff]
      %v2890 = vld [vmem:[%s3 + $0x140] sm:$0xff]
      %v2891 = vld [vmem:[%s3 + $0x148] sm:$0xff]
      %v2892 = vld [vmem:[%s3 + $0x150] sm:$0xff]
      %v2893 = vld [vmem:[%s3 + $0x158] sm:$0xff]
      %v2894 = vld [vmem:[%s3 + $0x160] sm:$0xff]
      %v2895 = vld [vmem:[%s3 + $0x168] sm:$0xff]
      %v2896 = vld [vmem:[%s3 + $0x170] sm:$0xff]
      %v2897 = vld [vmem:[%s3 + $0x178] sm:$0xff]
      %v2898 = vld [vmem:[%s3 + $0x180] sm:$0xff]
      %v2899 = vld [vmem:[%s3 + $0x188] sm:$0xff]
      %v2900 = vld [vmem:[%s3 + $0x190] sm:$0xff]
      %v2901 = vld [vmem:[%s3 + $0x198] sm:$0xff]
      %v2902 = vld [vmem:[%s3 + $0x1a0] sm:$0xff]
      %v2903 = vld [vmem:[%s3 + $0x1a8] sm:$0xff]
      %v2904 = vld [vmem:[%s3 + $0x1b0] sm:$0xff]
      %v2905 = vld [vmem:[%s3 + $0x1b8] sm:$0xff]
      %v2906 = vld [vmem:[%s3 + $0x1c0] sm:$0xff]
      %v2907 = vld [vmem:[%s3 + $0x1c8] sm:$0xff]
      %v2908 = vld [vmem:[%s3 + $0x1d0] sm:$0xff]
      %v2909 = vld [vmem:[%s3 + $0x1d8] sm:$0xff]
      %v2910 = vld [vmem:[%s3 + $0x1e0] sm:$0xff]
      %v2911 = vld [vmem:[%s3 + $0x1e8] sm:$0xff]
      %v2912 = vld [vmem:[%s3 + $0x1f0] sm:$0xff]
      %v2913 = vld [vmem:[%s3 + $0x1f8] sm:$0xff]
      %v2914 = vld [vmem:[%s3 + $0x200] sm:$0xff]
      %v2915 = vld [vmem:[%s3 + $0x208] sm:$0xff]
      %v2916 = vld [vmem:[%s3 + $0x210] sm:$0xff]
      %v2917 = vld [vmem:[%s3 + $0x218] sm:$0xff]
      %v2918 = vld [vmem:[%s3 + $0x220] sm:$0xff]
      %v2919 = vld [vmem:[%s3 + $0x228] sm:$0xff]
      %v2920 = vld [vmem:[%s3 + $0x230] sm:$0xff]
      %v2921 = vld [vmem:[%s3 + $0x238] sm:$0xff]
      %v2922 = vld [vmem:[%s3 + $0x240] sm:$0xff]
      %v2923 = vld [vmem:[%s3 + $0x248] sm:$0xff]
      %v2924 = vld [vmem:[%s3 + $0x250] sm:$0xff]
      %v2925 = vld [vmem:[%s3 + $0x258] sm:$0xff]
      %v2926 = vld [vmem:[%s3 + $0x260] sm:$0xff]
      %v2927 = vld [vmem:[%s3 + $0x268] sm:$0xff]
      %v2928 = vld [vmem:[%s3 + $0x270] sm:$0xff]
      %v2929 = vld [vmem:[%s3 + $0x278] sm:$0xff]
      %v2930 = vld [vmem:[%s3 + $0x280] sm:$0xff]
      %v2931 = vld [vmem:[%s3 + $0x288] sm:$0xff]
      %v2932 = vld [vmem:[%s3 + $0x290] sm:$0xff]
      %v2933 = vld [vmem:[%s3 + $0x298] sm:$0xff]
      %v2934 = vld [vmem:[%s3 + $0x2a0] sm:$0xff]
      %v2935 = vld [vmem:[%s3 + $0x2a8] sm:$0xff]
      %v2936 = vld [vmem:[%s3 + $0x2b0] sm:$0xff]
      %v2937 = vld [vmem:[%s3 + $0x2b8] sm:$0xff]
      %v2938 = vld [vmem:[%s3 + $0x2c0] sm:$0xff]
      %v2939 = vld [vmem:[%s3 + $0x2c8] sm:$0xff]
      %v2940 = vld [vmem:[%s3 + $0x2d0] sm:$0xff]
      %v2941 = vld [vmem:[%s3 + $0x2d8] sm:$0xff]
      %v2942 = vld [vmem:[%s3 + $0x2e0] sm:$0xff]
      %v2943 = vld [vmem:[%s3 + $0x2e8] sm:$0xff]
      %v2944 = vld [vmem:[%s3 + $0x2f0] sm:$0xff]
      %v2945 = vld [vmem:[%s3 + $0x2f8] sm:$0xff]
      %v2946 = vld [vmem:[%s3 + $0x300] sm:$0xff]
      %v2947 = vld [vmem:[%s3 + $0x308] sm:$0xff]
      %v2948 = vld [vmem:[%s3 + $0x310] sm:$0xff]
      %v2949 = vld [vmem:[%s3 + $0x318] sm:$0xff]
      %v2950 = vld [vmem:[%s3 + $0x320] sm:$0xff]
      %v2951 = vld [vmem:[%s3 + $0x328] sm:$0xff]
      %v2952 = vld [vmem:[%s3 + $0x330] sm:$0xff]
      %v2953 = vld [vmem:[%s3 + $0x338] sm:$0xff]
      %v2954 = vld [vmem:[%s3 + $0x340] sm:$0xff]
      %v2955 = vld [vmem:[%s3 + $0x348] sm:$0xff]
      %v2956 = vld [vmem:[%s3 + $0x350] sm:$0xff]
      %v2957 = vld [vmem:[%s3 + $0x358] sm:$0xff]
      %v2958 = vld [vmem:[%s3 + $0x360] sm:$0xff]
      %v2959 = vld [vmem:[%s3 + $0x368] sm:$0xff]
      %v2960 = vld [vmem:[%s3 + $0x370] sm:$0xff]
      %v2961 = vld [vmem:[%s3 + $0x378] sm:$0xff]
      %v2962 = vld [vmem:[%s3 + $0x380] sm:$0xff]
      %v2963 = vld [vmem:[%s3 + $0x388] sm:$0xff]
      %v2964 = vld [vmem:[%s3 + $0x390] sm:$0xff]
      %v2965 = vld [vmem:[%s3 + $0x398] sm:$0xff]
      %v2966 = vld [vmem:[%s3 + $0x3a0] sm:$0xff]
      %v2967 = vld [vmem:[%s3 + $0x3a8] sm:$0xff]
      %v2968 = vld [vmem:[%s3 + $0x3b0] sm:$0xff]
      %v2969 = vld [vmem:[%s3 + $0x3b8] sm:$0xff]
      %v2970 = vld [vmem:[%s3 + $0x3c0] sm:$0xff]
      %v2971 = vld [vmem:[%s3 + $0x3c8] sm:$0xff]
      %v2972 = vld [vmem:[%s3 + $0x3d0] sm:$0xff]
      %v2973 = vld [vmem:[%s3 + $0x3d8] sm:$0xff]
      %v2974 = vld [vmem:[%s3 + $0x3e0] sm:$0xff]
      %v2975 = vld [vmem:[%s3 + $0x3e8] sm:$0xff]
      %v2976 = vld [vmem:[%s3 + $0x3f0] sm:$0xff]
      %v2977 = vld [vmem:[%s3 + $0x3f8] sm:$0xff]
      %v2978 = vld [vmem:[%s4] sm:$0xff]
      %v2979 = vld [vmem:[%s4 + $0x8] sm:$0xff]
      %v2980 = vld [vmem:[%s4 + $0x10] sm:$0xff]
      %v2981 = vld [vmem:[%s4 + $0x18] sm:$0xff]
      %v2982 = vld [vmem:[%s4 + $0x20] sm:$0xff]
      %v2983 = vld [vmem:[%s4 + $0x28] sm:$0xff]
      %v2984 = vld [vmem:[%s4 + $0x30] sm:$0xff]
      %v2985 = vld [vmem:[%s4 + $0x38] sm:$0xff]
      %v2986 = vld [vmem:[%s4 + $0x40] sm:$0xff]
      %v2987 = vld [vmem:[%s4 + $0x48] sm:$0xff]
      %v2988 = vld [vmem:[%s4 + $0x50] sm:$0xff]
      %v2989 = vld [vmem:[%s4 + $0x58] sm:$0xff]
      %v2990 = vld [vmem:[%s4 + $0x60] sm:$0xff]
      %v2991 = vld [vmem:[%s4 + $0x68] sm:$0xff]
      %v2992 = vld [vmem:[%s4 + $0x70] sm:$0xff]
      %v2993 = vld [vmem:[%s4 + $0x78] sm:$0xff]
      %v2994 = vld [vmem:[%s4 + $0x80] sm:$0xff]
      %v2995 = vld [vmem:[%s4 + $0x88] sm:$0xff]
      %v2996 = vld [vmem:[%s4 + $0x90] sm:$0xff]
      %v2997 = vld [vmem:[%s4 + $0x98] sm:$0xff]
      %v2998 = vld [vmem:[%s4 + $0xa0] sm:$0xff]
      %v2999 = vld [vmem:[%s4 + $0xa8] sm:$0xff]
      %v3000 = vld [vmem:[%s4 + $0xb0] sm:$0xff]
      %v3001 = vld [vmem:[%s4 + $0xb8] sm:$0xff]
      %v3002 = vld [vmem:[%s4 + $0xc0] sm:$0xff]
      %v3003 = vld [vmem:[%s4 + $0xc8] sm:$0xff]
      %v3004 = vld [vmem:[%s4 + $0xd0] sm:$0xff]
      %v3005 = vld [vmem:[%s4 + $0xd8] sm:$0xff]
      %v3006 = vld [vmem:[%s4 + $0xe0] sm:$0xff]
      %v3007 = vld [vmem:[%s4 + $0xe8] sm:$0xff]
      %v3008 = vld [vmem:[%s4 + $0xf0] sm:$0xff]
      %v3009 = vld [vmem:[%s4 + $0xf8] sm:$0xff]
      %v3010 = vld [vmem:[%s4 + $0x100] sm:$0xff]
      %v3011 = vld [vmem:[%s4 + $0x108] sm:$0xff]
      %v3012 = vld [vmem:[%s4 + $0x110] sm:$0xff]
      %v3013 = vld [vmem:[%s4 + $0x118] sm:$0xff]
      %v3014 = vld [vmem:[%s4 + $0x120] sm:$0xff]
      %v3015 = vld [vmem:[%s4 + $0x128] sm:$0xff]
      %v3016 = vld [vmem:[%s4 + $0x130] sm:$0xff]
      %v3017 = vld [vmem:[%s4 + $0x138] sm:$0xff]
      %v3018 = vld [vmem:[%s4 + $0x140] sm:$0xff]
      %v3019 = vld [vmem:[%s4 + $0x148] sm:$0xff]
      %v3020 = vld [vmem:[%s4 + $0x150] sm:$0xff]
      %v3021 = vld [vmem:[%s4 + $0x158] sm:$0xff]
      %v3022 = vld [vmem:[%s4 + $0x160] sm:$0xff]
      %v3023 = vld [vmem:[%s4 + $0x168] sm:$0xff]
      %v3024 = vld [vmem:[%s4 + $0x170] sm:$0xff]
      %v3025 = vld [vmem:[%s4 + $0x178] sm:$0xff]
      %v3026 = vld [vmem:[%s4 + $0x180] sm:$0xff]
      %v3027 = vld [vmem:[%s4 + $0x188] sm:$0xff]
      %v3028 = vld [vmem:[%s4 + $0x190] sm:$0xff]
      %v3029 = vld [vmem:[%s4 + $0x198] sm:$0xff]
      %v3030 = vld [vmem:[%s4 + $0x1a0] sm:$0xff]
      %v3031 = vld [vmem:[%s4 + $0x1a8] sm:$0xff]
      %v3032 = vld [vmem:[%s4 + $0x1b0] sm:$0xff]
      %v3033 = vld [vmem:[%s4 + $0x1b8] sm:$0xff]
      %v3034 = vld [vmem:[%s4 + $0x1c0] sm:$0xff]
      %v3035 = vld [vmem:[%s4 + $0x1c8] sm:$0xff]
      %v3036 = vld [vmem:[%s4 + $0x1d0] sm:$0xff]
      %v3037 = vld [vmem:[%s4 + $0x1d8] sm:$0xff]
      %v3038 = vld [vmem:[%s4 + $0x1e0] sm:$0xff]
      %v3039 = vld [vmem:[%s4 + $0x1e8] sm:$0xff]
      %v3040 = vld [vmem:[%s4 + $0x1f0] sm:$0xff]
      %v3041 = vld [vmem:[%s4 + $0x1f8] sm:$0xff]
      %3043 = vset.pattern.permute.xlu0 0
      %3044 = vperm.xlu0 %3043, %v2978
      %v3045 = vpop.permute.xlu0 %3044
      %3048 = vset.pattern.permute.xlu0 0
      %3049 = vperm.xlu0 %3048, %v2979
      %v3050 = vpop.permute.xlu0 %3049
      %3053 = vset.pattern.permute.xlu0 0
      %3054 = vperm.xlu0 %3053, %v2980
      %v3055 = vpop.permute.xlu0 %3054
      %3058 = vset.pattern.permute.xlu0 0
      %3059 = vperm.xlu0 %3058, %v2981
      %v3060 = vpop.permute.xlu0 %3059
      %3063 = vset.pattern.permute.xlu0 0
      %3064 = vperm.xlu0 %3063, %v2982
      %v3065 = vpop.permute.xlu0 %3064
      %3068 = vset.pattern.permute.xlu0 0
      %3069 = vperm.xlu0 %3068, %v2983
      %v3070 = vpop.permute.xlu0 %3069
      %3073 = vset.pattern.permute.xlu0 0
      %3074 = vperm.xlu0 %3073, %v2984
      %v3075 = vpop.permute.xlu0 %3074
      %3078 = vset.pattern.permute.xlu0 0
      %3079 = vperm.xlu0 %3078, %v2985
      %v3080 = vpop.permute.xlu0 %3079
      %3083 = vset.pattern.permute.xlu0 0
      %3084 = vperm.xlu0 %3083, %v2986
      %v3085 = vpop.permute.xlu0 %3084
      %3088 = vset.pattern.permute.xlu0 0
      %3089 = vperm.xlu0 %3088, %v2987
      %v3090 = vpop.permute.xlu0 %3089
      %3093 = vset.pattern.permute.xlu0 0
      %3094 = vperm.xlu0 %3093, %v2988
      %v3095 = vpop.permute.xlu0 %3094
      %3098 = vset.pattern.permute.xlu0 0
      %3099 = vperm.xlu0 %3098, %v2989
      %v3100 = vpop.permute.xlu0 %3099
      %3103 = vset.pattern.permute.xlu0 0
      %3104 = vperm.xlu0 %3103, %v2990
      %v3105 = vpop.permute.xlu0 %3104
      %3108 = vset.pattern.permute.xlu0 0
      %3109 = vperm.xlu0 %3108, %v2991
      %v3110 = vpop.permute.xlu0 %3109
      %3113 = vset.pattern.permute.xlu0 0
      %3114 = vperm.xlu0 %3113, %v2992
      %v3115 = vpop.permute.xlu0 %3114
      %3118 = vset.pattern.permute.xlu0 0
      %3119 = vperm.xlu0 %3118, %v2993
      %v3120 = vpop.permute.xlu0 %3119
      %3123 = vset.pattern.permute.xlu0 0
      %3124 = vperm.xlu0 %3123, %v2994
      %v3125 = vpop.permute.xlu0 %3124
      %3128 = vset.pattern.permute.xlu0 0
      %3129 = vperm.xlu0 %3128, %v2995
      %v3130 = vpop.permute.xlu0 %3129
      %3133 = vset.pattern.permute.xlu0 0
      %3134 = vperm.xlu0 %3133, %v2996
      %v3135 = vpop.permute.xlu0 %3134
      %3138 = vset.pattern.permute.xlu0 0
      %3139 = vperm.xlu0 %3138, %v2997
      %v3140 = vpop.permute.xlu0 %3139
      %3143 = vset.pattern.permute.xlu0 0
      %3144 = vperm.xlu0 %3143, %v2998
      %v3145 = vpop.permute.xlu0 %3144
      %3148 = vset.pattern.permute.xlu0 0
      %3149 = vperm.xlu0 %3148, %v2999
      %v3150 = vpop.permute.xlu0 %3149
      %3153 = vset.pattern.permute.xlu0 0
      %3154 = vperm.xlu0 %3153, %v3000
      %v3155 = vpop.permute.xlu0 %3154
      %3158 = vset.pattern.permute.xlu0 0
      %3159 = vperm.xlu0 %3158, %v3001
      %v3160 = vpop.permute.xlu0 %3159
      %3163 = vset.pattern.permute.xlu0 0
      %3164 = vperm.xlu0 %3163, %v3002
      %v3165 = vpop.permute.xlu0 %3164
      %3168 = vset.pattern.permute.xlu0 0
      %3169 = vperm.xlu0 %3168, %v3003
      %v3170 = vpop.permute.xlu0 %3169
      %3173 = vset.pattern.permute.xlu0 0
      %3174 = vperm.xlu0 %3173, %v3004
      %v3175 = vpop.permute.xlu0 %3174
      %3178 = vset.pattern.permute.xlu0 0
      %3179 = vperm.xlu0 %3178, %v3005
      %v3180 = vpop.permute.xlu0 %3179
      %3183 = vset.pattern.permute.xlu0 0
      %3184 = vperm.xlu0 %3183, %v3006
      %v3185 = vpop.permute.xlu0 %3184
      %3188 = vset.pattern.permute.xlu0 0
      %3189 = vperm.xlu0 %3188, %v3007
      %v3190 = vpop.permute.xlu0 %3189
      %3193 = vset.pattern.permute.xlu0 0
      %3194 = vperm.xlu0 %3193, %v3008
      %v3195 = vpop.permute.xlu0 %3194
      %3198 = vset.pattern.permute.xlu0 0
      %3199 = vperm.xlu0 %3198, %v3009
      %v3200 = vpop.permute.xlu0 %3199
      %3203 = vset.pattern.permute.xlu0 0
      %3204 = vperm.xlu0 %3203, %v3010
      %v3205 = vpop.permute.xlu0 %3204
      %3208 = vset.pattern.permute.xlu0 0
      %3209 = vperm.xlu0 %3208, %v3011
      %v3210 = vpop.permute.xlu0 %3209
      %3213 = vset.pattern.permute.xlu0 0
      %3214 = vperm.xlu0 %3213, %v3012
      %v3215 = vpop.permute.xlu0 %3214
      %3218 = vset.pattern.permute.xlu0 0
      %3219 = vperm.xlu0 %3218, %v3013
      %v3220 = vpop.permute.xlu0 %3219
      %3223 = vset.pattern.permute.xlu0 0
      %3224 = vperm.xlu0 %3223, %v3014
      %v3225 = vpop.permute.xlu0 %3224
      %3228 = vset.pattern.permute.xlu0 0
      %3229 = vperm.xlu0 %3228, %v3015
      %v3230 = vpop.permute.xlu0 %3229
      %3233 = vset.pattern.permute.xlu0 0
      %3234 = vperm.xlu0 %3233, %v3016
      %v3235 = vpop.permute.xlu0 %3234
      %3238 = vset.pattern.permute.xlu0 0
      %3239 = vperm.xlu0 %3238, %v3017
      %v3240 = vpop.permute.xlu0 %3239
      %3243 = vset.pattern.permute.xlu0 0
      %3244 = vperm.xlu0 %3243, %v3018
      %v3245 = vpop.permute.xlu0 %3244
      %3248 = vset.pattern.permute.xlu0 0
      %3249 = vperm.xlu0 %3248, %v3019
      %v3250 = vpop.permute.xlu0 %3249
      %3253 = vset.pattern.permute.xlu0 0
      %3254 = vperm.xlu0 %3253, %v3020
      %v3255 = vpop.permute.xlu0 %3254
      %3258 = vset.pattern.permute.xlu0 0
      %3259 = vperm.xlu0 %3258, %v3021
      %v3260 = vpop.permute.xlu0 %3259
      %3263 = vset.pattern.permute.xlu0 0
      %3264 = vperm.xlu0 %3263, %v3022
      %v3265 = vpop.permute.xlu0 %3264
      %3268 = vset.pattern.permute.xlu0 0
      %3269 = vperm.xlu0 %3268, %v3023
      %v3270 = vpop.permute.xlu0 %3269
      %3273 = vset.pattern.permute.xlu0 0
      %3274 = vperm.xlu0 %3273, %v3024
      %v3275 = vpop.permute.xlu0 %3274
      %3278 = vset.pattern.permute.xlu0 0
      %3279 = vperm.xlu0 %3278, %v3025
      %v3280 = vpop.permute.xlu0 %3279
      %3283 = vset.pattern.permute.xlu0 0
      %3284 = vperm.xlu0 %3283, %v3026
      %v3285 = vpop.permute.xlu0 %3284
      %3288 = vset.pattern.permute.xlu0 0
      %3289 = vperm.xlu0 %3288, %v3027
      %v3290 = vpop.permute.xlu0 %3289
      %3293 = vset.pattern.permute.xlu0 0
      %3294 = vperm.xlu0 %3293, %v3028
      %v3295 = vpop.permute.xlu0 %3294
      %3298 = vset.pattern.permute.xlu0 0
      %3299 = vperm.xlu0 %3298, %v3029
      %v3300 = vpop.permute.xlu0 %3299
      %3303 = vset.pattern.permute.xlu0 0
      %3304 = vperm.xlu0 %3303, %v3030
      %v3305 = vpop.permute.xlu0 %3304
      %3308 = vset.pattern.permute.xlu0 0
      %3309 = vperm.xlu0 %3308, %v3031
      %v3310 = vpop.permute.xlu0 %3309
      %3313 = vset.pattern.permute.xlu0 0
      %3314 = vperm.xlu0 %3313, %v3032
      %v3315 = vpop.permute.xlu0 %3314
      %3318 = vset.pattern.permute.xlu0 0
      %3319 = vperm.xlu0 %3318, %v3033
      %v3320 = vpop.permute.xlu0 %3319
      %3323 = vset.pattern.permute.xlu0 0
      %3324 = vperm.xlu0 %3323, %v3034
      %v3325 = vpop.permute.xlu0 %3324
      %3328 = vset.pattern.permute.xlu0 0
      %3329 = vperm.xlu0 %3328, %v3035
      %v3330 = vpop.permute.xlu0 %3329
      %3333 = vset.pattern.permute.xlu0 0
      %3334 = vperm.xlu0 %3333, %v3036
      %v3335 = vpop.permute.xlu0 %3334
      %3338 = vset.pattern.permute.xlu0 0
      %3339 = vperm.xlu0 %3338, %v3037
      %v3340 = vpop.permute.xlu0 %3339
      %3343 = vset.pattern.permute.xlu0 0
      %3344 = vperm.xlu0 %3343, %v3038
      %v3345 = vpop.permute.xlu0 %3344
      %3348 = vset.pattern.permute.xlu0 0
      %3349 = vperm.xlu0 %3348, %v3039
      %v3350 = vpop.permute.xlu0 %3349
      %3353 = vset.pattern.permute.xlu0 0
      %3354 = vperm.xlu0 %3353, %v3040
      %v3355 = vpop.permute.xlu0 %3354
      %3358 = vset.pattern.permute.xlu0 0
      %3359 = vperm.xlu0 %3358, %v3041
      %v3360 = vpop.permute.xlu0 %3359
      %v3490 = vunpack.c.l.b16 %v2850
      %v3491 = vunpack.c.h.b16 %v2850
      %v3492 = vunpack.c.l.b16 %v2851
      %v3493 = vunpack.c.h.b16 %v2851
      %v3494 = vunpack.c.l.b16 %v2852
      %v3495 = vunpack.c.h.b16 %v2852
      %v3496 = vunpack.c.l.b16 %v2853
      %v3497 = vunpack.c.h.b16 %v2853
      %v3498 = vunpack.c.l.b16 %v2854
      %v3499 = vunpack.c.h.b16 %v2854
      %v3500 = vunpack.c.l.b16 %v2855
      %v3501 = vunpack.c.h.b16 %v2855
      %v3502 = vunpack.c.l.b16 %v2856
      %v3503 = vunpack.c.h.b16 %v2856
      %v3504 = vunpack.c.l.b16 %v2857
      %v3505 = vunpack.c.h.b16 %v2857
      %v3506 = vunpack.c.l.b16 %v2858
      %v3507 = vunpack.c.h.b16 %v2858
      %v3508 = vunpack.c.l.b16 %v2859
      %v3509 = vunpack.c.h.b16 %v2859
      %v3510 = vunpack.c.l.b16 %v2860
      %v3511 = vunpack.c.h.b16 %v2860
      %v3512 = vunpack.c.l.b16 %v2861
      %v3513 = vunpack.c.h.b16 %v2861
      %v3514 = vunpack.c.l.b16 %v2862
      %v3515 = vunpack.c.h.b16 %v2862
      %v3516 = vunpack.c.l.b16 %v2863
      %v3517 = vunpack.c.h.b16 %v2863
      %v3518 = vunpack.c.l.b16 %v2864
      %v3519 = vunpack.c.h.b16 %v2864
      %v3520 = vunpack.c.l.b16 %v2865
      %v3521 = vunpack.c.h.b16 %v2865
      %v3522 = vunpack.c.l.b16 %v2866
      %v3523 = vunpack.c.h.b16 %v2866
      %v3524 = vunpack.c.l.b16 %v2867
      %v3525 = vunpack.c.h.b16 %v2867
      %v3526 = vunpack.c.l.b16 %v2868
      %v3527 = vunpack.c.h.b16 %v2868
      %v3528 = vunpack.c.l.b16 %v2869
      %v3529 = vunpack.c.h.b16 %v2869
      %v3530 = vunpack.c.l.b16 %v2870
      %v3531 = vunpack.c.h.b16 %v2870
      %v3532 = vunpack.c.l.b16 %v2871
      %v3533 = vunpack.c.h.b16 %v2871
      %v3534 = vunpack.c.l.b16 %v2872
      %v3535 = vunpack.c.h.b16 %v2872
      %v3536 = vunpack.c.l.b16 %v2873
      %v3537 = vunpack.c.h.b16 %v2873
      %v3538 = vunpack.c.l.b16 %v2874
      %v3539 = vunpack.c.h.b16 %v2874
      %v3540 = vunpack.c.l.b16 %v2875
      %v3541 = vunpack.c.h.b16 %v2875
      %v3542 = vunpack.c.l.b16 %v2876
      %v3543 = vunpack.c.h.b16 %v2876
      %v3544 = vunpack.c.l.b16 %v2877
      %v3545 = vunpack.c.h.b16 %v2877
      %v3546 = vunpack.c.l.b16 %v2878
      %v3547 = vunpack.c.h.b16 %v2878
      %v3548 = vunpack.c.l.b16 %v2879
      %v3549 = vunpack.c.h.b16 %v2879
      %v3550 = vunpack.c.l.b16 %v2880
      %v3551 = vunpack.c.h.b16 %v2880
      %v3552 = vunpack.c.l.b16 %v2881
      %v3553 = vunpack.c.h.b16 %v2881
      %v3554 = vunpack.c.l.b16 %v2882
      %v3555 = vunpack.c.h.b16 %v2882
      %v3556 = vunpack.c.l.b16 %v2883
      %v3557 = vunpack.c.h.b16 %v2883
      %v3558 = vunpack.c.l.b16 %v2884
      %v3559 = vunpack.c.h.b16 %v2884
      %v3560 = vunpack.c.l.b16 %v2885
      %v3561 = vunpack.c.h.b16 %v2885
      %v3562 = vunpack.c.l.b16 %v2886
      %v3563 = vunpack.c.h.b16 %v2886
      %v3564 = vunpack.c.l.b16 %v2887
      %v3565 = vunpack.c.h.b16 %v2887
      %v3566 = vunpack.c.l.b16 %v2888
      %v3567 = vunpack.c.h.b16 %v2888
      %v3568 = vunpack.c.l.b16 %v2889
      %v3569 = vunpack.c.h.b16 %v2889
      %v3570 = vunpack.c.l.b16 %v2890
      %v3571 = vunpack.c.h.b16 %v2890
      %v3572 = vunpack.c.l.b16 %v2891
      %v3573 = vunpack.c.h.b16 %v2891
      %v3574 = vunpack.c.l.b16 %v2892
      %v3575 = vunpack.c.h.b16 %v2892
      %v3576 = vunpack.c.l.b16 %v2893
      %v3577 = vunpack.c.h.b16 %v2893
      %v3578 = vunpack.c.l.b16 %v2894
      %v3579 = vunpack.c.h.b16 %v2894
      %v3580 = vunpack.c.l.b16 %v2895
      %v3581 = vunpack.c.h.b16 %v2895
      %v3582 = vunpack.c.l.b16 %v2896
      %v3583 = vunpack.c.h.b16 %v2896
      %v3584 = vunpack.c.l.b16 %v2897
      %v3585 = vunpack.c.h.b16 %v2897
      %v3586 = vunpack.c.l.b16 %v2898
      %v3587 = vunpack.c.h.b16 %v2898
      %v3588 = vunpack.c.l.b16 %v2899
      %v3589 = vunpack.c.h.b16 %v2899
      %v3590 = vunpack.c.l.b16 %v2900
      %v3591 = vunpack.c.h.b16 %v2900
      %v3592 = vunpack.c.l.b16 %v2901
      %v3593 = vunpack.c.h.b16 %v2901
      %v3594 = vunpack.c.l.b16 %v2902
      %v3595 = vunpack.c.h.b16 %v2902
      %v3596 = vunpack.c.l.b16 %v2903
      %v3597 = vunpack.c.h.b16 %v2903
      %v3598 = vunpack.c.l.b16 %v2904
      %v3599 = vunpack.c.h.b16 %v2904
      %v3600 = vunpack.c.l.b16 %v2905
      %v3601 = vunpack.c.h.b16 %v2905
      %v3602 = vunpack.c.l.b16 %v2906
      %v3603 = vunpack.c.h.b16 %v2906
      %v3604 = vunpack.c.l.b16 %v2907
      %v3605 = vunpack.c.h.b16 %v2907
      %v3606 = vunpack.c.l.b16 %v2908
      %v3607 = vunpack.c.h.b16 %v2908
      %v3608 = vunpack.c.l.b16 %v2909
      %v3609 = vunpack.c.h.b16 %v2909
      %v3610 = vunpack.c.l.b16 %v2910
      %v3611 = vunpack.c.h.b16 %v2910
      %v3612 = vunpack.c.l.b16 %v2911
      %v3613 = vunpack.c.h.b16 %v2911
      %v3614 = vunpack.c.l.b16 %v2912
      %v3615 = vunpack.c.h.b16 %v2912
      %v3616 = vunpack.c.l.b16 %v2913
      %v3617 = vunpack.c.h.b16 %v2913
      %v3618 = vunpack.c.l.b16 %v2914
      %v3619 = vunpack.c.h.b16 %v2914
      %v3620 = vunpack.c.l.b16 %v2915
      %v3621 = vunpack.c.h.b16 %v2915
      %v3622 = vunpack.c.l.b16 %v2916
      %v3623 = vunpack.c.h.b16 %v2916
      %v3624 = vunpack.c.l.b16 %v2917
      %v3625 = vunpack.c.h.b16 %v2917
      %v3626 = vunpack.c.l.b16 %v2918
      %v3627 = vunpack.c.h.b16 %v2918
      %v3628 = vunpack.c.l.b16 %v2919
      %v3629 = vunpack.c.h.b16 %v2919
      %v3630 = vunpack.c.l.b16 %v2920
      %v3631 = vunpack.c.h.b16 %v2920
      %v3632 = vunpack.c.l.b16 %v2921
      %v3633 = vunpack.c.h.b16 %v2921
      %v3634 = vunpack.c.l.b16 %v2922
      %v3635 = vunpack.c.h.b16 %v2922
      %v3636 = vunpack.c.l.b16 %v2923
      %v3637 = vunpack.c.h.b16 %v2923
      %v3638 = vunpack.c.l.b16 %v2924
      %v3639 = vunpack.c.h.b16 %v2924
      %v3640 = vunpack.c.l.b16 %v2925
      %v3641 = vunpack.c.h.b16 %v2925
      %v3642 = vunpack.c.l.b16 %v2926
      %v3643 = vunpack.c.h.b16 %v2926
      %v3644 = vunpack.c.l.b16 %v2927
      %v3645 = vunpack.c.h.b16 %v2927
      %v3646 = vunpack.c.l.b16 %v2928
      %v3647 = vunpack.c.h.b16 %v2928
      %v3648 = vunpack.c.l.b16 %v2929
      %v3649 = vunpack.c.h.b16 %v2929
      %v3650 = vunpack.c.l.b16 %v2930
      %v3651 = vunpack.c.h.b16 %v2930
      %v3652 = vunpack.c.l.b16 %v2931
      %v3653 = vunpack.c.h.b16 %v2931
      %v3654 = vunpack.c.l.b16 %v2932
      %v3655 = vunpack.c.h.b16 %v2932
      %v3656 = vunpack.c.l.b16 %v2933
      %v3657 = vunpack.c.h.b16 %v2933
      %v3658 = vunpack.c.l.b16 %v2934
      %v3659 = vunpack.c.h.b16 %v2934
      %v3660 = vunpack.c.l.b16 %v2935
      %v3661 = vunpack.c.h.b16 %v2935
      %v3662 = vunpack.c.l.b16 %v2936
      %v3663 = vunpack.c.h.b16 %v2936
      %v3664 = vunpack.c.l.b16 %v2937
      %v3665 = vunpack.c.h.b16 %v2937
      %v3666 = vunpack.c.l.b16 %v2938
      %v3667 = vunpack.c.h.b16 %v2938
      %v3668 = vunpack.c.l.b16 %v2939
      %v3669 = vunpack.c.h.b16 %v2939
      %v3670 = vunpack.c.l.b16 %v2940
      %v3671 = vunpack.c.h.b16 %v2940
      %v3672 = vunpack.c.l.b16 %v2941
      %v3673 = vunpack.c.h.b16 %v2941
      %v3674 = vunpack.c.l.b16 %v2942
      %v3675 = vunpack.c.h.b16 %v2942
      %v3676 = vunpack.c.l.b16 %v2943
      %v3677 = vunpack.c.h.b16 %v2943
      %v3678 = vunpack.c.l.b16 %v2944
      %v3679 = vunpack.c.h.b16 %v2944
      %v3680 = vunpack.c.l.b16 %v2945
      %v3681 = vunpack.c.h.b16 %v2945
      %v3682 = vunpack.c.l.b16 %v2946
      %v3683 = vunpack.c.h.b16 %v2946
      %v3684 = vunpack.c.l.b16 %v2947
      %v3685 = vunpack.c.h.b16 %v2947
      %v3686 = vunpack.c.l.b16 %v2948
      %v3687 = vunpack.c.h.b16 %v2948
      %v3688 = vunpack.c.l.b16 %v2949
      %v3689 = vunpack.c.h.b16 %v2949
      %v3690 = vunpack.c.l.b16 %v2950
      %v3691 = vunpack.c.h.b16 %v2950
      %v3692 = vunpack.c.l.b16 %v2951
      %v3693 = vunpack.c.h.b16 %v2951
      %v3694 = vunpack.c.l.b16 %v2952
      %v3695 = vunpack.c.h.b16 %v2952
      %v3696 = vunpack.c.l.b16 %v2953
      %v3697 = vunpack.c.h.b16 %v2953
      %v3698 = vunpack.c.l.b16 %v2954
      %v3699 = vunpack.c.h.b16 %v2954
      %v3700 = vunpack.c.l.b16 %v2955
      %v3701 = vunpack.c.h.b16 %v2955
      %v3702 = vunpack.c.l.b16 %v2956
      %v3703 = vunpack.c.h.b16 %v2956
      %v3704 = vunpack.c.l.b16 %v2957
      %v3705 = vunpack.c.h.b16 %v2957
      %v3706 = vunpack.c.l.b16 %v2958
      %v3707 = vunpack.c.h.b16 %v2958
      %v3708 = vunpack.c.l.b16 %v2959
      %v3709 = vunpack.c.h.b16 %v2959
      %v3710 = vunpack.c.l.b16 %v2960
      %v3711 = vunpack.c.h.b16 %v2960
      %v3712 = vunpack.c.l.b16 %v2961
      %v3713 = vunpack.c.h.b16 %v2961
      %v3714 = vunpack.c.l.b16 %v2962
      %v3715 = vunpack.c.h.b16 %v2962
      %v3716 = vunpack.c.l.b16 %v2963
      %v3717 = vunpack.c.h.b16 %v2963
      %v3718 = vunpack.c.l.b16 %v2964
      %v3719 = vunpack.c.h.b16 %v2964
      %v3720 = vunpack.c.l.b16 %v2965
      %v3721 = vunpack.c.h.b16 %v2965
      %v3722 = vunpack.c.l.b16 %v2966
      %v3723 = vunpack.c.h.b16 %v2966
      %v3724 = vunpack.c.l.b16 %v2967
      %v3725 = vunpack.c.h.b16 %v2967
      %v3726 = vunpack.c.l.b16 %v2968
      %v3727 = vunpack.c.h.b16 %v2968
      %v3728 = vunpack.c.l.b16 %v2969
      %v3729 = vunpack.c.h.b16 %v2969
      %v3730 = vunpack.c.l.b16 %v2970
      %v3731 = vunpack.c.h.b16 %v2970
      %v3732 = vunpack.c.l.b16 %v2971
      %v3733 = vunpack.c.h.b16 %v2971
      %v3734 = vunpack.c.l.b16 %v2972
      %v3735 = vunpack.c.h.b16 %v2972
      %v3736 = vunpack.c.l.b16 %v2973
      %v3737 = vunpack.c.h.b16 %v2973
      %v3738 = vunpack.c.l.b16 %v2974
      %v3739 = vunpack.c.h.b16 %v2974
      %v3740 = vunpack.c.l.b16 %v2975
      %v3741 = vunpack.c.h.b16 %v2975
      %v3742 = vunpack.c.l.b16 %v2976
      %v3743 = vunpack.c.h.b16 %v2976
      %v3744 = vunpack.c.l.b16 %v2977
      %v3745 = vunpack.c.h.b16 %v2977
      %v3746 = vpack.c.b16 %v3494, %v3490
      %v3747 = vpack.c.b16 %v3495, %v3491
      %v3748 = vpack.c.b16 %v3496, %v3492
      %v3749 = vpack.c.b16 %v3497, %v3493
      %v3750 = vpack.c.b16 %v3502, %v3498
      %v3751 = vpack.c.b16 %v3503, %v3499
      %v3752 = vpack.c.b16 %v3504, %v3500
      %v3753 = vpack.c.b16 %v3505, %v3501
      %v3754 = vpack.c.b16 %v3510, %v3506
      %v3755 = vpack.c.b16 %v3511, %v3507
      %v3756 = vpack.c.b16 %v3512, %v3508
      %v3757 = vpack.c.b16 %v3513, %v3509
      %v3758 = vpack.c.b16 %v3518, %v3514
      %v3759 = vpack.c.b16 %v3519, %v3515
      %v3760 = vpack.c.b16 %v3520, %v3516
      %v3761 = vpack.c.b16 %v3521, %v3517
      %v3762 = vpack.c.b16 %v3526, %v3522
      %v3763 = vpack.c.b16 %v3527, %v3523
      %v3764 = vpack.c.b16 %v3528, %v3524
      %v3765 = vpack.c.b16 %v3529, %v3525
      %v3766 = vpack.c.b16 %v3534, %v3530
      %v3767 = vpack.c.b16 %v3535, %v3531
      %v3768 = vpack.c.b16 %v3536, %v3532
      %v3769 = vpack.c.b16 %v3537, %v3533
      %v3770 = vpack.c.b16 %v3542, %v3538
      %v3771 = vpack.c.b16 %v3543, %v3539
      %v3772 = vpack.c.b16 %v3544, %v3540
      %v3773 = vpack.c.b16 %v3545, %v3541
      %v3774 = vpack.c.b16 %v3550, %v3546
      %v3775 = vpack.c.b16 %v3551, %v3547
      %v3776 = vpack.c.b16 %v3552, %v3548
      %v3777 = vpack.c.b16 %v3553, %v3549
      %v3778 = vpack.c.b16 %v3558, %v3554
      %v3779 = vpack.c.b16 %v3559, %v3555
      %v3780 = vpack.c.b16 %v3560, %v3556
      %v3781 = vpack.c.b16 %v3561, %v3557
      %v3782 = vpack.c.b16 %v3566, %v3562
      %v3783 = vpack.c.b16 %v3567, %v3563
      %v3784 = vpack.c.b16 %v3568, %v3564
      %v3785 = vpack.c.b16 %v3569, %v3565
      %v3786 = vpack.c.b16 %v3574, %v3570
      %v3787 = vpack.c.b16 %v3575, %v3571
      %v3788 = vpack.c.b16 %v3576, %v3572
      %v3789 = vpack.c.b16 %v3577, %v3573
      %v3790 = vpack.c.b16 %v3582, %v3578
      %v3791 = vpack.c.b16 %v3583, %v3579
      %v3792 = vpack.c.b16 %v3584, %v3580
      %v3793 = vpack.c.b16 %v3585, %v3581
      %v3794 = vpack.c.b16 %v3590, %v3586
      %v3795 = vpack.c.b16 %v3591, %v3587
      %v3796 = vpack.c.b16 %v3592, %v3588
      %v3797 = vpack.c.b16 %v3593, %v3589
      %v3798 = vpack.c.b16 %v3598, %v3594
      %v3799 = vpack.c.b16 %v3599, %v3595
      %v3800 = vpack.c.b16 %v3600, %v3596
      %v3801 = vpack.c.b16 %v3601, %v3597
      %v3802 = vpack.c.b16 %v3606, %v3602
      %v3803 = vpack.c.b16 %v3607, %v3603
      %v3804 = vpack.c.b16 %v3608, %v3604
      %v3805 = vpack.c.b16 %v3609, %v3605
      %v3806 = vpack.c.b16 %v3614, %v3610
      %v3807 = vpack.c.b16 %v3615, %v3611
      %v3808 = vpack.c.b16 %v3616, %v3612
      %v3809 = vpack.c.b16 %v3617, %v3613
      %v3810 = vpack.c.b16 %v3622, %v3618
      %v3811 = vpack.c.b16 %v3623, %v3619
      %v3812 = vpack.c.b16 %v3624, %v3620
      %v3813 = vpack.c.b16 %v3625, %v3621
      %v3814 = vpack.c.b16 %v3630, %v3626
      %v3815 = vpack.c.b16 %v3631, %v3627
      %v3816 = vpack.c.b16 %v3632, %v3628
      %v3817 = vpack.c.b16 %v3633, %v3629
      %v3818 = vpack.c.b16 %v3638, %v3634
      %v3819 = vpack.c.b16 %v3639, %v3635
      %v3820 = vpack.c.b16 %v3640, %v3636
      %v3821 = vpack.c.b16 %v3641, %v3637
      %v3822 = vpack.c.b16 %v3646, %v3642
      %v3823 = vpack.c.b16 %v3647, %v3643
      %v3824 = vpack.c.b16 %v3648, %v3644
      %v3825 = vpack.c.b16 %v3649, %v3645
      %v3826 = vpack.c.b16 %v3654, %v3650
      %v3827 = vpack.c.b16 %v3655, %v3651
      %v3828 = vpack.c.b16 %v3656, %v3652
      %v3829 = vpack.c.b16 %v3657, %v3653
      %v3830 = vpack.c.b16 %v3662, %v3658
      %v3831 = vpack.c.b16 %v3663, %v3659
      %v3832 = vpack.c.b16 %v3664, %v3660
      %v3833 = vpack.c.b16 %v3665, %v3661
      %v3834 = vpack.c.b16 %v3670, %v3666
      %v3835 = vpack.c.b16 %v3671, %v3667
      %v3836 = vpack.c.b16 %v3672, %v3668
      %v3837 = vpack.c.b16 %v3673, %v3669
      %v3838 = vpack.c.b16 %v3678, %v3674
      %v3839 = vpack.c.b16 %v3679, %v3675
      %v3840 = vpack.c.b16 %v3680, %v3676
      %v3841 = vpack.c.b16 %v3681, %v3677
      %v3842 = vpack.c.b16 %v3686, %v3682
      %v3843 = vpack.c.b16 %v3687, %v3683
      %v3844 = vpack.c.b16 %v3688, %v3684
      %v3845 = vpack.c.b16 %v3689, %v3685
      %v3846 = vpack.c.b16 %v3694, %v3690
      %v3847 = vpack.c.b16 %v3695, %v3691
      %v3848 = vpack.c.b16 %v3696, %v3692
      %v3849 = vpack.c.b16 %v3697, %v3693
      %v3850 = vpack.c.b16 %v3702, %v3698
      %v3851 = vpack.c.b16 %v3703, %v3699
      %v3852 = vpack.c.b16 %v3704, %v3700
      %v3853 = vpack.c.b16 %v3705, %v3701
      %v3854 = vpack.c.b16 %v3710, %v3706
      %v3855 = vpack.c.b16 %v3711, %v3707
      %v3856 = vpack.c.b16 %v3712, %v3708
      %v3857 = vpack.c.b16 %v3713, %v3709
      %v3858 = vpack.c.b16 %v3718, %v3714
      %v3859 = vpack.c.b16 %v3719, %v3715
      %v3860 = vpack.c.b16 %v3720, %v3716
      %v3861 = vpack.c.b16 %v3721, %v3717
      %v3862 = vpack.c.b16 %v3726, %v3722
      %v3863 = vpack.c.b16 %v3727, %v3723
      %v3864 = vpack.c.b16 %v3728, %v3724
      %v3865 = vpack.c.b16 %v3729, %v3725
      %v3866 = vpack.c.b16 %v3734, %v3730
      %v3867 = vpack.c.b16 %v3735, %v3731
      %v3868 = vpack.c.b16 %v3736, %v3732
      %v3869 = vpack.c.b16 %v3737, %v3733
      %v3870 = vpack.c.b16 %v3742, %v3738
      %v3871 = vpack.c.b16 %v3743, %v3739
      %v3872 = vpack.c.b16 %v3744, %v3740
      %v3873 = vpack.c.b16 %v3745, %v3741
      %4002 = vmatprep.subr.bf16.mxu0 0
      %4003 = vmatpush1.bf16.msra.mxu0 %v2818
      %4004 = vmatprep.subr.bf16.mxu0 0
      %4005 = vmatpush1.bf16.msra.mxu0 %v2819
      %4006 = vmatprep.subr.bf16.mxu0 0
      %4007 = vmatpush1.bf16.msra.mxu0 %v2820
      %4008 = vmatprep.subr.bf16.mxu0 0
      %4009 = vmatpush1.bf16.msra.mxu0 %v2821
      %4010 = vmatprep.subr.bf16.mxu0 0
      %4011 = vmatpush1.bf16.msra.mxu0 %v2822
      %4012 = vmatprep.subr.bf16.mxu0 0
      %4013 = vmatpush1.bf16.msra.mxu0 %v2823
      %4014 = vmatprep.subr.bf16.mxu0 0
      %4015 = vmatpush1.bf16.msra.mxu0 %v2824
      %4016 = vmatprep.subr.bf16.mxu0 0
      %4017 = vmatpush1.bf16.msra.mxu0 %v2825
      %4018 = vmatprep.subr.bf16.mxu0 0
      %4019 = vmatpush1.bf16.msra.mxu0 %v2826
      %4020 = vmatprep.subr.bf16.mxu0 0
      %4021 = vmatpush1.bf16.msra.mxu0 %v2827
      %4022 = vmatprep.subr.bf16.mxu0 0
      %4023 = vmatpush1.bf16.msra.mxu0 %v2828
      %4024 = vmatprep.subr.bf16.mxu0 0
      %4025 = vmatpush1.bf16.msra.mxu0 %v2829
      %4026 = vmatprep.subr.bf16.mxu0 0
      %4027 = vmatpush1.bf16.msra.mxu0 %v2830
      %4028 = vmatprep.subr.bf16.mxu0 0
      %4029 = vmatpush1.bf16.msra.mxu0 %v2831
      %4030 = vmatprep.subr.bf16.mxu0 0
      %4031 = vmatpush1.bf16.msra.mxu0 %v2832
      %4032 = vmatprep.subr.bf16.mxu0 0
      %4033 = vmatpush1.bf16.msra.mxu0 %v2833
      %4034 = vmatprep.mubr.bf16.mxu0 %v3747
      %4035 = vmatmul.mubr.bf16.gmra.mrb[0].mxu0 %v3746
      %v4036 = vpop.f32.mrb[0].mxu0
      %v4037 = vadd.f32 %v3045, %v4036
      %v4038 = vpop.f32.mrb[0].mxu0
      %v4039 = vpop.f32.mrb[0].mxu0
      %v4040 = vadd.f32 %v3050, %v4039
      %v4041 = vpop.f32.mrb[0].mxu0
      %4042 = vmatprep.mubr.bf16.mxu0 %v3751
      %4043 = vmatmul.mubr.bf16.gmra.mrb[0].mxu0 %v3750
      %v4044 = vpop.f32.mrb[0].mxu0
      %v4045 = vadd.f32 %v3055, %v4044
      %v4046 = vpop.f32.mrb[0].mxu0
      %v4047 = vpop.f32.mrb[0].mxu0
      %v4048 = vadd.f32 %v3060, %v4047
      %v4049 = vpop.f32.mrb[0].mxu0
      %4050 = vmatprep.mubr.bf16.mxu0 %v3755
      %4051 = vmatmul.mubr.bf16.gmra.mrb[0].mxu0 %v3754
      %v4052 = vpop.f32.mrb[0].mxu0
      %v4053 = vadd.f32 %v3065, %v4052
      %v4054 = vpop.f32.mrb[0].mxu0
      %v4055 = vpop.f32.mrb[0].mxu0
      %v4056 = vadd.f32 %v3070, %v4055
      %v4057 = vpop.f32.mrb[0].mxu0
      %4058 = vmatprep.mubr.bf16.mxu0 %v3759
      %4059 = vmatmul.mubr.bf16.gmra.mrb[0].mxu0 %v3758
      %v4060 = vpop.f32.mrb[0].mxu0
      %v4061 = vadd.f32 %v3075, %v4060
      %v4062 = vpop.f32.mrb[0].mxu0
      %v4063 = vpop.f32.mrb[0].mxu0
      %v4064 = vadd.f32 %v3080, %v4063
      %v4065 = vpop.f32.mrb[0].mxu0
      %4066 = vmatprep.mubr.bf16.mxu0 %v3763
      %4067 = vmatmul.mubr.bf16.gmra.mrb[0].mxu0 %v3762
      %v4068 = vpop.f32.mrb[0].mxu0
      %v4069 = vadd.f32 %v3085, %v4068
      %v4070 = vpop.f32.mrb[0].mxu0
      %v4071 = vpop.f32.mrb[0].mxu0
      %v4072 = vadd.f32 %v3090, %v4071
      %v4073 = vpop.f32.mrb[0].mxu0
      %4074 = vmatprep.mubr.bf16.mxu0 %v3767
      %4075 = vmatmul.mubr.bf16.gmra.mrb[0].mxu0 %v3766
      %v4076 = vpop.f32.mrb[0].mxu0
      %v4077 = vadd.f32 %v3095, %v4076
      %v4078 = vpop.f32.mrb[0].mxu0
      %v4079 = vpop.f32.mrb[0].mxu0
      %v4080 = vadd.f32 %v3100, %v4079
      %v4081 = vpop.f32.mrb[0].mxu0
      %4082 = vmatprep.mubr.bf16.mxu0 %v3771
      %4083 = vmatmul.mubr.bf16.gmra.mrb[0].mxu0 %v3770
      %v4084 = vpop.f32.mrb[0].mxu0
      %v4085 = vadd.f32 %v3105, %v4084
      %v4086 = vpop.f32.mrb[0].mxu0
      %v4087 = vpop.f32.mrb[0].mxu0
      %v4088 = vadd.f32 %v3110, %v4087
      %v4089 = vpop.f32.mrb[0].mxu0
      %4090 = vmatprep.mubr.bf16.mxu0 %v3775
      %4091 = vmatmul.mubr.bf16.gmra.mrb[0].mxu0 %v3774
      %v4092 = vpop.f32.mrb[0].mxu0
      %v4093 = vadd.f32 %v3115, %v4092
      %v4094 = vpop.f32.mrb[0].mxu0
      %v4095 = vpop.f32.mrb[0].mxu0
      %v4096 = vadd.f32 %v3120, %v4095
      %v4097 = vpop.f32.mrb[0].mxu0
      %4098 = vmatprep.mubr.bf16.mxu0 %v3779
      %4099 = vmatmul.mubr.bf16.gmra.mrb[0].mxu0 %v3778
      %v4100 = vpop.f32.mrb[0].mxu0
      %v4101 = vadd.f32 %v3125, %v4100
      %v4102 = vpop.f32.mrb[0].mxu0
      %v4103 = vpop.f32.mrb[0].mxu0
      %v4104 = vadd.f32 %v3130, %v4103
      %v4105 = vpop.f32.mrb[0].mxu0
      %4106 = vmatprep.mubr.bf16.mxu0 %v3783
      %4107 = vmatmul.mubr.bf16.gmra.mrb[0].mxu0 %v3782
      %v4108 = vpop.f32.mrb[0].mxu0
      %v4109 = vadd.f32 %v3135, %v4108
      %v4110 = vpop.f32.mrb[0].mxu0
      %v4111 = vpop.f32.mrb[0].mxu0
      %v4112 = vadd.f32 %v3140, %v4111
      %v4113 = vpop.f32.mrb[0].mxu0
      %4114 = vmatprep.mubr.bf16.mxu0 %v3787
      %4115 = vmatmul.mubr.bf16.gmra.mrb[0].mxu0 %v3786
      %v4116 = vpop.f32.mrb[0].mxu0
      %v4117 = vadd.f32 %v3145, %v4116
      %v4118 = vpop.f32.mrb[0].mxu0
      %v4119 = vpop.f32.mrb[0].mxu0
      %v4120 = vadd.f32 %v3150, %v4119
      %v4121 = vpop.f32.mrb[0].mxu0
      %4122 = vmatprep.mubr.bf16.mxu0 %v3791
      %4123 = vmatmul.mubr.bf16.gmra.mrb[0].mxu0 %v3790
      %v4124 = vpop.f32.mrb[0].mxu0
      %v4125 = vadd.f32 %v3155, %v4124
      %v4126 = vpop.f32.mrb[0].mxu0
      %v4127 = vpop.f32.mrb[0].mxu0
      %v4128 = vadd.f32 %v3160, %v4127
      %v4129 = vpop.f32.mrb[0].mxu0
      %4130 = vmatprep.mubr.bf16.mxu0 %v3795
      %4131 = vmatmul.mubr.bf16.gmra.mrb[0].mxu0 %v3794
      %v4132 = vpop.f32.mrb[0].mxu0
      %v4133 = vadd.f32 %v3165, %v4132
      %v4134 = vpop.f32.mrb[0].mxu0
      %v4135 = vpop.f32.mrb[0].mxu0
      %v4136 = vadd.f32 %v3170, %v4135
      %v4137 = vpop.f32.mrb[0].mxu0
      %4138 = vmatprep.mubr.bf16.mxu0 %v3799
      %4139 = vmatmul.mubr.bf16.gmra.mrb[0].mxu0 %v3798
      %v4140 = vpop.f32.mrb[0].mxu0
      %v4141 = vadd.f32 %v3175, %v4140
      %v4142 = vpop.f32.mrb[0].mxu0
      %v4143 = vpop.f32.mrb[0].mxu0
      %v4144 = vadd.f32 %v3180, %v4143
      %v4145 = vpop.f32.mrb[0].mxu0
      %4146 = vmatprep.mubr.bf16.mxu0 %v3803
      %4147 = vmatmul.mubr.bf16.gmra.mrb[0].mxu0 %v3802
      %v4148 = vpop.f32.mrb[0].mxu0
      %v4149 = vadd.f32 %v3185, %v4148
      %v4150 = vpop.f32.mrb[0].mxu0
      %v4151 = vpop.f32.mrb[0].mxu0
      %v4152 = vadd.f32 %v3190, %v4151
      %v4153 = vpop.f32.mrb[0].mxu0
      %4154 = vmatprep.mubr.bf16.mxu0 %v3807
      %4155 = vmatmul.mubr.bf16.gmra.mrb[0].mxu0 %v3806
      %v4156 = vpop.f32.mrb[0].mxu0
      %v4157 = vadd.f32 %v3195, %v4156
      %v4158 = vpop.f32.mrb[0].mxu0
      %v4159 = vpop.f32.mrb[0].mxu0
      %v4160 = vadd.f32 %v3200, %v4159
      %v4161 = vpop.f32.mrb[0].mxu0
      %4162 = vmatprep.mubr.bf16.mxu0 %v3811
      %4163 = vmatmul.mubr.bf16.gmra.mrb[0].mxu0 %v3810
      %v4164 = vpop.f32.mrb[0].mxu0
      %v4165 = vadd.f32 %v3205, %v4164
      %v4166 = vpop.f32.mrb[0].mxu0
      %v4167 = vpop.f32.mrb[0].mxu0
      %v4168 = vadd.f32 %v3210, %v4167
      %v4169 = vpop.f32.mrb[0].mxu0
      %4170 = vmatprep.mubr.bf16.mxu0 %v3815
      %4171 = vmatmul.mubr.bf16.gmra.mrb[0].mxu0 %v3814
      %v4172 = vpop.f32.mrb[0].mxu0
      %v4173 = vadd.f32 %v3215, %v4172
      %v4174 = vpop.f32.mrb[0].mxu0
      %v4175 = vpop.f32.mrb[0].mxu0
      %v4176 = vadd.f32 %v3220, %v4175
      %v4177 = vpop.f32.mrb[0].mxu0
      %4178 = vmatprep.mubr.bf16.mxu0 %v3819
      %4179 = vmatmul.mubr.bf16.gmra.mrb[0].mxu0 %v3818
      %v4180 = vpop.f32.mrb[0].mxu0
      %v4181 = vadd.f32 %v3225, %v4180
      %v4182 = vpop.f32.mrb[0].mxu0
      %v4183 = vpop.f32.mrb[0].mxu0
      %v4184 = vadd.f32 %v3230, %v4183
      %v4185 = vpop.f32.mrb[0].mxu0
      %4186 = vmatprep.mubr.bf16.mxu0 %v3823
      %4187 = vmatmul.mubr.bf16.gmra.mrb[0].mxu0 %v3822
      %v4188 = vpop.f32.mrb[0].mxu0
      %v4189 = vadd.f32 %v3235, %v4188
      %v4190 = vpop.f32.mrb[0].mxu0
      %v4191 = vpop.f32.mrb[0].mxu0
      %v4192 = vadd.f32 %v3240, %v4191
      %v4193 = vpop.f32.mrb[0].mxu0
      %4194 = vmatprep.mubr.bf16.mxu0 %v3827
      %4195 = vmatmul.mubr.bf16.gmra.mrb[0].mxu0 %v3826
      %v4196 = vpop.f32.mrb[0].mxu0
      %v4197 = vadd.f32 %v3245, %v4196
      %v4198 = vpop.f32.mrb[0].mxu0
      %v4199 = vpop.f32.mrb[0].mxu0
      %v4200 = vadd.f32 %v3250, %v4199
      %v4201 = vpop.f32.mrb[0].mxu0
      %4202 = vmatprep.mubr.bf16.mxu0 %v3831
      %4203 = vmatmul.mubr.bf16.gmra.mrb[0].mxu0 %v3830
      %v4204 = vpop.f32.mrb[0].mxu0
      %v4205 = vadd.f32 %v3255, %v4204
      %v4206 = vpop.f32.mrb[0].mxu0
      %v4207 = vpop.f32.mrb[0].mxu0
      %v4208 = vadd.f32 %v3260, %v4207
      %v4209 = vpop.f32.mrb[0].mxu0
      %4210 = vmatprep.mubr.bf16.mxu0 %v3835
      %4211 = vmatmul.mubr.bf16.gmra.mrb[0].mxu0 %v3834
      %v4212 = vpop.f32.mrb[0].mxu0
      %v4213 = vadd.f32 %v3265, %v4212
      %v4214 = vpop.f32.mrb[0].mxu0
      %v4215 = vpop.f32.mrb[0].mxu0
      %v4216 = vadd.f32 %v3270, %v4215
      %v4217 = vpop.f32.mrb[0].mxu0
      %4218 = vmatprep.mubr.bf16.mxu0 %v3839
      %4219 = vmatmul.mubr.bf16.gmra.mrb[0].mxu0 %v3838
      %v4220 = vpop.f32.mrb[0].mxu0
      %v4221 = vadd.f32 %v3275, %v4220
      %v4222 = vpop.f32.mrb[0].mxu0
      %v4223 = vpop.f32.mrb[0].mxu0
      %v4224 = vadd.f32 %v3280, %v4223
      %v4225 = vpop.f32.mrb[0].mxu0
      %4226 = vmatprep.mubr.bf16.mxu0 %v3843
      %4227 = vmatmul.mubr.bf16.gmra.mrb[0].mxu0 %v3842
      %v4228 = vpop.f32.mrb[0].mxu0
      %v4229 = vadd.f32 %v3285, %v4228
      %v4230 = vpop.f32.mrb[0].mxu0
      %v4231 = vpop.f32.mrb[0].mxu0
      %v4232 = vadd.f32 %v3290, %v4231
      %v4233 = vpop.f32.mrb[0].mxu0
      %4234 = vmatprep.mubr.bf16.mxu0 %v3847
      %4235 = vmatmul.mubr.bf16.gmra.mrb[0].mxu0 %v3846
      %v4236 = vpop.f32.mrb[0].mxu0
      %v4237 = vadd.f32 %v3295, %v4236
      %v4238 = vpop.f32.mrb[0].mxu0
      %v4239 = vpop.f32.mrb[0].mxu0
      %v4240 = vadd.f32 %v3300, %v4239
      %v4241 = vpop.f32.mrb[0].mxu0
      %4242 = vmatprep.mubr.bf16.mxu0 %v3851
      %4243 = vmatmul.mubr.bf16.gmra.mrb[0].mxu0 %v3850
      %v4244 = vpop.f32.mrb[0].mxu0
      %v4245 = vadd.f32 %v3305, %v4244
      %v4246 = vpop.f32.mrb[0].mxu0
      %v4247 = vpop.f32.mrb[0].mxu0
      %v4248 = vadd.f32 %v3310, %v4247
      %v4249 = vpop.f32.mrb[0].mxu0
      %4250 = vmatprep.mubr.bf16.mxu0 %v3855
      %4251 = vmatmul.mubr.bf16.gmra.mrb[0].mxu0 %v3854
      %v4252 = vpop.f32.mrb[0].mxu0
      %v4253 = vadd.f32 %v3315, %v4252
      %v4254 = vpop.f32.mrb[0].mxu0
      %v4255 = vpop.f32.mrb[0].mxu0
      %v4256 = vadd.f32 %v3320, %v4255
      %v4257 = vpop.f32.mrb[0].mxu0
      %4258 = vmatprep.mubr.bf16.mxu0 %v3859
      %4259 = vmatmul.mubr.bf16.gmra.mrb[0].mxu0 %v3858
      %v4260 = vpop.f32.mrb[0].mxu0
      %v4261 = vadd.f32 %v3325, %v4260
      %v4262 = vpop.f32.mrb[0].mxu0
      %v4263 = vpop.f32.mrb[0].mxu0
      %v4264 = vadd.f32 %v3330, %v4263
      %v4265 = vpop.f32.mrb[0].mxu0
      %4266 = vmatprep.mubr.bf16.mxu0 %v3863
      %4267 = vmatmul.mubr.bf16.gmra.mrb[0].mxu0 %v3862
      %v4268 = vpop.f32.mrb[0].mxu0
      %v4269 = vadd.f32 %v3335, %v4268
      %v4270 = vpop.f32.mrb[0].mxu0
      %v4271 = vpop.f32.mrb[0].mxu0
      %v4272 = vadd.f32 %v3340, %v4271
      %v4273 = vpop.f32.mrb[0].mxu0
      %4274 = vmatprep.mubr.bf16.mxu0 %v3867
      %4275 = vmatmul.mubr.bf16.gmra.mrb[0].mxu0 %v3866
      %v4276 = vpop.f32.mrb[0].mxu0
      %v4277 = vadd.f32 %v3345, %v4276
      %v4278 = vpop.f32.mrb[0].mxu0
      %v4279 = vpop.f32.mrb[0].mxu0
      %v4280 = vadd.f32 %v3350, %v4279
      %v4281 = vpop.f32.mrb[0].mxu0
      %4282 = vmatprep.mubr.bf16.mxu0 %v3871
      %4283 = vmatmul.mubr.bf16.gmra.mrb[0].mxu0 %v3870
      %v4284 = vpop.f32.mrb[0].mxu0
      %v4285 = vadd.f32 %v3355, %v4284
      %v4286 = vpop.f32.mrb[0].mxu0
      %v4287 = vpop.f32.mrb[0].mxu0
      %v4288 = vadd.f32 %v3360, %v4287
      %v4289 = vpop.f32.mrb[0].mxu0
      %4290 = vdwg.mxu0
      %4291 = vmatprep.subr.bf16.mxu0 0
      %4292 = vmatpush1.bf16.msra.mxu0 %v2834
      %4293 = vmatprep.subr.bf16.mxu0 0
      %4294 = vmatpush1.bf16.msra.mxu0 %v2835
      %4295 = vmatprep.subr.bf16.mxu0 0
      %4296 = vmatpush1.bf16.msra.mxu0 %v2836
      %4297 = vmatprep.subr.bf16.mxu0 0
      %4298 = vmatpush1.bf16.msra.mxu0 %v2837
      %4299 = vmatprep.subr.bf16.mxu0 0
      %4300 = vmatpush1.bf16.msra.mxu0 %v2838
      %4301 = vmatprep.subr.bf16.mxu0 0
      %4302 = vmatpush1.bf16.msra.mxu0 %v2839
      %4303 = vmatprep.subr.bf16.mxu0 0
      %4304 = vmatpush1.bf16.msra.mxu0 %v2840
      %4305 = vmatprep.subr.bf16.mxu0 0
      %4306 = vmatpush1.bf16.msra.mxu0 %v2841
      %4307 = vmatprep.subr.bf16.mxu0 0
      %4308 = vmatpush1.bf16.msra.mxu0 %v2842
      %4309 = vmatprep.subr.bf16.mxu0 0
      %4310 = vmatpush1.bf16.msra.mxu0 %v2843
      %4311 = vmatprep.subr.bf16.mxu0 0
      %4312 = vmatpush1.bf16.msra.mxu0 %v2844
      %4313 = vmatprep.subr.bf16.mxu0 0
      %4314 = vmatpush1.bf16.msra.mxu0 %v2845
      %4315 = vmatprep.subr.bf16.mxu0 0
      %4316 = vmatpush1.bf16.msra.mxu0 %v2846
      %4317 = vmatprep.subr.bf16.mxu0 0
      %4318 = vmatpush1.bf16.msra.mxu0 %v2847
      %4319 = vmatprep.subr.bf16.mxu0 0
      %4320 = vmatpush1.bf16.msra.mxu0 %v2848
      %4321 = vmatprep.subr.bf16.mxu0 0
      %4322 = vmatpush1.bf16.msra.mxu0 %v2849
      %4323 = vmatprep.mubr.bf16.mxu0 %v3749
      %4324 = vmatmul.mubr.bf16.gmra.mrb[0].mxu0 %v3748
      %v4325 = vpop.f32.mrb[0].mxu0
      %v4326 = vadd.f32 %v4037, %v4325
      %v4327 = vpop.f32.mrb[0].mxu0
      %v4328 = vpop.f32.mrb[0].mxu0
      %v4329 = vadd.f32 %v4040, %v4328
      %v4330 = vpop.f32.mrb[0].mxu0
      %4331 = vmatprep.mubr.bf16.mxu0 %v3753
      %4332 = vmatmul.mubr.bf16.gmra.mrb[0].mxu0 %v3752
      %v4333 = vpop.f32.mrb[0].mxu0
      %v4334 = vadd.f32 %v4045, %v4333
      %v4335 = vpop.f32.mrb[0].mxu0
      %v4336 = vpop.f32.mrb[0].mxu0
      %v4337 = vadd.f32 %v4048, %v4336
      %v4338 = vpop.f32.mrb[0].mxu0
      %4339 = vmatprep.mubr.bf16.mxu0 %v3757
      %4340 = vmatmul.mubr.bf16.gmra.mrb[0].mxu0 %v3756
      %v4341 = vpop.f32.mrb[0].mxu0
      %v4342 = vadd.f32 %v4053, %v4341
      %v4343 = vpop.f32.mrb[0].mxu0
      %v4344 = vpop.f32.mrb[0].mxu0
      %v4345 = vadd.f32 %v4056, %v4344
      %v4346 = vpop.f32.mrb[0].mxu0
      %4347 = vmatprep.mubr.bf16.mxu0 %v3761
      %4348 = vmatmul.mubr.bf16.gmra.mrb[0].mxu0 %v3760
      %v4349 = vpop.f32.mrb[0].mxu0
      %v4350 = vadd.f32 %v4061, %v4349
      %v4351 = vpop.f32.mrb[0].mxu0
      %v4352 = vpop.f32.mrb[0].mxu0
      %v4353 = vadd.f32 %v4064, %v4352
      %v4354 = vpop.f32.mrb[0].mxu0
      %4355 = vmatprep.mubr.bf16.mxu0 %v3765
      %4356 = vmatmul.mubr.bf16.gmra.mrb[0].mxu0 %v3764
      %v4357 = vpop.f32.mrb[0].mxu0
      %v4358 = vadd.f32 %v4069, %v4357
      %v4359 = vpop.f32.mrb[0].mxu0
      %v4360 = vpop.f32.mrb[0].mxu0
      %v4361 = vadd.f32 %v4072, %v4360
      %v4362 = vpop.f32.mrb[0].mxu0
      %4363 = vmatprep.mubr.bf16.mxu0 %v3769
      %4364 = vmatmul.mubr.bf16.gmra.mrb[0].mxu0 %v3768
      %v4365 = vpop.f32.mrb[0].mxu0
      %v4366 = vadd.f32 %v4077, %v4365
      %v4367 = vpop.f32.mrb[0].mxu0
      %v4368 = vpop.f32.mrb[0].mxu0
      %v4369 = vadd.f32 %v4080, %v4368
      %v4370 = vpop.f32.mrb[0].mxu0
      %4371 = vmatprep.mubr.bf16.mxu0 %v3773
      %4372 = vmatmul.mubr.bf16.gmra.mrb[0].mxu0 %v3772
      %v4373 = vpop.f32.mrb[0].mxu0
      %v4374 = vadd.f32 %v4085, %v4373
      %v4375 = vpop.f32.mrb[0].mxu0
      %v4376 = vpop.f32.mrb[0].mxu0
      %v4377 = vadd.f32 %v4088, %v4376
      %v4378 = vpop.f32.mrb[0].mxu0
      %4379 = vmatprep.mubr.bf16.mxu0 %v3777
      %4380 = vmatmul.mubr.bf16.gmra.mrb[0].mxu0 %v3776
      %v4381 = vpop.f32.mrb[0].mxu0
      %v4382 = vadd.f32 %v4093, %v4381
      %v4383 = vpop.f32.mrb[0].mxu0
      %v4384 = vpop.f32.mrb[0].mxu0
      %v4385 = vadd.f32 %v4096, %v4384
      %v4386 = vpop.f32.mrb[0].mxu0
      %4387 = vmatprep.mubr.bf16.mxu0 %v3781
      %4388 = vmatmul.mubr.bf16.gmra.mrb[0].mxu0 %v3780
      %v4389 = vpop.f32.mrb[0].mxu0
      %v4390 = vadd.f32 %v4101, %v4389
      %v4391 = vpop.f32.mrb[0].mxu0
      %v4392 = vpop.f32.mrb[0].mxu0
      %v4393 = vadd.f32 %v4104, %v4392
      %v4394 = vpop.f32.mrb[0].mxu0
      %4395 = vmatprep.mubr.bf16.mxu0 %v3785
      %4396 = vmatmul.mubr.bf16.gmra.mrb[0].mxu0 %v3784
      %v4397 = vpop.f32.mrb[0].mxu0
      %v4398 = vadd.f32 %v4109, %v4397
      %v4399 = vpop.f32.mrb[0].mxu0
      %v4400 = vpop.f32.mrb[0].mxu0
      %v4401 = vadd.f32 %v4112, %v4400
      %v4402 = vpop.f32.mrb[0].mxu0
      %4403 = vmatprep.mubr.bf16.mxu0 %v3789
      %4404 = vmatmul.mubr.bf16.gmra.mrb[0].mxu0 %v3788
      %v4405 = vpop.f32.mrb[0].mxu0
      %v4406 = vadd.f32 %v4117, %v4405
      %v4407 = vpop.f32.mrb[0].mxu0
      %v4408 = vpop.f32.mrb[0].mxu0
      %v4409 = vadd.f32 %v4120, %v4408
      %v4410 = vpop.f32.mrb[0].mxu0
      %4411 = vmatprep.mubr.bf16.mxu0 %v3793
      %4412 = vmatmul.mubr.bf16.gmra.mrb[0].mxu0 %v3792
      %v4413 = vpop.f32.mrb[0].mxu0
      %v4414 = vadd.f32 %v4125, %v4413
      %v4415 = vpop.f32.mrb[0].mxu0
      %v4416 = vpop.f32.mrb[0].mxu0
      %v4417 = vadd.f32 %v4128, %v4416
      %v4418 = vpop.f32.mrb[0].mxu0
      %4419 = vmatprep.mubr.bf16.mxu0 %v3797
      %4420 = vmatmul.mubr.bf16.gmra.mrb[0].mxu0 %v3796
      %v4421 = vpop.f32.mrb[0].mxu0
      %v4422 = vadd.f32 %v4133, %v4421
      %v4423 = vpop.f32.mrb[0].mxu0
      %v4424 = vpop.f32.mrb[0].mxu0
      %v4425 = vadd.f32 %v4136, %v4424
      %v4426 = vpop.f32.mrb[0].mxu0
      %4427 = vmatprep.mubr.bf16.mxu0 %v3801
      %4428 = vmatmul.mubr.bf16.gmra.mrb[0].mxu0 %v3800
      %v4429 = vpop.f32.mrb[0].mxu0
      %v4430 = vadd.f32 %v4141, %v4429
      %v4431 = vpop.f32.mrb[0].mxu0
      %v4432 = vpop.f32.mrb[0].mxu0
      %v4433 = vadd.f32 %v4144, %v4432
      %v4434 = vpop.f32.mrb[0].mxu0
      %4435 = vmatprep.mubr.bf16.mxu0 %v3805
      %4436 = vmatmul.mubr.bf16.gmra.mrb[0].mxu0 %v3804
      %v4437 = vpop.f32.mrb[0].mxu0
      %v4438 = vadd.f32 %v4149, %v4437
      %v4439 = vpop.f32.mrb[0].mxu0
      %v4440 = vpop.f32.mrb[0].mxu0
      %v4441 = vadd.f32 %v4152, %v4440
      %v4442 = vpop.f32.mrb[0].mxu0
      %4443 = vmatprep.mubr.bf16.mxu0 %v3809
      %4444 = vmatmul.mubr.bf16.gmra.mrb[0].mxu0 %v3808
      %v4445 = vpop.f32.mrb[0].mxu0
      %v4446 = vadd.f32 %v4157, %v4445
      %v4447 = vpop.f32.mrb[0].mxu0
      %v4448 = vpop.f32.mrb[0].mxu0
      %v4449 = vadd.f32 %v4160, %v4448
      %v4450 = vpop.f32.mrb[0].mxu0
      %4451 = vmatprep.mubr.bf16.mxu0 %v3813
      %4452 = vmatmul.mubr.bf16.gmra.mrb[0].mxu0 %v3812
      %v4453 = vpop.f32.mrb[0].mxu0
      %v4454 = vadd.f32 %v4165, %v4453
      %v4455 = vpop.f32.mrb[0].mxu0
      %v4456 = vpop.f32.mrb[0].mxu0
      %v4457 = vadd.f32 %v4168, %v4456
      %v4458 = vpop.f32.mrb[0].mxu0
      %4459 = vmatprep.mubr.bf16.mxu0 %v3817
      %4460 = vmatmul.mubr.bf16.gmra.mrb[0].mxu0 %v3816
      %v4461 = vpop.f32.mrb[0].mxu0
      %v4462 = vadd.f32 %v4173, %v4461
      %v4463 = vpop.f32.mrb[0].mxu0
      %v4464 = vpop.f32.mrb[0].mxu0
      %v4465 = vadd.f32 %v4176, %v4464
      %v4466 = vpop.f32.mrb[0].mxu0
      %4467 = vmatprep.mubr.bf16.mxu0 %v3821
      %4468 = vmatmul.mubr.bf16.gmra.mrb[0].mxu0 %v3820
      %v4469 = vpop.f32.mrb[0].mxu0
      %v4470 = vadd.f32 %v4181, %v4469
      %v4471 = vpop.f32.mrb[0].mxu0
      %v4472 = vpop.f32.mrb[0].mxu0
      %v4473 = vadd.f32 %v4184, %v4472
      %v4474 = vpop.f32.mrb[0].mxu0
      %4475 = vmatprep.mubr.bf16.mxu0 %v3825
      %4476 = vmatmul.mubr.bf16.gmra.mrb[0].mxu0 %v3824
      %v4477 = vpop.f32.mrb[0].mxu0
      %v4478 = vadd.f32 %v4189, %v4477
      %v4479 = vpop.f32.mrb[0].mxu0
      %v4480 = vpop.f32.mrb[0].mxu0
      %v4481 = vadd.f32 %v4192, %v4480
      %v4482 = vpop.f32.mrb[0].mxu0
      %4483 = vmatprep.mubr.bf16.mxu0 %v3829
      %4484 = vmatmul.mubr.bf16.gmra.mrb[0].mxu0 %v3828
      %v4485 = vpop.f32.mrb[0].mxu0
      %v4486 = vadd.f32 %v4197, %v4485
      %v4487 = vpop.f32.mrb[0].mxu0
      %v4488 = vpop.f32.mrb[0].mxu0
      %v4489 = vadd.f32 %v4200, %v4488
      %v4490 = vpop.f32.mrb[0].mxu0
      %4491 = vmatprep.mubr.bf16.mxu0 %v3833
      %4492 = vmatmul.mubr.bf16.gmra.mrb[0].mxu0 %v3832
      %v4493 = vpop.f32.mrb[0].mxu0
      %v4494 = vadd.f32 %v4205, %v4493
      %v4495 = vpop.f32.mrb[0].mxu0
      %v4496 = vpop.f32.mrb[0].mxu0
      %v4497 = vadd.f32 %v4208, %v4496
      %v4498 = vpop.f32.mrb[0].mxu0
      %4499 = vmatprep.mubr.bf16.mxu0 %v3837
      %4500 = vmatmul.mubr.bf16.gmra.mrb[0].mxu0 %v3836
      %v4501 = vpop.f32.mrb[0].mxu0
      %v4502 = vadd.f32 %v4213, %v4501
      %v4503 = vpop.f32.mrb[0].mxu0
      %v4504 = vpop.f32.mrb[0].mxu0
      %v4505 = vadd.f32 %v4216, %v4504
      %v4506 = vpop.f32.mrb[0].mxu0
      %4507 = vmatprep.mubr.bf16.mxu0 %v3841
      %4508 = vmatmul.mubr.bf16.gmra.mrb[0].mxu0 %v3840
      %v4509 = vpop.f32.mrb[0].mxu0
      %v4510 = vadd.f32 %v4221, %v4509
      %v4511 = vpop.f32.mrb[0].mxu0
      %v4512 = vpop.f32.mrb[0].mxu0
      %v4513 = vadd.f32 %v4224, %v4512
      %v4514 = vpop.f32.mrb[0].mxu0
      %4515 = vmatprep.mubr.bf16.mxu0 %v3845
      %4516 = vmatmul.mubr.bf16.gmra.mrb[0].mxu0 %v3844
      %v4517 = vpop.f32.mrb[0].mxu0
      %v4518 = vadd.f32 %v4229, %v4517
      %v4519 = vpop.f32.mrb[0].mxu0
      %v4520 = vpop.f32.mrb[0].mxu0
      %v4521 = vadd.f32 %v4232, %v4520
      %v4522 = vpop.f32.mrb[0].mxu0
      %4523 = vmatprep.mubr.bf16.mxu0 %v3849
      %4524 = vmatmul.mubr.bf16.gmra.mrb[0].mxu0 %v3848
      %v4525 = vpop.f32.mrb[0].mxu0
      %v4526 = vadd.f32 %v4237, %v4525
      %v4527 = vpop.f32.mrb[0].mxu0
      %v4528 = vpop.f32.mrb[0].mxu0
      %v4529 = vadd.f32 %v4240, %v4528
      %v4530 = vpop.f32.mrb[0].mxu0
      %4531 = vmatprep.mubr.bf16.mxu0 %v3853
      %4532 = vmatmul.mubr.bf16.gmra.mrb[0].mxu0 %v3852
      %v4533 = vpop.f32.mrb[0].mxu0
      %v4534 = vadd.f32 %v4245, %v4533
      %v4535 = vpop.f32.mrb[0].mxu0
      %v4536 = vpop.f32.mrb[0].mxu0
      %v4537 = vadd.f32 %v4248, %v4536
      %v4538 = vpop.f32.mrb[0].mxu0
      %4539 = vmatprep.mubr.bf16.mxu0 %v3857
      %4540 = vmatmul.mubr.bf16.gmra.mrb[0].mxu0 %v3856
      %v4541 = vpop.f32.mrb[0].mxu0
      %v4542 = vadd.f32 %v4253, %v4541
      %v4543 = vpop.f32.mrb[0].mxu0
      %v4544 = vpop.f32.mrb[0].mxu0
      %v4545 = vadd.f32 %v4256, %v4544
      %v4546 = vpop.f32.mrb[0].mxu0
      %4547 = vmatprep.mubr.bf16.mxu0 %v3861
      %4548 = vmatmul.mubr.bf16.gmra.mrb[0].mxu0 %v3860
      %v4549 = vpop.f32.mrb[0].mxu0
      %v4550 = vadd.f32 %v4261, %v4549
      %v4551 = vpop.f32.mrb[0].mxu0
      %v4552 = vpop.f32.mrb[0].mxu0
      %v4553 = vadd.f32 %v4264, %v4552
      %v4554 = vpop.f32.mrb[0].mxu0
      %4555 = vmatprep.mubr.bf16.mxu0 %v3865
      %4556 = vmatmul.mubr.bf16.gmra.mrb[0].mxu0 %v3864
      %v4557 = vpop.f32.mrb[0].mxu0
      %v4558 = vadd.f32 %v4269, %v4557
      %v4559 = vpop.f32.mrb[0].mxu0
      %v4560 = vpop.f32.mrb[0].mxu0
      %v4561 = vadd.f32 %v4272, %v4560
      %v4562 = vpop.f32.mrb[0].mxu0
      %4563 = vmatprep.mubr.bf16.mxu0 %v3869
      %4564 = vmatmul.mubr.bf16.gmra.mrb[0].mxu0 %v3868
      %v4565 = vpop.f32.mrb[0].mxu0
      %v4566 = vadd.f32 %v4277, %v4565
      %v4567 = vpop.f32.mrb[0].mxu0
      %v4568 = vpop.f32.mrb[0].mxu0
      %v4569 = vadd.f32 %v4280, %v4568
      %v4570 = vpop.f32.mrb[0].mxu0
      %4571 = vmatprep.mubr.bf16.mxu0 %v3873
      %4572 = vmatmul.mubr.bf16.gmra.mrb[0].mxu0 %v3872
      %v4573 = vpop.f32.mrb[0].mxu0
      %v4574 = vadd.f32 %v4285, %v4573
      %v4575 = vpop.f32.mrb[0].mxu0
      %v4576 = vpop.f32.mrb[0].mxu0
      %v4577 = vadd.f32 %v4288, %v4576
      %v4578 = vpop.f32.mrb[0].mxu0
      %4579 = vdwg.mxu0
      %v4580 = vmax.f32 %v4326, 0.0
      %v4581 = vmax.f32 %v4329, 0.0
      %v4582 = vmax.f32 %v4334, 0.0
      %v4583 = vmax.f32 %v4337, 0.0
      %v4584 = vmax.f32 %v4342, 0.0
      %v4585 = vmax.f32 %v4345, 0.0
      %v4586 = vmax.f32 %v4350, 0.0
      %v4587 = vmax.f32 %v4353, 0.0
      %v4588 = vmax.f32 %v4358, 0.0
      %v4589 = vmax.f32 %v4361, 0.0
      %v4590 = vmax.f32 %v4366, 0.0
      %v4591 = vmax.f32 %v4369, 0.0
      %v4592 = vmax.f32 %v4374, 0.0
      %v4593 = vmax.f32 %v4377, 0.0
      %v4594 = vmax.f32 %v4382, 0.0
      %v4595 = vmax.f32 %v4385, 0.0
      %v4596 = vmax.f32 %v4390, 0.0
      %v4597 = vmax.f32 %v4393, 0.0
      %v4598 = vmax.f32 %v4398, 0.0
      %v4599 = vmax.f32 %v4401, 0.0
      %v4600 = vmax.f32 %v4406, 0.0
      %v4601 = vmax.f32 %v4409, 0.0
      %v4602 = vmax.f32 %v4414, 0.0
      %v4603 = vmax.f32 %v4417, 0.0
      %v4604 = vmax.f32 %v4422, 0.0
      %v4605 = vmax.f32 %v4425, 0.0
      %v4606 = vmax.f32 %v4430, 0.0
      %v4607 = vmax.f32 %v4433, 0.0
      %v4608 = vmax.f32 %v4438, 0.0
      %v4609 = vmax.f32 %v4441, 0.0
      %v4610 = vmax.f32 %v4446, 0.0
      %v4611 = vmax.f32 %v4449, 0.0
      %v4612 = vmax.f32 %v4454, 0.0
      %v4613 = vmax.f32 %v4457, 0.0
      %v4614 = vmax.f32 %v4462, 0.0
      %v4615 = vmax.f32 %v4465, 0.0
      %v4616 = vmax.f32 %v4470, 0.0
      %v4617 = vmax.f32 %v4473, 0.0
      %v4618 = vmax.f32 %v4478, 0.0
      %v4619 = vmax.f32 %v4481, 0.0
      %v4620 = vmax.f32 %v4486, 0.0
      %v4621 = vmax.f32 %v4489, 0.0
      %v4622 = vmax.f32 %v4494, 0.0
      %v4623 = vmax.f32 %v4497, 0.0
      %v4624 = vmax.f32 %v4502, 0.0
      %v4625 = vmax.f32 %v4505, 0.0
      %v4626 = vmax.f32 %v4510, 0.0
      %v4627 = vmax.f32 %v4513, 0.0
      %v4628 = vmax.f32 %v4518, 0.0
      %v4629 = vmax.f32 %v4521, 0.0
      %v4630 = vmax.f32 %v4526, 0.0
      %v4631 = vmax.f32 %v4529, 0.0
      %v4632 = vmax.f32 %v4534, 0.0
      %v4633 = vmax.f32 %v4537, 0.0
      %v4634 = vmax.f32 %v4542, 0.0
      %v4635 = vmax.f32 %v4545, 0.0
      %v4636 = vmax.f32 %v4550, 0.0
      %v4637 = vmax.f32 %v4553, 0.0
      %v4638 = vmax.f32 %v4558, 0.0
      %v4639 = vmax.f32 %v4561, 0.0
      %v4640 = vmax.f32 %v4566, 0.0
      %v4641 = vmax.f32 %v4569, 0.0
      %v4642 = vmax.f32 %v4574, 0.0
      %v4643 = vmax.f32 %v4577, 0.0
      %v4644 = vpack.c.bf16 %v4581, %v4580
      %v4645 = vpack.c.bf16 %v4583, %v4582
      %v4646 = vpack.c.bf16 %v4585, %v4584
      %v4647 = vpack.c.bf16 %v4587, %v4586
      %v4648 = vpack.c.bf16 %v4589, %v4588
      %v4649 = vpack.c.bf16 %v4591, %v4590
      %v4650 = vpack.c.bf16 %v4593, %v4592
      %v4651 = vpack.c.bf16 %v4595, %v4594
      %v4652 = vpack.c.bf16 %v4597, %v4596
      %v4653 = vpack.c.bf16 %v4599, %v4598
      %v4654 = vpack.c.bf16 %v4601, %v4600
      %v4655 = vpack.c.bf16 %v4603, %v4602
      %v4656 = vpack.c.bf16 %v4605, %v4604
      %v4657 = vpack.c.bf16 %v4607, %v4606
      %v4658 = vpack.c.bf16 %v4609, %v4608
      %v4659 = vpack.c.bf16 %v4611, %v4610
      %v4660 = vpack.c.bf16 %v4613, %v4612
      %v4661 = vpack.c.bf16 %v4615, %v4614
      %v4662 = vpack.c.bf16 %v4617, %v4616
      %v4663 = vpack.c.bf16 %v4619, %v4618
      %v4664 = vpack.c.bf16 %v4621, %v4620
      %v4665 = vpack.c.bf16 %v4623, %v4622
      %v4666 = vpack.c.bf16 %v4625, %v4624
      %v4667 = vpack.c.bf16 %v4627, %v4626
      %v4668 = vpack.c.bf16 %v4629, %v4628
      %v4669 = vpack.c.bf16 %v4631, %v4630
      %v4670 = vpack.c.bf16 %v4633, %v4632
      %v4671 = vpack.c.bf16 %v4635, %v4634
      %v4672 = vpack.c.bf16 %v4637, %v4636
      %v4673 = vpack.c.bf16 %v4639, %v4638
      %v4674 = vpack.c.bf16 %v4641, %v4640
      %v4675 = vpack.c.bf16 %v4643, %v4642
      %v4676 = vld [vmem:[%s5] sm:$0xff]
      %v4677 = vld [vmem:[%s5 + $0x8] sm:$0xff]
      %v4678 = vld [vmem:[%s6] sm:$0xff]
      %4680 = vset.pattern.permute.xlu0 0
      %4681 = vperm.xlu0 %4680, %v4678
      %v4682 = vpop.permute.xlu0 %4681
      %v4686 = vunpack.c.l.b16 %v4676
      %v4687 = vunpack.c.h.b16 %v4676
      %v4688 = vunpack.c.l.b16 %v4677
      %v4689 = vunpack.c.h.b16 %v4677
      %v4690 = vpack.c.b16 %v4686, %v4686
      %v4691 = vpack.c.b16 %v4687, %v4687
      %v4692 = vpack.c.b16 %v4688, %v4688
      %v4693 = vpack.c.b16 %v4689, %v4689
      %4698 = vmatprep.subr.bf16.mxu0 0
      %4699 = vmatpush1.bf16.msra.mxu0 %v4644
      %4700 = vmatprep.subr.bf16.mxu0 0
      %4701 = vmatpush1.bf16.msra.mxu0 %v4645
      %4702 = vmatprep.subr.bf16.mxu0 0
      %4703 = vmatpush1.bf16.msra.mxu0 %v4646
      %4704 = vmatprep.subr.bf16.mxu0 0
      %4705 = vmatpush1.bf16.msra.mxu0 %v4647
      %4706 = vmatprep.subr.bf16.mxu0 0
      %4707 = vmatpush1.bf16.msra.mxu0 %v4648
      %4708 = vmatprep.subr.bf16.mxu0 0
      %4709 = vmatpush1.bf16.msra.mxu0 %v4649
      %4710 = vmatprep.subr.bf16.mxu0 0
      %4711 = vmatpush1.bf16.msra.mxu0 %v4650
      %4712 = vmatprep.subr.bf16.mxu0 0
      %4713 = vmatpush1.bf16.msra.mxu0 %v4651
      %4714 = vmatprep.subr.bf16.mxu0 0
      %4715 = vmatpush1.bf16.msra.mxu0 %v4652
      %4716 = vmatprep.subr.bf16.mxu0 0
      %4717 = vmatpush1.bf16.msra.mxu0 %v4653
      %4718 = vmatprep.subr.bf16.mxu0 0
      %4719 = vmatpush1.bf16.msra.mxu0 %v4654
      %4720 = vmatprep.subr.bf16.mxu0 0
      %4721 = vmatpush1.bf16.msra.mxu0 %v4655
      %4722 = vmatprep.subr.bf16.mxu0 0
      %4723 = vmatpush1.bf16.msra.mxu0 %v4656
      %4724 = vmatprep.subr.bf16.mxu0 0
      %4725 = vmatpush1.bf16.msra.mxu0 %v4657
      %4726 = vmatprep.subr.bf16.mxu0 0
      %4727 = vmatpush1.bf16.msra.mxu0 %v4658
      %4728 = vmatprep.subr.bf16.mxu0 0
      %4729 = vmatpush1.bf16.msra.mxu0 %v4659
      %4730 = vmatprep.mubr.bf16.mxu0 %v4691
      %4731 = vmatmul.mubr.bf16.gmra.mrb[0].mxu0 %v4690
      %v4732 = vpop.f32.mrb[0].mxu0
      %v4733 = vadd.f32 %v4682, %v4732
      %v4734 = vpop.f32.mrb[0].mxu0
      %v4735 = vpop.f32.mrb[0].mxu0
      %v4736 = vpop.f32.mrb[0].mxu0
      %4737 = vdwg.mxu0
      %4738 = vmatprep.subr.bf16.mxu0 0
      %4739 = vmatpush1.bf16.msra.mxu0 %v4660
      %4740 = vmatprep.subr.bf16.mxu0 0
      %4741 = vmatpush1.bf16.msra.mxu0 %v4661
      %4742 = vmatprep.subr.bf16.mxu0 0
      %4743 = vmatpush1.bf16.msra.mxu0 %v4662
      %4744 = vmatprep.subr.bf16.mxu0 0
      %4745 = vmatpush1.bf16.msra.mxu0 %v4663
      %4746 = vmatprep.subr.bf16.mxu0 0
      %4747 = vmatpush1.bf16.msra.mxu0 %v4664
      %4748 = vmatprep.subr.bf16.mxu0 0
      %4749 = vmatpush1.bf16.msra.mxu0 %v4665
      %4750 = vmatprep.subr.bf16.mxu0 0
      %4751 = vmatpush1.bf16.msra.mxu0 %v4666
      %4752 = vmatprep.subr.bf16.mxu0 0
      %4753 = vmatpush1.bf16.msra.mxu0 %v4667
      %4754 = vmatprep.subr.bf16.mxu0 0
      %4755 = vmatpush1.bf16.msra.mxu0 %v4668
      %4756 = vmatprep.subr.bf16.mxu0 0
      %4757 = vmatpush1.bf16.msra.mxu0 %v4669
      %4758 = vmatprep.subr.bf16.mxu0 0
      %4759 = vmatpush1.bf16.msra.mxu0 %v4670
      %4760 = vmatprep.subr.bf16.mxu0 0
      %4761 = vmatpush1.bf16.msra.mxu0 %v4671
      %4762 = vmatprep.subr.bf16.mxu0 0
      %4763 = vmatpush1.bf16.msra.mxu0 %v4672
      %4764 = vmatprep.subr.bf16.mxu0 0
      %4765 = vmatpush1.bf16.msra.mxu0 %v4673
      %4766 = vmatprep.subr.bf16.mxu0 0
      %4767 = vmatpush1.bf16.msra.mxu0 %v4674
      %4768 = vmatprep.subr.bf16.mxu0 0
      %4769 = vmatpush1.bf16.msra.mxu0 %v4675
      %4770 = vmatprep.mubr.bf16.mxu0 %v4693
      %4771 = vmatmul.mubr.bf16.gmra.mrb[0].mxu0 %v4692
      %v4772 = vpop.f32.mrb[0].mxu0
      %v4773 = vadd.f32 %v4733, %v4772
      %v4774 = vpop.f32.mrb[0].mxu0
      %v4775 = vpop.f32.mrb[0].mxu0
      %v4776 = vpop.f32.mrb[0].mxu0
      %4777 = vdwg.mxu0
      %4778 = vst [vmem:[%s307] sm:$0xff] %v4773
      %p4779 = scmp.lt.s32.totalorder %s22, 1
      %s4780 = scalar_select %p4779, %s22, 1
      %p4781 = scmp.lt.s32.totalorder %s23, 0
      %s4782 = scalar_select %p4781, %s23, 0
      %s4783 = sadd.s32 %s4782, %s4780
      %s4784 = smul.addr %s4783, 8
      %s4785 = scalar_lea.vmem %s7, %s4784
      // Predicated region
      $region49: #{foldingnet_dec_fold2.1} parent=47 // pred_check
        %p4786 = pneg %p204
      $region50: #{foldingnet_dec_fold2.1} parent=47 // pred_check_branch
        %4788 = sbr.rel (%p4786) target = $region52
      $region51: #{foldingnet_dec_fold2.1} parent=47 // pred_region
        _
      $region52: #{foldingnet_dec_fold2.1} parent=47 // pred_fallthru
        _
    $region48: #{foldingnet_dec_fold2.1} parent=5 // pred_fallthru
      _
    %p4789 = scmp.le.s32.totalorder 2, %s13
    // Predicated region
    $region53: #{foldingnet_dec_fold2.1} parent=5 // pred_check
      %p4790 = pneg %p4789
    $region54: #{foldingnet_dec_fold2.1} parent=5 // pred_check_branch
      %4792 = sbr.rel (%p4790) target = $region56
    $region55: #{foldingnet_dec_fold2.1} parent=5 // pred_region
      %s4793 = ssub.s32 %s13, 2
      // Predicated region
      $region57: #{foldingnet_dec_fold2.1} parent=55 // pred_check
        %p4794 = pneg %p210
      $region58: #{foldingnet_dec_fold2.1} parent=55 // pred_check_branch
        %4796 = sbr.rel (%p4794) target = $region60
      $region59: #{foldingnet_dec_fold2.1} parent=55 // pred_region
        %p4797 = scmp.lt.s32.totalorder %s24, 1
        %s4798 = scalar_select %p4797, %s24, 1
        %p4799 = scmp.lt.s32.totalorder %s25, 0
        %s4800 = scalar_select %p4799, %s25, 0
        %s4801 = sadd.s32 %s4800, %s4798
        %s4802 = smul.addr %s4801, 8
        %s4803 = scalar_lea.vmem %s7, %s4802
      $region60: #{foldingnet_dec_fold2.1} parent=55 // pred_fallthru
        _
    $region56: #{foldingnet_dec_fold2.1} parent=5 // pred_fallthru
      _
  $region6: #{foldingnet_dec_fold2.1} parent=0 // loop_footer
    %s17 = sadd.s32 1, %s13
  $region7: #{foldingnet_dec_fold2.1} parent=0 // loop_footer_branch
    %12 = sbr.rel target = $region3
  $region8: #{foldingnet_dec_fold2.1} parent=0 // loop_exit
    _

</llo_original>
